<compile_context>
chip_gen: v6e
topology: v6e:2x2x1
jax: 0.10.0
libtpu: 0.0.40
codegen_flags: <defaults>
</compile_context>

<pallas_src>
import math
import functools

import jax
import jax.numpy as jnp
from jax.experimental import pallas as pl
from jax.experimental.pallas import tpu as pltpu

S = 50                 # Nstep (module hard-codes 10 groups x 5 steps)
NGROUP, GROUP = 10, 5
NEG_INF = jnp.float32(-1e30)
LN_EPS = 1e-5


# --------------------------------------------------------------------------------------
# helpers
# --------------------------------------------------------------------------------------
def _full_spec(shape):
    nd = len(shape)
    return pl.BlockSpec(shape, lambda b: (0,) * nd)


def _layer_norm(x, w, b, eps=LN_EPS):
    mu = jnp.mean(x, axis=-1, keepdims=True)
    var = jnp.mean((x - mu) ** 2, axis=-1, keepdims=True)
    return (x - mu) * jax.lax.rsqrt(var + eps) * w + b


# --------------------------------------------------------------------------------------
# fused kernel: encode + num_layers transformer layers + pooling, per batch tile
# --------------------------------------------------------------------------------------
def fused_kernel(nhead, nlayers,
                 traj_ref, maskb_ref, pcoef_ref, peb_ref, w_obs_ref,
                 wqkv_ref, bqkv_ref, wo_ref, vecd_ref, w1_ref, b1_ref, w2_ref,
                 wpool_ref, bpool_ref, out_ref):
    bt, s, o = traj_ref.shape
    d = w_obs_ref.shape[1]
    hd = d // nhead
    bf16 = jnp.bfloat16

    mbias = maskb_ref[...]                                      # (BT, 1, S) f32 additive

    # ---- obs_encoder + positional encoding (one flat matmul; bias folded into peb) ----
    traj2 = traj_ref[...].reshape(bt * s, o)                    # bf16 (BT*S, O)
    x = jnp.dot(traj2, w_obs_ref[...],
                preferred_element_type=jnp.float32)             # (BT*S, D) f32
    x = (x.reshape(bt, s, d) + peb_ref[...]).reshape(bt * s, d)

    # ---- transformer encoder stack (post-norm, relu, key_padding_mask, no dropout) ----
    # Static unroll is fine at small L (review); switch to lax.fori_loop if L grows.
    for l in range(nlayers):
        wqkv, bqkv = wqkv_ref[l], bqkv_ref[l]                   # (D,3D) bf16 / (1,3D) f32
        wo = wo_ref[l]                                          # (D, D) bf16
        vd = vecd_ref[l]                                        # (6, D) f32
        bo, ln1w, ln1b = vd[0:1], vd[1:2], vd[2:3]
        b2, ln2w, ln2b = vd[3:4], vd[4:5], vd[5:6]
        w1, b1, w2 = w1_ref[l], b1_ref[l], w2_ref[l]            # bf16 / f32 / bf16

        qkv = jnp.dot(x.astype(bf16), wqkv,
                      preferred_element_type=jnp.float32) + bqkv          # (BT*S, 3D)
        qkv = qkv.reshape(bt, s, 3 * d)

        heads = []
        for h in range(nhead):                                  # static, fully unrolled
            qh = qkv[:, :, h * hd:(h + 1) * hd].astype(bf16)    # q pre-scaled 1/sqrt(hd)
            kh = qkv[:, :, d + h * hd:d + (h + 1) * hd].astype(bf16)
            vh = qkv[:, :, 2 * d + h * hd:2 * d + (h + 1) * hd].astype(bf16)
            sc = jnp.einsum('bqd,bkd->bqk', qh, kh,
                            preferred_element_type=jnp.float32) + mbias   # (BT, S, S)
            sc = sc - jnp.max(sc, axis=-1, keepdims=True)
            p = jnp.exp(sc)
            inv = pl.reciprocal(jnp.sum(p, axis=-1, keepdims=True), approx=True)
            heads.append(jnp.einsum('bqk,bkd->bqd', (p * inv).astype(bf16), vh,
                                    preferred_element_type=jnp.float32))  # (BT, S, hd)
        attn = jnp.concatenate(heads, axis=-1).reshape(bt * s, d)         # lane concat
        attn = jnp.dot(attn.astype(bf16), wo,
                       preferred_element_type=jnp.float32) + bo           # one (D,D) proj

        x = _layer_norm(x + attn, ln1w, ln1b)

        h1 = jnp.maximum(jnp.dot(x.astype(bf16), w1,
                                 preferred_element_type=jnp.float32) + b1, 0.0)
        ff = jnp.dot(h1.astype(bf16), w2,
                     preferred_element_type=jnp.float32) + b2
        x = _layer_norm(x + ff, ln2w, ln2b)

    # ---- pooling linear over 5-step groups + group masking + masked mean (MXU) --------
    # coef[b, p, s] = keep_group[b, s//5] / cnt[b] if s % 5 == p (and s < 50) else 0
    x3 = x.reshape(bt, s, d)
    pc = pcoef_ref[...]                                         # (BT, GROUP, S) f32
    r = jnp.einsum('bps,bsd->bpd', pc, x3,
                   preferred_element_type=jnp.float32)          # (BT, 5, D)
    pooled = jnp.dot(r.reshape(bt, GROUP * d), wpool_ref[...],
                     preferred_element_type=jnp.float32)        # (BT, D)
    out_ref[...] = (pooled + bpool_ref[...]).reshape(bt, 1, d)


# --------------------------------------------------------------------------------------
# wrapper
# --------------------------------------------------------------------------------------
def trajectory_encoder2(traj, traj_mask, fp, nhead, block_b=32):
    B, S_in, O = traj.shape
    assert S_in == NGROUP * GROUP
    D = fp["w_obs"].shape[1]
    L = fp["wqkv"].shape[0]
    FF = fp["w1"].shape[2]

    # >= 2 grid steps so both v7x TensorCores get work; large blocks when B is big.
    block_b = max(1, min(block_b, pl.cdiv(B, 2)))
    n_blocks = pl.cdiv(B, block_b)
    b_pad = n_blocks * block_b
    pad_b = b_pad - B

    # pad sequence to a sublane multiple so batch-flatten reshapes are free re-tilings
    S_pad = 8 * pl.cdiv(S_in, 8)        # 50 -> 56
    pad_s = S_pad - S_in

    trj = jnp.pad(traj, ((0, pad_b), (0, pad_s), (0, 0))).astype(jnp.bfloat16)

    # additive key-padding bias; padded timesteps are masked (True -> -1e30)
    mf = jnp.pad(traj_mask.astype(jnp.float32),
                 ((0, pad_b), (0, pad_s)), constant_values=1.0)
    mask_bias = (mf * NEG_INF)[:, None, :]                      # (Bp, 1, Sp)

    # pooling coefficients: group keep / count, zero on padded steps; cnt=0 guarded
    tm = jnp.pad(traj_mask, ((0, pad_b), (0, 0)))               # batch pad = False
    gm = jnp.all(tm.reshape(b_pad, NGROUP, GROUP), axis=-1)     # group fully masked
    keep = (~gm).astype(jnp.float32)                            # (Bp, 10)
    cnt = jnp.maximum(jnp.sum(keep, axis=-1, keepdims=True), 1.0)
    keep_ts = jnp.repeat(keep / cnt, GROUP, axis=1)             # (Bp, 50)
    keep_ts = jnp.pad(keep_ts, ((0, 0), (0, pad_s)))            # (Bp, Sp)
    gsel = ((jnp.arange(S_pad) % GROUP)[None, :]
            == jnp.arange(GROUP)[:, None]).astype(jnp.float32)  # (5, Sp)
    pool_coef = keep_ts[:, None, :] * gsel[None]                # (Bp, 5, Sp)

    # positional encoding with obs-encoder bias folded in
    peb = jnp.pad(fp["pe"][:S_in] + fp["b_obs"], ((0, pad_s), (0, 0)))[None]  # (1, Sp, D)

    kern = functools.partial(fused_kernel, nhead, L)
    out = pl.pallas_call(
        kern,
        out_shape=jax.ShapeDtypeStruct((b_pad, 1, D), jnp.float32),
        grid=(n_blocks,),
        in_specs=[
            pl.BlockSpec((block_b, S_pad, O), lambda b: (b, 0, 0)),      # traj (bf16)
            pl.BlockSpec((block_b, 1, S_pad), lambda b: (b, 0, 0)),      # mask bias
            pl.BlockSpec((block_b, GROUP, S_pad), lambda b: (b, 0, 0)),  # pool coef
            _full_spec((1, S_pad, D)),                                   # pe + b_obs
            _full_spec((O, D)),                                          # obs encoder W
            _full_spec((L, D, 3 * D)), _full_spec((L, 1, 3 * D)),        # fused qkv
            _full_spec((L, D, D)),                                       # out proj
            _full_spec((L, 6, D)),                                       # bo/ln1/b2/ln2
            _full_spec((L, D, FF)), _full_spec((L, 1, FF)),              # ffn w1/b1
            _full_spec((L, FF, D)),                                      # ffn w2
            _full_spec((GROUP * D, D)), _full_spec((1, D)),              # pooling
        ],
        out_specs=pl.BlockSpec((block_b, 1, D), lambda b: (b, 0, 0)),
        compiler_params=pltpu.CompilerParams(
            dimension_semantics=("parallel",),
            vmem_limit_bytes=32 * 1024 * 1024),
    )(trj, mask_bias, pool_coef, peb, fp["w_obs"],
      fp["wqkv"], fp["bqkv"], fp["wo"], fp["vecd"],
      fp["w1"], fp["b1"], fp["w2"], fp["wpool"], fp["bpool"])
    return out[:B, 0]


# --------------------------------------------------------------------------------------
# parameter construction (deterministic, xavier_uniform for >1-dim weights)
# --------------------------------------------------------------------------------------
def make_positional_encoding(max_len, d_model):
    position = jnp.arange(max_len, dtype=jnp.float32)[:, None]
    div_term = jnp.exp(jnp.arange(0, d_model, 2, dtype=jnp.float32)
                       * (-math.log(10000.0) / d_model))
    pe = jnp.zeros((max_len, d_model), jnp.float32)
    pe = pe.at[:, 0::2].set(jnp.sin(position * div_term))
    pe = pe.at[:, 1::2].set(jnp.cos(position * div_term))
    return pe


def _xavier(key, shape, fan_in, fan_out):
    bound = math.sqrt(6.0 / (fan_in + fan_out))
    return jax.random.uniform(key, shape, jnp.float32, -bound, bound)


def _small(key, shape, scale=0.05):
    return jax.random.uniform(key, shape, jnp.float32, -scale, scale)


def init_params(key, obs_dim, d_model, nhead, dim_ff, num_layers, demo_max_length):
    keys = iter(jax.random.split(key, 8 + num_layers * 16))
    params = {
        "pe": make_positional_encoding(demo_max_length, d_model),
        "w_obs": _xavier(next(keys), (obs_dim, d_model), obs_dim, d_model),
        "b_obs": _small(next(keys), (1, d_model)),
        "w_pool": _xavier(next(keys), (GROUP * d_model, d_model), GROUP * d_model, d_model),
        "b_pool": _small(next(keys), (1, d_model)),
        "layers": [],
    }
    for _ in range(num_layers):
        lp = {
            "wq": _xavier(next(keys), (d_model, d_model), d_model, 3 * d_model),
            "bq": _small(next(keys), (1, d_model)),
            "wk": _xavier(next(keys), (d_model, d_model), d_model, 3 * d_model),
            "bk": _small(next(keys), (1, d_model)),
            "wv": _xavier(next(keys), (d_model, d_model), d_model, 3 * d_model),
            "bv": _small(next(keys), (1, d_model)),
            "wo": _xavier(next(keys), (d_model, d_model), d_model, d_model),
            "bo": _small(next(keys), (1, d_model)),
            "ln1w": jnp.ones((1, d_model), jnp.float32),
            "ln1b": jnp.zeros((1, d_model), jnp.float32),
            "w1": _xavier(next(keys), (d_model, dim_ff), d_model, dim_ff),
            "b1": _small(next(keys), (1, dim_ff)),
            "w2": _xavier(next(keys), (dim_ff, d_model), dim_ff, d_model),
            "b2": _small(next(keys), (1, d_model)),
            "ln2w": jnp.ones((1, d_model), jnp.float32),
            "ln2b": jnp.zeros((1, d_model), jnp.float32),
        }
        params["layers"].append(lp)
    return params


def prepare_params(params, nhead):
    """Stack per-layer params; fold softmax scale into Wq/bq; bf16 for matmul weights."""
    d = params["w_obs"].shape[1]
    qscale = 1.0 / math.sqrt(d // nhead)
    wqkv, bqkv, wo, vecd, w1, b1, w2 = [], [], [], [], [], [], []
    for lp in params["layers"]:
        wqkv.append(jnp.concatenate([lp["wq"] * qscale, lp["wk"], lp["wv"]], axis=1))
        bqkv.append(jnp.concatenate([lp["bq"] * qscale, lp["bk"], lp["bv"]], axis=1))
        wo.append(lp["wo"])
        vecd.append(jnp.concatenate([lp["bo"], lp["ln1w"], lp["ln1b"],
                                     lp["b2"], lp["ln2w"], lp["ln2b"]], axis=0))
        w1.append(lp["w1"]); b1.append(lp["b1"]); w2.append(lp["w2"])
    bf16 = jnp.bfloat16
    return {
        "pe": params["pe"],
        "w_obs": params["w_obs"].astype(bf16), "b_obs": params["b_obs"],
        "wqkv": jnp.stack(wqkv).astype(bf16), "bqkv": jnp.stack(bqkv),
        "wo": jnp.stack(wo).astype(bf16), "vecd": jnp.stack(vecd),
        "w1": jnp.stack(w1).astype(bf16), "b1": jnp.stack(b1),
        "w2": jnp.stack(w2).astype(bf16),
        "wpool": params["w_pool"],          # (5D, D) f32 (pooling kept in f32)
        "bpool": params["b_pool"],
    }


# --------------------------------------------------------------------------------------
if __name__ == "__main__":
    B, OBS_DIM, D_MODEL, NHEAD, DIM_FF, NUM_LAYERS = 2, 8, 32, 4, 64, 2
    DEMO_MAX_LEN = 200

    key = jax.random.PRNGKey(0)
    k_params, k_traj = jax.random.split(key)

    params = init_params(k_params, OBS_DIM, D_MODEL, NHEAD, DIM_FF,
                         NUM_LAYERS, DEMO_MAX_LEN)
    fused = prepare_params(params, NHEAD)

    traj = jax.random.normal(k_traj, (B, S, OBS_DIM), dtype=jnp.float32)
    steps = jnp.arange(S)
    # batch 0: last group (steps 45..49) fully masked; batch 1: partially masked group
    traj_mask = jnp.stack([steps >= 45, steps >= 48])                      # (B, S) bool

    out = trajectory_encoder2(traj, traj_mask, fused, NHEAD)
    out = jax.block_until_ready(out)

    assert out.shape == (B, D_MODEL), out.shape
    assert bool(jnp.all(jnp.isfinite(out)))
    print("KERNEL_OK")
</pallas_src>

<mosaic_0001>
module attributes {stable_mosaic.version = 11 : i64} {
  func.func @fused_kernel(%arg0: i32, %arg1: memref<1x56x8xbf16, #tpu.memory_space<vmem>>, %arg2: memref<1x1x56xf32, #tpu.memory_space<vmem>>, %arg3: memref<1x5x56xf32, #tpu.memory_space<vmem>>, %arg4: memref<1x56x32xf32, #tpu.memory_space<vmem>>, %arg5: memref<8x32xbf16, #tpu.memory_space<vmem>>, %arg6: memref<2x32x96xbf16, #tpu.memory_space<vmem>>, %arg7: memref<2x1x96xf32, #tpu.memory_space<vmem>>, %arg8: memref<2x32x32xbf16, #tpu.memory_space<vmem>>, %arg9: memref<2x6x32xf32, #tpu.memory_space<vmem>>, %arg10: memref<2x32x64xbf16, #tpu.memory_space<vmem>>, %arg11: memref<2x1x64xf32, #tpu.memory_space<vmem>>, %arg12: memref<2x64x32xbf16, #tpu.memory_space<vmem>>, %arg13: memref<160x32xf32, #tpu.memory_space<vmem>>, %arg14: memref<1x32xf32, #tpu.memory_space<vmem>>, %arg15: memref<1x1x32xf32, #tpu.memory_space<vmem>>) attributes {dimension_semantics = [#tpu.dimension_semantics<parallel>], iteration_bounds = array<i64: 2>, scalar_prefetch = 0 : i64, scratch_operands = 0 : i64, tpu.core_type = #tpu.core_type<tc>, window_params = [{transform_indices = @transform_0, window_bounds = array<i64: 1, 56, 8>}, {transform_indices = @transform_1, window_bounds = array<i64: 1, 1, 56>}, {transform_indices = @transform_2, window_bounds = array<i64: 1, 5, 56>}, {pipeline_mode = #tpu.pipeline_mode<synchronous>, transform_indices = @transform_3, window_bounds = array<i64: 1, 56, 32>}, {pipeline_mode = #tpu.pipeline_mode<synchronous>, transform_indices = @transform_4, window_bounds = array<i64: 8, 32>}, {pipeline_mode = #tpu.pipeline_mode<synchronous>, transform_indices = @transform_5, window_bounds = array<i64: 2, 32, 96>}, {pipeline_mode = #tpu.pipeline_mode<synchronous>, transform_indices = @transform_6, window_bounds = array<i64: 2, 1, 96>}, {pipeline_mode = #tpu.pipeline_mode<synchronous>, transform_indices = @transform_7, window_bounds = array<i64: 2, 32, 32>}, {pipeline_mode = #tpu.pipeline_mode<synchronous>, transform_indices = @transform_8, window_bounds = array<i64: 2, 6, 32>}, {pipeline_mode = #tpu.pipeline_mode<synchronous>, transform_indices = @transform_9, window_bounds = array<i64: 2, 32, 64>}, {pipeline_mode = #tpu.pipeline_mode<synchronous>, transform_indices = @transform_10, window_bounds = array<i64: 2, 1, 64>}, {pipeline_mode = #tpu.pipeline_mode<synchronous>, transform_indices = @transform_11, window_bounds = array<i64: 2, 64, 32>}, {pipeline_mode = #tpu.pipeline_mode<synchronous>, transform_indices = @transform_12, window_bounds = array<i64: 160, 32>}, {pipeline_mode = #tpu.pipeline_mode<synchronous>, transform_indices = @transform_13, window_bounds = array<i64: 1, 32>}, {transform_indices = @transform_14, window_bounds = array<i64: 1, 1, 32>}]} {
    %c0 = arith.constant 0 : index
    %c0_0 = arith.constant 0 : index
    %c0_1 = arith.constant 0 : index
    %0 = vector.load %arg2[%c0, %c0_0, %c0_1] : memref<1x1x56xf32, #tpu.memory_space<vmem>>, vector<1x1x56xf32>
    %c0_2 = arith.constant 0 : index
    %c0_3 = arith.constant 0 : index
    %c0_4 = arith.constant 0 : index
    %1 = vector.load %arg1[%c0_2, %c0_3, %c0_4] : memref<1x56x8xbf16, #tpu.memory_space<vmem>>, vector<1x56x8xbf16>
    %2 = vector.shape_cast %1 : vector<1x56x8xbf16> to vector<56x8xbf16>
    %c0_5 = arith.constant 0 : index
    %c0_6 = arith.constant 0 : index
    %3 = vector.load %arg5[%c0_5, %c0_6] : memref<8x32xbf16, #tpu.memory_space<vmem>>, vector<8x32xbf16>
    %cst = arith.constant dense<0.000000e+00> : vector<56x32xf32>
    %4 = tpu.matmul %2, %3, %cst {dimension_numbers = #tpu.dot_dimension_numbers<[1], [0], [0], [1], [0, 0, 1, 1], [], []>} : vector<56x8xbf16>, vector<8x32xbf16>, vector<56x32xf32> -> vector<56x32xf32>
    %5 = vector.shape_cast %4 : vector<56x32xf32> to vector<1x56x32xf32>
    %c0_7 = arith.constant 0 : index
    %c0_8 = arith.constant 0 : index
    %c0_9 = arith.constant 0 : index
    %6 = vector.load %arg4[%c0_7, %c0_8, %c0_9] : memref<1x56x32xf32, #tpu.memory_space<vmem>>, vector<1x56x32xf32>
    %7 = arith.addf %5, %6 : vector<1x56x32xf32>
    %8 = vector.shape_cast %7 : vector<1x56x32xf32> to vector<56x32xf32>
    %c0_10 = arith.constant 0 : index
    %c0_11 = arith.constant 0 : index
    %c0_12 = arith.constant 0 : index
    %9 = vector.load %arg6[%c0_10, %c0_11, %c0_12] : memref<2x32x96xbf16, #tpu.memory_space<vmem>>, vector<1x32x96xbf16>
    %10 = vector.shape_cast %9 : vector<1x32x96xbf16> to vector<32x96xbf16>
    %c0_13 = arith.constant 0 : index
    %c0_14 = arith.constant 0 : index
    %c0_15 = arith.constant 0 : index
    %11 = vector.load %arg7[%c0_13, %c0_14, %c0_15] : memref<2x1x96xf32, #tpu.memory_space<vmem>>, vector<1x1x96xf32>
    %12 = vector.shape_cast %11 : vector<1x1x96xf32> to vector<1x96xf32>
    %c0_16 = arith.constant 0 : index
    %c0_17 = arith.constant 0 : index
    %c0_18 = arith.constant 0 : index
    %13 = vector.load %arg8[%c0_16, %c0_17, %c0_18] : memref<2x32x32xbf16, #tpu.memory_space<vmem>>, vector<1x32x32xbf16>
    %14 = vector.shape_cast %13 : vector<1x32x32xbf16> to vector<32x32xbf16>
    %c0_19 = arith.constant 0 : index
    %c0_20 = arith.constant 0 : index
    %c0_21 = arith.constant 0 : index
    %15 = vector.load %arg9[%c0_19, %c0_20, %c0_21] : memref<2x6x32xf32, #tpu.memory_space<vmem>>, vector<1x6x32xf32>
    %16 = vector.shape_cast %15 : vector<1x6x32xf32> to vector<6x32xf32>
    %17 = vector.extract_strided_slice %16 {offsets = [0, 0], sizes = [1, 32], strides = [1, 1]} : vector<6x32xf32> to vector<1x32xf32>
    %18 = vector.extract_strided_slice %16 {offsets = [1, 0], sizes = [1, 32], strides = [1, 1]} : vector<6x32xf32> to vector<1x32xf32>
    %19 = vector.extract_strided_slice %16 {offsets = [2, 0], sizes = [1, 32], strides = [1, 1]} : vector<6x32xf32> to vector<1x32xf32>
    %20 = vector.extract_strided_slice %16 {offsets = [3, 0], sizes = [1, 32], strides = [1, 1]} : vector<6x32xf32> to vector<1x32xf32>
    %21 = vector.extract_strided_slice %16 {offsets = [4, 0], sizes = [1, 32], strides = [1, 1]} : vector<6x32xf32> to vector<1x32xf32>
    %22 = vector.extract_strided_slice %16 {offsets = [5, 0], sizes = [1, 32], strides = [1, 1]} : vector<6x32xf32> to vector<1x32xf32>
    %c0_22 = arith.constant 0 : index
    %c0_23 = arith.constant 0 : index
    %c0_24 = arith.constant 0 : index
    %23 = vector.load %arg10[%c0_22, %c0_23, %c0_24] : memref<2x32x64xbf16, #tpu.memory_space<vmem>>, vector<1x32x64xbf16>
    %24 = vector.shape_cast %23 : vector<1x32x64xbf16> to vector<32x64xbf16>
    %c0_25 = arith.constant 0 : index
    %c0_26 = arith.constant 0 : index
    %c0_27 = arith.constant 0 : index
    %25 = vector.load %arg11[%c0_25, %c0_26, %c0_27] : memref<2x1x64xf32, #tpu.memory_space<vmem>>, vector<1x1x64xf32>
    %26 = vector.shape_cast %25 : vector<1x1x64xf32> to vector<1x64xf32>
    %c0_28 = arith.constant 0 : index
    %c0_29 = arith.constant 0 : index
    %c0_30 = arith.constant 0 : index
    %27 = vector.load %arg12[%c0_28, %c0_29, %c0_30] : memref<2x64x32xbf16, #tpu.memory_space<vmem>>, vector<1x64x32xbf16>
    %28 = vector.shape_cast %27 : vector<1x64x32xbf16> to vector<64x32xbf16>
    %29 = arith.truncf %8 : vector<56x32xf32> to vector<56x32xbf16>
    %cst_31 = arith.constant dense<0.000000e+00> : vector<56x96xf32>
    %30 = tpu.matmul %29, %10, %cst_31 {dimension_numbers = #tpu.dot_dimension_numbers<[1], [0], [0], [1], [0, 0, 1, 1], [], []>} : vector<56x32xbf16>, vector<32x96xbf16>, vector<56x96xf32> -> vector<56x96xf32>
    %31 = vector.broadcast %12 : vector<1x96xf32> to vector<56x96xf32>
    %32 = arith.addf %30, %31 : vector<56x96xf32>
    %33 = vector.shape_cast %32 : vector<56x96xf32> to vector<1x56x96xf32>
    %34 = vector.extract_strided_slice %33 {offsets = [0, 0, 0], sizes = [1, 56, 8], strides = [1, 1, 1]} : vector<1x56x96xf32> to vector<1x56x8xf32>
    %35 = arith.truncf %34 : vector<1x56x8xf32> to vector<1x56x8xbf16>
    %36 = vector.extract_strided_slice %33 {offsets = [0, 0, 32], sizes = [1, 56, 8], strides = [1, 1, 1]} : vector<1x56x96xf32> to vector<1x56x8xf32>
    %37 = arith.truncf %36 : vector<1x56x8xf32> to vector<1x56x8xbf16>
    %38 = vector.extract_strided_slice %33 {offsets = [0, 0, 64], sizes = [1, 56, 8], strides = [1, 1, 1]} : vector<1x56x96xf32> to vector<1x56x8xf32>
    %39 = arith.truncf %38 : vector<1x56x8xf32> to vector<1x56x8xbf16>
    "tpu.trace_start"() <{level = 10 : i32, message = "bqd,bkd->bqk"}> : () -> ()
    %cst_32 = arith.constant dense<0.000000e+00> : vector<1x56x56xf32>
    %40 = tpu.matmul %35, %37, %cst_32 {dimension_numbers = #tpu.dot_dimension_numbers<[2], [2], [1], [1], [0, 0, 0, 1, 1, 1], [0], [0]>} : vector<1x56x8xbf16>, vector<1x56x8xbf16>, vector<1x56x56xf32> -> vector<1x56x56xf32>
    "tpu.trace_stop"() : () -> ()
    %41 = vector.broadcast %0 : vector<1x1x56xf32> to vector<1x56x56xf32>
    %42 = arith.addf %40, %41 : vector<1x56x56xf32>
    %cst_33 = arith.constant dense<0xFF800000> : vector<1x56xf32>
    %43 = vector.multi_reduction <maximumf>, %42, %cst_33 [2] : vector<1x56x56xf32> to vector<1x56xf32>
    %44 = vector.shape_cast %43 : vector<1x56xf32> to vector<1x56x1xf32>
    %45 = vector.broadcast %44 : vector<1x56x1xf32> to vector<1x56x56xf32>
    %46 = arith.subf %42, %45 : vector<1x56x56xf32>
    %47 = math.exp %46 : vector<1x56x56xf32>
    %cst_34 = arith.constant dense<0.000000e+00> : vector<1x56xf32>
    %48 = vector.multi_reduction <add>, %47, %cst_34 [2] : vector<1x56x56xf32> to vector<1x56xf32>
    %49 = vector.shape_cast %48 : vector<1x56xf32> to vector<1x56x1xf32>
    %50 = tpu.reciprocal %49 {approx = true} : vector<1x56x1xf32> -> vector<1x56x1xf32>
    %51 = vector.broadcast %50 : vector<1x56x1xf32> to vector<1x56x56xf32>
    %52 = arith.mulf %47, %51 : vector<1x56x56xf32>
    %53 = arith.truncf %52 : vector<1x56x56xf32> to vector<1x56x56xbf16>
    "tpu.trace_start"() <{level = 10 : i32, message = "bqk,bkd->bqd"}> : () -> ()
    %cst_35 = arith.constant dense<0.000000e+00> : vector<1x56x8xf32>
    %54 = tpu.matmul %53, %39, %cst_35 {dimension_numbers = #tpu.dot_dimension_numbers<[2], [1], [1], [2], [0, 0, 0, 1, 1, 2], [0], [0]>} : vector<1x56x56xbf16>, vector<1x56x8xbf16>, vector<1x56x8xf32> -> vector<1x56x8xf32>
    "tpu.trace_stop"() : () -> ()
    %55 = vector.extract_strided_slice %33 {offsets = [0, 0, 8], sizes = [1, 56, 8], strides = [1, 1, 1]} : vector<1x56x96xf32> to vector<1x56x8xf32>
    %56 = arith.truncf %55 : vector<1x56x8xf32> to vector<1x56x8xbf16>
    %57 = vector.extract_strided_slice %33 {offsets = [0, 0, 40], sizes = [1, 56, 8], strides = [1, 1, 1]} : vector<1x56x96xf32> to vector<1x56x8xf32>
    %58 = arith.truncf %57 : vector<1x56x8xf32> to vector<1x56x8xbf16>
    %59 = vector.extract_strided_slice %33 {offsets = [0, 0, 72], sizes = [1, 56, 8], strides = [1, 1, 1]} : vector<1x56x96xf32> to vector<1x56x8xf32>
    %60 = arith.truncf %59 : vector<1x56x8xf32> to vector<1x56x8xbf16>
    "tpu.trace_start"() <{level = 10 : i32, message = "bqd,bkd->bqk"}> : () -> ()
    %cst_36 = arith.constant dense<0.000000e+00> : vector<1x56x56xf32>
    %61 = tpu.matmul %56, %58, %cst_36 {dimension_numbers = #tpu.dot_dimension_numbers<[2], [2], [1], [1], [0, 0, 0, 1, 1, 1], [0], [0]>} : vector<1x56x8xbf16>, vector<1x56x8xbf16>, vector<1x56x56xf32> -> vector<1x56x56xf32>
    "tpu.trace_stop"() : () -> ()
    %62 = vector.broadcast %0 : vector<1x1x56xf32> to vector<1x56x56xf32>
    %63 = arith.addf %61, %62 : vector<1x56x56xf32>
    %cst_37 = arith.constant dense<0xFF800000> : vector<1x56xf32>
    %64 = vector.multi_reduction <maximumf>, %63, %cst_37 [2] : vector<1x56x56xf32> to vector<1x56xf32>
    %65 = vector.shape_cast %64 : vector<1x56xf32> to vector<1x56x1xf32>
    %66 = vector.broadcast %65 : vector<1x56x1xf32> to vector<1x56x56xf32>
    %67 = arith.subf %63, %66 : vector<1x56x56xf32>
    %68 = math.exp %67 : vector<1x56x56xf32>
    %cst_38 = arith.constant dense<0.000000e+00> : vector<1x56xf32>
    %69 = vector.multi_reduction <add>, %68, %cst_38 [2] : vector<1x56x56xf32> to vector<1x56xf32>
    %70 = vector.shape_cast %69 : vector<1x56xf32> to vector<1x56x1xf32>
    %71 = tpu.reciprocal %70 {approx = true} : vector<1x56x1xf32> -> vector<1x56x1xf32>
    %72 = vector.broadcast %71 : vector<1x56x1xf32> to vector<1x56x56xf32>
    %73 = arith.mulf %68, %72 : vector<1x56x56xf32>
    %74 = arith.truncf %73 : vector<1x56x56xf32> to vector<1x56x56xbf16>
    "tpu.trace_start"() <{level = 10 : i32, message = "bqk,bkd->bqd"}> : () -> ()
    %cst_39 = arith.constant dense<0.000000e+00> : vector<1x56x8xf32>
    %75 = tpu.matmul %74, %60, %cst_39 {dimension_numbers = #tpu.dot_dimension_numbers<[2], [1], [1], [2], [0, 0, 0, 1, 1, 2], [0], [0]>} : vector<1x56x56xbf16>, vector<1x56x8xbf16>, vector<1x56x8xf32> -> vector<1x56x8xf32>
    "tpu.trace_stop"() : () -> ()
    %76 = vector.extract_strided_slice %33 {offsets = [0, 0, 16], sizes = [1, 56, 8], strides = [1, 1, 1]} : vector<1x56x96xf32> to vector<1x56x8xf32>
    %77 = arith.truncf %76 : vector<1x56x8xf32> to vector<1x56x8xbf16>
    %78 = vector.extract_strided_slice %33 {offsets = [0, 0, 48], sizes = [1, 56, 8], strides = [1, 1, 1]} : vector<1x56x96xf32> to vector<1x56x8xf32>
    %79 = arith.truncf %78 : vector<1x56x8xf32> to vector<1x56x8xbf16>
    %80 = vector.extract_strided_slice %33 {offsets = [0, 0, 80], sizes = [1, 56, 8], strides = [1, 1, 1]} : vector<1x56x96xf32> to vector<1x56x8xf32>
    %81 = arith.truncf %80 : vector<1x56x8xf32> to vector<1x56x8xbf16>
    "tpu.trace_start"() <{level = 10 : i32, message = "bqd,bkd->bqk"}> : () -> ()
    %cst_40 = arith.constant dense<0.000000e+00> : vector<1x56x56xf32>
    %82 = tpu.matmul %77, %79, %cst_40 {dimension_numbers = #tpu.dot_dimension_numbers<[2], [2], [1], [1], [0, 0, 0, 1, 1, 1], [0], [0]>} : vector<1x56x8xbf16>, vector<1x56x8xbf16>, vector<1x56x56xf32> -> vector<1x56x56xf32>
    "tpu.trace_stop"() : () -> ()
    %83 = vector.broadcast %0 : vector<1x1x56xf32> to vector<1x56x56xf32>
    %84 = arith.addf %82, %83 : vector<1x56x56xf32>
    %cst_41 = arith.constant dense<0xFF800000> : vector<1x56xf32>
    %85 = vector.multi_reduction <maximumf>, %84, %cst_41 [2] : vector<1x56x56xf32> to vector<1x56xf32>
    %86 = vector.shape_cast %85 : vector<1x56xf32> to vector<1x56x1xf32>
    %87 = vector.broadcast %86 : vector<1x56x1xf32> to vector<1x56x56xf32>
    %88 = arith.subf %84, %87 : vector<1x56x56xf32>
    %89 = math.exp %88 : vector<1x56x56xf32>
    %cst_42 = arith.constant dense<0.000000e+00> : vector<1x56xf32>
    %90 = vector.multi_reduction <add>, %89, %cst_42 [2] : vector<1x56x56xf32> to vector<1x56xf32>
    %91 = vector.shape_cast %90 : vector<1x56xf32> to vector<1x56x1xf32>
    %92 = tpu.reciprocal %91 {approx = true} : vector<1x56x1xf32> -> vector<1x56x1xf32>
    %93 = vector.broadcast %92 : vector<1x56x1xf32> to vector<1x56x56xf32>
    %94 = arith.mulf %89, %93 : vector<1x56x56xf32>
    %95 = arith.truncf %94 : vector<1x56x56xf32> to vector<1x56x56xbf16>
    "tpu.trace_start"() <{level = 10 : i32, message = "bqk,bkd->bqd"}> : () -> ()
    %cst_43 = arith.constant dense<0.000000e+00> : vector<1x56x8xf32>
    %96 = tpu.matmul %95, %81, %cst_43 {dimension_numbers = #tpu.dot_dimension_numbers<[2], [1], [1], [2], [0, 0, 0, 1, 1, 2], [0], [0]>} : vector<1x56x56xbf16>, vector<1x56x8xbf16>, vector<1x56x8xf32> -> vector<1x56x8xf32>
    "tpu.trace_stop"() : () -> ()
    %97 = vector.extract_strided_slice %33 {offsets = [0, 0, 24], sizes = [1, 56, 8], strides = [1, 1, 1]} : vector<1x56x96xf32> to vector<1x56x8xf32>
    %98 = arith.truncf %97 : vector<1x56x8xf32> to vector<1x56x8xbf16>
    %99 = vector.extract_strided_slice %33 {offsets = [0, 0, 56], sizes = [1, 56, 8], strides = [1, 1, 1]} : vector<1x56x96xf32> to vector<1x56x8xf32>
    %100 = arith.truncf %99 : vector<1x56x8xf32> to vector<1x56x8xbf16>
    %101 = vector.extract_strided_slice %33 {offsets = [0, 0, 88], sizes = [1, 56, 8], strides = [1, 1, 1]} : vector<1x56x96xf32> to vector<1x56x8xf32>
    %102 = arith.truncf %101 : vector<1x56x8xf32> to vector<1x56x8xbf16>
    "tpu.trace_start"() <{level = 10 : i32, message = "bqd,bkd->bqk"}> : () -> ()
    %cst_44 = arith.constant dense<0.000000e+00> : vector<1x56x56xf32>
    %103 = tpu.matmul %98, %100, %cst_44 {dimension_numbers = #tpu.dot_dimension_numbers<[2], [2], [1], [1], [0, 0, 0, 1, 1, 1], [0], [0]>} : vector<1x56x8xbf16>, vector<1x56x8xbf16>, vector<1x56x56xf32> -> vector<1x56x56xf32>
    "tpu.trace_stop"() : () -> ()
    %104 = vector.broadcast %0 : vector<1x1x56xf32> to vector<1x56x56xf32>
    %105 = arith.addf %103, %104 : vector<1x56x56xf32>
    %cst_45 = arith.constant dense<0xFF800000> : vector<1x56xf32>
    %106 = vector.multi_reduction <maximumf>, %105, %cst_45 [2] : vector<1x56x56xf32> to vector<1x56xf32>
    %107 = vector.shape_cast %106 : vector<1x56xf32> to vector<1x56x1xf32>
    %108 = vector.broadcast %107 : vector<1x56x1xf32> to vector<1x56x56xf32>
    %109 = arith.subf %105, %108 : vector<1x56x56xf32>
    %110 = math.exp %109 : vector<1x56x56xf32>
    %cst_46 = arith.constant dense<0.000000e+00> : vector<1x56xf32>
    %111 = vector.multi_reduction <add>, %110, %cst_46 [2] : vector<1x56x56xf32> to vector<1x56xf32>
    %112 = vector.shape_cast %111 : vector<1x56xf32> to vector<1x56x1xf32>
    %113 = tpu.reciprocal %112 {approx = true} : vector<1x56x1xf32> -> vector<1x56x1xf32>
    %114 = vector.broadcast %113 : vector<1x56x1xf32> to vector<1x56x56xf32>
    %115 = arith.mulf %110, %114 : vector<1x56x56xf32>
    %116 = arith.truncf %115 : vector<1x56x56xf32> to vector<1x56x56xbf16>
    "tpu.trace_start"() <{level = 10 : i32, message = "bqk,bkd->bqd"}> : () -> ()
    %cst_47 = arith.constant dense<0.000000e+00> : vector<1x56x8xf32>
    %117 = tpu.matmul %116, %102, %cst_47 {dimension_numbers = #tpu.dot_dimension_numbers<[2], [1], [1], [2], [0, 0, 0, 1, 1, 2], [0], [0]>} : vector<1x56x56xbf16>, vector<1x56x8xbf16>, vector<1x56x8xf32> -> vector<1x56x8xf32>
    "tpu.trace_stop"() : () -> ()
    %118 = tpu.concatenate %54, %75, %96, %117 in 2 : vector<1x56x8xf32>, vector<1x56x8xf32>, vector<1x56x8xf32>, vector<1x56x8xf32> -> vector<1x56x32xf32>
    %119 = vector.shape_cast %118 : vector<1x56x32xf32> to vector<56x32xf32>
    %120 = arith.truncf %119 : vector<56x32xf32> to vector<56x32xbf16>
    %cst_48 = arith.constant dense<0.000000e+00> : vector<56x32xf32>
    %121 = tpu.matmul %120, %14, %cst_48 {dimension_numbers = #tpu.dot_dimension_numbers<[1], [0], [0], [1], [0, 0, 1, 1], [], []>} : vector<56x32xbf16>, vector<32x32xbf16>, vector<56x32xf32> -> vector<56x32xf32>
    %122 = vector.broadcast %17 : vector<1x32xf32> to vector<56x32xf32>
    %123 = arith.addf %121, %122 : vector<56x32xf32>
    %124 = arith.addf %8, %123 : vector<56x32xf32>
    %cst_49 = arith.constant dense<0.000000e+00> : vector<56xf32>
    %125 = vector.multi_reduction <add>, %124, %cst_49 [1] : vector<56x32xf32> to vector<56xf32>
    %126 = vector.shape_cast %125 : vector<56xf32> to vector<56x1xf32>
    %cst_50 = arith.constant 3.200000e+01 : f32
    %127 = vector.broadcast %cst_50 : f32 to vector<56x1xf32>
    %128 = arith.divf %126, %127 : vector<56x1xf32>
    %129 = vector.broadcast %128 : vector<56x1xf32> to vector<56x32xf32>
    %130 = arith.subf %124, %129 : vector<56x32xf32>
    %131 = arith.mulf %130, %130 : vector<56x32xf32>
    %cst_51 = arith.constant dense<0.000000e+00> : vector<56xf32>
    %132 = vector.multi_reduction <add>, %131, %cst_51 [1] : vector<56x32xf32> to vector<56xf32>
    %133 = vector.shape_cast %132 : vector<56xf32> to vector<56x1xf32>
    %cst_52 = arith.constant 3.200000e+01 : f32
    %134 = vector.broadcast %cst_52 : f32 to vector<56x1xf32>
    %135 = arith.divf %133, %134 : vector<56x1xf32>
    %136 = vector.broadcast %128 : vector<56x1xf32> to vector<56x32xf32>
    %137 = arith.subf %124, %136 : vector<56x32xf32>
    %cst_53 = arith.constant 9.99999974E-6 : f32
    %138 = vector.broadcast %cst_53 : f32 to vector<56x1xf32>
    %139 = arith.addf %135, %138 : vector<56x1xf32>
    %140 = math.rsqrt %139 : vector<56x1xf32>
    %141 = vector.broadcast %140 : vector<56x1xf32> to vector<56x32xf32>
    %142 = arith.mulf %137, %141 : vector<56x32xf32>
    %143 = vector.broadcast %18 : vector<1x32xf32> to vector<56x32xf32>
    %144 = arith.mulf %142, %143 : vector<56x32xf32>
    %145 = vector.broadcast %19 : vector<1x32xf32> to vector<56x32xf32>
    %146 = arith.addf %144, %145 : vector<56x32xf32>
    %147 = arith.truncf %146 : vector<56x32xf32> to vector<56x32xbf16>
    %cst_54 = arith.constant dense<0.000000e+00> : vector<56x64xf32>
    %148 = tpu.matmul %147, %24, %cst_54 {dimension_numbers = #tpu.dot_dimension_numbers<[1], [0], [0], [1], [0, 0, 1, 1], [], []>} : vector<56x32xbf16>, vector<32x64xbf16>, vector<56x64xf32> -> vector<56x64xf32>
    %149 = vector.broadcast %26 : vector<1x64xf32> to vector<56x64xf32>
    %150 = arith.addf %148, %149 : vector<56x64xf32>
    %cst_55 = arith.constant 0.000000e+00 : f32
    %151 = vector.broadcast %cst_55 : f32 to vector<56x64xf32>
    %152 = arith.maximumf %150, %151 : vector<56x64xf32>
    %153 = arith.truncf %152 : vector<56x64xf32> to vector<56x64xbf16>
    %cst_56 = arith.constant dense<0.000000e+00> : vector<56x32xf32>
    %154 = tpu.matmul %153, %28, %cst_56 {dimension_numbers = #tpu.dot_dimension_numbers<[1], [0], [0], [1], [0, 0, 1, 1], [], []>} : vector<56x64xbf16>, vector<64x32xbf16>, vector<56x32xf32> -> vector<56x32xf32>
    %155 = vector.broadcast %20 : vector<1x32xf32> to vector<56x32xf32>
    %156 = arith.addf %154, %155 : vector<56x32xf32>
    %157 = arith.addf %146, %156 : vector<56x32xf32>
    %cst_57 = arith.constant dense<0.000000e+00> : vector<56xf32>
    %158 = vector.multi_reduction <add>, %157, %cst_57 [1] : vector<56x32xf32> to vector<56xf32>
    %159 = vector.shape_cast %158 : vector<56xf32> to vector<56x1xf32>
    %cst_58 = arith.constant 3.200000e+01 : f32
    %160 = vector.broadcast %cst_58 : f32 to vector<56x1xf32>
    %161 = arith.divf %159, %160 : vector<56x1xf32>
    %162 = vector.broadcast %161 : vector<56x1xf32> to vector<56x32xf32>
    %163 = arith.subf %157, %162 : vector<56x32xf32>
    %164 = arith.mulf %163, %163 : vector<56x32xf32>
    %cst_59 = arith.constant dense<0.000000e+00> : vector<56xf32>
    %165 = vector.multi_reduction <add>, %164, %cst_59 [1] : vector<56x32xf32> to vector<56xf32>
    %166 = vector.shape_cast %165 : vector<56xf32> to vector<56x1xf32>
    %cst_60 = arith.constant 3.200000e+01 : f32
    %167 = vector.broadcast %cst_60 : f32 to vector<56x1xf32>
    %168 = arith.divf %166, %167 : vector<56x1xf32>
    %169 = vector.broadcast %161 : vector<56x1xf32> to vector<56x32xf32>
    %170 = arith.subf %157, %169 : vector<56x32xf32>
    %cst_61 = arith.constant 9.99999974E-6 : f32
    %171 = vector.broadcast %cst_61 : f32 to vector<56x1xf32>
    %172 = arith.addf %168, %171 : vector<56x1xf32>
    %173 = math.rsqrt %172 : vector<56x1xf32>
    %174 = vector.broadcast %173 : vector<56x1xf32> to vector<56x32xf32>
    %175 = arith.mulf %170, %174 : vector<56x32xf32>
    %176 = vector.broadcast %21 : vector<1x32xf32> to vector<56x32xf32>
    %177 = arith.mulf %175, %176 : vector<56x32xf32>
    %178 = vector.broadcast %22 : vector<1x32xf32> to vector<56x32xf32>
    %179 = arith.addf %177, %178 : vector<56x32xf32>
    %c1 = arith.constant 1 : index
    %c0_62 = arith.constant 0 : index
    %c0_63 = arith.constant 0 : index
    %180 = vector.load %arg6[%c1, %c0_62, %c0_63] : memref<2x32x96xbf16, #tpu.memory_space<vmem>>, vector<1x32x96xbf16>
    %181 = vector.shape_cast %180 : vector<1x32x96xbf16> to vector<32x96xbf16>
    %c1_64 = arith.constant 1 : index
    %c0_65 = arith.constant 0 : index
    %c0_66 = arith.constant 0 : index
    %182 = vector.load %arg7[%c1_64, %c0_65, %c0_66] : memref<2x1x96xf32, #tpu.memory_space<vmem>>, vector<1x1x96xf32>
    %183 = vector.shape_cast %182 : vector<1x1x96xf32> to vector<1x96xf32>
    %c1_67 = arith.constant 1 : index
    %c0_68 = arith.constant 0 : index
    %c0_69 = arith.constant 0 : index
    %184 = vector.load %arg8[%c1_67, %c0_68, %c0_69] : memref<2x32x32xbf16, #tpu.memory_space<vmem>>, vector<1x32x32xbf16>
    %185 = vector.shape_cast %184 : vector<1x32x32xbf16> to vector<32x32xbf16>
    %c1_70 = arith.constant 1 : index
    %c0_71 = arith.constant 0 : index
    %c0_72 = arith.constant 0 : index
    %186 = vector.load %arg9[%c1_70, %c0_71, %c0_72] : memref<2x6x32xf32, #tpu.memory_space<vmem>>, vector<1x6x32xf32>
    %187 = vector.shape_cast %186 : vector<1x6x32xf32> to vector<6x32xf32>
    %188 = vector.extract_strided_slice %187 {offsets = [0, 0], sizes = [1, 32], strides = [1, 1]} : vector<6x32xf32> to vector<1x32xf32>
    %189 = vector.extract_strided_slice %187 {offsets = [1, 0], sizes = [1, 32], strides = [1, 1]} : vector<6x32xf32> to vector<1x32xf32>
    %190 = vector.extract_strided_slice %187 {offsets = [2, 0], sizes = [1, 32], strides = [1, 1]} : vector<6x32xf32> to vector<1x32xf32>
    %191 = vector.extract_strided_slice %187 {offsets = [3, 0], sizes = [1, 32], strides = [1, 1]} : vector<6x32xf32> to vector<1x32xf32>
    %192 = vector.extract_strided_slice %187 {offsets = [4, 0], sizes = [1, 32], strides = [1, 1]} : vector<6x32xf32> to vector<1x32xf32>
    %193 = vector.extract_strided_slice %187 {offsets = [5, 0], sizes = [1, 32], strides = [1, 1]} : vector<6x32xf32> to vector<1x32xf32>
    %c1_73 = arith.constant 1 : index
    %c0_74 = arith.constant 0 : index
    %c0_75 = arith.constant 0 : index
    %194 = vector.load %arg10[%c1_73, %c0_74, %c0_75] : memref<2x32x64xbf16, #tpu.memory_space<vmem>>, vector<1x32x64xbf16>
    %195 = vector.shape_cast %194 : vector<1x32x64xbf16> to vector<32x64xbf16>
    %c1_76 = arith.constant 1 : index
    %c0_77 = arith.constant 0 : index
    %c0_78 = arith.constant 0 : index
    %196 = vector.load %arg11[%c1_76, %c0_77, %c0_78] : memref<2x1x64xf32, #tpu.memory_space<vmem>>, vector<1x1x64xf32>
    %197 = vector.shape_cast %196 : vector<1x1x64xf32> to vector<1x64xf32>
    %c1_79 = arith.constant 1 : index
    %c0_80 = arith.constant 0 : index
    %c0_81 = arith.constant 0 : index
    %198 = vector.load %arg12[%c1_79, %c0_80, %c0_81] : memref<2x64x32xbf16, #tpu.memory_space<vmem>>, vector<1x64x32xbf16>
    %199 = vector.shape_cast %198 : vector<1x64x32xbf16> to vector<64x32xbf16>
    %200 = arith.truncf %179 : vector<56x32xf32> to vector<56x32xbf16>
    %cst_82 = arith.constant dense<0.000000e+00> : vector<56x96xf32>
    %201 = tpu.matmul %200, %181, %cst_82 {dimension_numbers = #tpu.dot_dimension_numbers<[1], [0], [0], [1], [0, 0, 1, 1], [], []>} : vector<56x32xbf16>, vector<32x96xbf16>, vector<56x96xf32> -> vector<56x96xf32>
    %202 = vector.broadcast %183 : vector<1x96xf32> to vector<56x96xf32>
    %203 = arith.addf %201, %202 : vector<56x96xf32>
    %204 = vector.shape_cast %203 : vector<56x96xf32> to vector<1x56x96xf32>
    %205 = vector.extract_strided_slice %204 {offsets = [0, 0, 0], sizes = [1, 56, 8], strides = [1, 1, 1]} : vector<1x56x96xf32> to vector<1x56x8xf32>
    %206 = arith.truncf %205 : vector<1x56x8xf32> to vector<1x56x8xbf16>
    %207 = vector.extract_strided_slice %204 {offsets = [0, 0, 32], sizes = [1, 56, 8], strides = [1, 1, 1]} : vector<1x56x96xf32> to vector<1x56x8xf32>
    %208 = arith.truncf %207 : vector<1x56x8xf32> to vector<1x56x8xbf16>
    %209 = vector.extract_strided_slice %204 {offsets = [0, 0, 64], sizes = [1, 56, 8], strides = [1, 1, 1]} : vector<1x56x96xf32> to vector<1x56x8xf32>
    %210 = arith.truncf %209 : vector<1x56x8xf32> to vector<1x56x8xbf16>
    "tpu.trace_start"() <{level = 10 : i32, message = "bqd,bkd->bqk"}> : () -> ()
    %cst_83 = arith.constant dense<0.000000e+00> : vector<1x56x56xf32>
    %211 = tpu.matmul %206, %208, %cst_83 {dimension_numbers = #tpu.dot_dimension_numbers<[2], [2], [1], [1], [0, 0, 0, 1, 1, 1], [0], [0]>} : vector<1x56x8xbf16>, vector<1x56x8xbf16>, vector<1x56x56xf32> -> vector<1x56x56xf32>
    "tpu.trace_stop"() : () -> ()
    %212 = vector.broadcast %0 : vector<1x1x56xf32> to vector<1x56x56xf32>
    %213 = arith.addf %211, %212 : vector<1x56x56xf32>
    %cst_84 = arith.constant dense<0xFF800000> : vector<1x56xf32>
    %214 = vector.multi_reduction <maximumf>, %213, %cst_84 [2] : vector<1x56x56xf32> to vector<1x56xf32>
    %215 = vector.shape_cast %214 : vector<1x56xf32> to vector<1x56x1xf32>
    %216 = vector.broadcast %215 : vector<1x56x1xf32> to vector<1x56x56xf32>
    %217 = arith.subf %213, %216 : vector<1x56x56xf32>
    %218 = math.exp %217 : vector<1x56x56xf32>
    %cst_85 = arith.constant dense<0.000000e+00> : vector<1x56xf32>
    %219 = vector.multi_reduction <add>, %218, %cst_85 [2] : vector<1x56x56xf32> to vector<1x56xf32>
    %220 = vector.shape_cast %219 : vector<1x56xf32> to vector<1x56x1xf32>
    %221 = tpu.reciprocal %220 {approx = true} : vector<1x56x1xf32> -> vector<1x56x1xf32>
    %222 = vector.broadcast %221 : vector<1x56x1xf32> to vector<1x56x56xf32>
    %223 = arith.mulf %218, %222 : vector<1x56x56xf32>
    %224 = arith.truncf %223 : vector<1x56x56xf32> to vector<1x56x56xbf16>
    "tpu.trace_start"() <{level = 10 : i32, message = "bqk,bkd->bqd"}> : () -> ()
    %cst_86 = arith.constant dense<0.000000e+00> : vector<1x56x8xf32>
    %225 = tpu.matmul %224, %210, %cst_86 {dimension_numbers = #tpu.dot_dimension_numbers<[2], [1], [1], [2], [0, 0, 0, 1, 1, 2], [0], [0]>} : vector<1x56x56xbf16>, vector<1x56x8xbf16>, vector<1x56x8xf32> -> vector<1x56x8xf32>
    "tpu.trace_stop"() : () -> ()
    %226 = vector.extract_strided_slice %204 {offsets = [0, 0, 8], sizes = [1, 56, 8], strides = [1, 1, 1]} : vector<1x56x96xf32> to vector<1x56x8xf32>
    %227 = arith.truncf %226 : vector<1x56x8xf32> to vector<1x56x8xbf16>
    %228 = vector.extract_strided_slice %204 {offsets = [0, 0, 40], sizes = [1, 56, 8], strides = [1, 1, 1]} : vector<1x56x96xf32> to vector<1x56x8xf32>
    %229 = arith.truncf %228 : vector<1x56x8xf32> to vector<1x56x8xbf16>
    %230 = vector.extract_strided_slice %204 {offsets = [0, 0, 72], sizes = [1, 56, 8], strides = [1, 1, 1]} : vector<1x56x96xf32> to vector<1x56x8xf32>
    %231 = arith.truncf %230 : vector<1x56x8xf32> to vector<1x56x8xbf16>
    "tpu.trace_start"() <{level = 10 : i32, message = "bqd,bkd->bqk"}> : () -> ()
    %cst_87 = arith.constant dense<0.000000e+00> : vector<1x56x56xf32>
    %232 = tpu.matmul %227, %229, %cst_87 {dimension_numbers = #tpu.dot_dimension_numbers<[2], [2], [1], [1], [0, 0, 0, 1, 1, 1], [0], [0]>} : vector<1x56x8xbf16>, vector<1x56x8xbf16>, vector<1x56x56xf32> -> vector<1x56x56xf32>
    "tpu.trace_stop"() : () -> ()
    %233 = vector.broadcast %0 : vector<1x1x56xf32> to vector<1x56x56xf32>
    %234 = arith.addf %232, %233 : vector<1x56x56xf32>
    %cst_88 = arith.constant dense<0xFF800000> : vector<1x56xf32>
    %235 = vector.multi_reduction <maximumf>, %234, %cst_88 [2] : vector<1x56x56xf32> to vector<1x56xf32>
    %236 = vector.shape_cast %235 : vector<1x56xf32> to vector<1x56x1xf32>
    %237 = vector.broadcast %236 : vector<1x56x1xf32> to vector<1x56x56xf32>
    %238 = arith.subf %234, %237 : vector<1x56x56xf32>
    %239 = math.exp %238 : vector<1x56x56xf32>
    %cst_89 = arith.constant dense<0.000000e+00> : vector<1x56xf32>
    %240 = vector.multi_reduction <add>, %239, %cst_89 [2] : vector<1x56x56xf32> to vector<1x56xf32>
    %241 = vector.shape_cast %240 : vector<1x56xf32> to vector<1x56x1xf32>
    %242 = tpu.reciprocal %241 {approx = true} : vector<1x56x1xf32> -> vector<1x56x1xf32>
    %243 = vector.broadcast %242 : vector<1x56x1xf32> to vector<1x56x56xf32>
    %244 = arith.mulf %239, %243 : vector<1x56x56xf32>
    %245 = arith.truncf %244 : vector<1x56x56xf32> to vector<1x56x56xbf16>
    "tpu.trace_start"() <{level = 10 : i32, message = "bqk,bkd->bqd"}> : () -> ()
    %cst_90 = arith.constant dense<0.000000e+00> : vector<1x56x8xf32>
    %246 = tpu.matmul %245, %231, %cst_90 {dimension_numbers = #tpu.dot_dimension_numbers<[2], [1], [1], [2], [0, 0, 0, 1, 1, 2], [0], [0]>} : vector<1x56x56xbf16>, vector<1x56x8xbf16>, vector<1x56x8xf32> -> vector<1x56x8xf32>
    "tpu.trace_stop"() : () -> ()
    %247 = vector.extract_strided_slice %204 {offsets = [0, 0, 16], sizes = [1, 56, 8], strides = [1, 1, 1]} : vector<1x56x96xf32> to vector<1x56x8xf32>
    %248 = arith.truncf %247 : vector<1x56x8xf32> to vector<1x56x8xbf16>
    %249 = vector.extract_strided_slice %204 {offsets = [0, 0, 48], sizes = [1, 56, 8], strides = [1, 1, 1]} : vector<1x56x96xf32> to vector<1x56x8xf32>
    %250 = arith.truncf %249 : vector<1x56x8xf32> to vector<1x56x8xbf16>
    %251 = vector.extract_strided_slice %204 {offsets = [0, 0, 80], sizes = [1, 56, 8], strides = [1, 1, 1]} : vector<1x56x96xf32> to vector<1x56x8xf32>
    %252 = arith.truncf %251 : vector<1x56x8xf32> to vector<1x56x8xbf16>
    "tpu.trace_start"() <{level = 10 : i32, message = "bqd,bkd->bqk"}> : () -> ()
    %cst_91 = arith.constant dense<0.000000e+00> : vector<1x56x56xf32>
    %253 = tpu.matmul %248, %250, %cst_91 {dimension_numbers = #tpu.dot_dimension_numbers<[2], [2], [1], [1], [0, 0, 0, 1, 1, 1], [0], [0]>} : vector<1x56x8xbf16>, vector<1x56x8xbf16>, vector<1x56x56xf32> -> vector<1x56x56xf32>
    "tpu.trace_stop"() : () -> ()
    %254 = vector.broadcast %0 : vector<1x1x56xf32> to vector<1x56x56xf32>
    %255 = arith.addf %253, %254 : vector<1x56x56xf32>
    %cst_92 = arith.constant dense<0xFF800000> : vector<1x56xf32>
    %256 = vector.multi_reduction <maximumf>, %255, %cst_92 [2] : vector<1x56x56xf32> to vector<1x56xf32>
    %257 = vector.shape_cast %256 : vector<1x56xf32> to vector<1x56x1xf32>
    %258 = vector.broadcast %257 : vector<1x56x1xf32> to vector<1x56x56xf32>
    %259 = arith.subf %255, %258 : vector<1x56x56xf32>
    %260 = math.exp %259 : vector<1x56x56xf32>
    %cst_93 = arith.constant dense<0.000000e+00> : vector<1x56xf32>
    %261 = vector.multi_reduction <add>, %260, %cst_93 [2] : vector<1x56x56xf32> to vector<1x56xf32>
    %262 = vector.shape_cast %261 : vector<1x56xf32> to vector<1x56x1xf32>
    %263 = tpu.reciprocal %262 {approx = true} : vector<1x56x1xf32> -> vector<1x56x1xf32>
    %264 = vector.broadcast %263 : vector<1x56x1xf32> to vector<1x56x56xf32>
    %265 = arith.mulf %260, %264 : vector<1x56x56xf32>
    %266 = arith.truncf %265 : vector<1x56x56xf32> to vector<1x56x56xbf16>
    "tpu.trace_start"() <{level = 10 : i32, message = "bqk,bkd->bqd"}> : () -> ()
    %cst_94 = arith.constant dense<0.000000e+00> : vector<1x56x8xf32>
    %267 = tpu.matmul %266, %252, %cst_94 {dimension_numbers = #tpu.dot_dimension_numbers<[2], [1], [1], [2], [0, 0, 0, 1, 1, 2], [0], [0]>} : vector<1x56x56xbf16>, vector<1x56x8xbf16>, vector<1x56x8xf32> -> vector<1x56x8xf32>
    "tpu.trace_stop"() : () -> ()
    %268 = vector.extract_strided_slice %204 {offsets = [0, 0, 24], sizes = [1, 56, 8], strides = [1, 1, 1]} : vector<1x56x96xf32> to vector<1x56x8xf32>
    %269 = arith.truncf %268 : vector<1x56x8xf32> to vector<1x56x8xbf16>
    %270 = vector.extract_strided_slice %204 {offsets = [0, 0, 56], sizes = [1, 56, 8], strides = [1, 1, 1]} : vector<1x56x96xf32> to vector<1x56x8xf32>
    %271 = arith.truncf %270 : vector<1x56x8xf32> to vector<1x56x8xbf16>
    %272 = vector.extract_strided_slice %204 {offsets = [0, 0, 88], sizes = [1, 56, 8], strides = [1, 1, 1]} : vector<1x56x96xf32> to vector<1x56x8xf32>
    %273 = arith.truncf %272 : vector<1x56x8xf32> to vector<1x56x8xbf16>
    "tpu.trace_start"() <{level = 10 : i32, message = "bqd,bkd->bqk"}> : () -> ()
    %cst_95 = arith.constant dense<0.000000e+00> : vector<1x56x56xf32>
    %274 = tpu.matmul %269, %271, %cst_95 {dimension_numbers = #tpu.dot_dimension_numbers<[2], [2], [1], [1], [0, 0, 0, 1, 1, 1], [0], [0]>} : vector<1x56x8xbf16>, vector<1x56x8xbf16>, vector<1x56x56xf32> -> vector<1x56x56xf32>
    "tpu.trace_stop"() : () -> ()
    %275 = vector.broadcast %0 : vector<1x1x56xf32> to vector<1x56x56xf32>
    %276 = arith.addf %274, %275 : vector<1x56x56xf32>
    %cst_96 = arith.constant dense<0xFF800000> : vector<1x56xf32>
    %277 = vector.multi_reduction <maximumf>, %276, %cst_96 [2] : vector<1x56x56xf32> to vector<1x56xf32>
    %278 = vector.shape_cast %277 : vector<1x56xf32> to vector<1x56x1xf32>
    %279 = vector.broadcast %278 : vector<1x56x1xf32> to vector<1x56x56xf32>
    %280 = arith.subf %276, %279 : vector<1x56x56xf32>
    %281 = math.exp %280 : vector<1x56x56xf32>
    %cst_97 = arith.constant dense<0.000000e+00> : vector<1x56xf32>
    %282 = vector.multi_reduction <add>, %281, %cst_97 [2] : vector<1x56x56xf32> to vector<1x56xf32>
    %283 = vector.shape_cast %282 : vector<1x56xf32> to vector<1x56x1xf32>
    %284 = tpu.reciprocal %283 {approx = true} : vector<1x56x1xf32> -> vector<1x56x1xf32>
    %285 = vector.broadcast %284 : vector<1x56x1xf32> to vector<1x56x56xf32>
    %286 = arith.mulf %281, %285 : vector<1x56x56xf32>
    %287 = arith.truncf %286 : vector<1x56x56xf32> to vector<1x56x56xbf16>
    "tpu.trace_start"() <{level = 10 : i32, message = "bqk,bkd->bqd"}> : () -> ()
    %cst_98 = arith.constant dense<0.000000e+00> : vector<1x56x8xf32>
    %288 = tpu.matmul %287, %273, %cst_98 {dimension_numbers = #tpu.dot_dimension_numbers<[2], [1], [1], [2], [0, 0, 0, 1, 1, 2], [0], [0]>} : vector<1x56x56xbf16>, vector<1x56x8xbf16>, vector<1x56x8xf32> -> vector<1x56x8xf32>
    "tpu.trace_stop"() : () -> ()
    %289 = tpu.concatenate %225, %246, %267, %288 in 2 : vector<1x56x8xf32>, vector<1x56x8xf32>, vector<1x56x8xf32>, vector<1x56x8xf32> -> vector<1x56x32xf32>
    %290 = vector.shape_cast %289 : vector<1x56x32xf32> to vector<56x32xf32>
    %291 = arith.truncf %290 : vector<56x32xf32> to vector<56x32xbf16>
    %cst_99 = arith.constant dense<0.000000e+00> : vector<56x32xf32>
    %292 = tpu.matmul %291, %185, %cst_99 {dimension_numbers = #tpu.dot_dimension_numbers<[1], [0], [0], [1], [0, 0, 1, 1], [], []>} : vector<56x32xbf16>, vector<32x32xbf16>, vector<56x32xf32> -> vector<56x32xf32>
    %293 = vector.broadcast %188 : vector<1x32xf32> to vector<56x32xf32>
    %294 = arith.addf %292, %293 : vector<56x32xf32>
    %295 = arith.addf %179, %294 : vector<56x32xf32>
    %cst_100 = arith.constant dense<0.000000e+00> : vector<56xf32>
    %296 = vector.multi_reduction <add>, %295, %cst_100 [1] : vector<56x32xf32> to vector<56xf32>
    %297 = vector.shape_cast %296 : vector<56xf32> to vector<56x1xf32>
    %cst_101 = arith.constant 3.200000e+01 : f32
    %298 = vector.broadcast %cst_101 : f32 to vector<56x1xf32>
    %299 = arith.divf %297, %298 : vector<56x1xf32>
    %300 = vector.broadcast %299 : vector<56x1xf32> to vector<56x32xf32>
    %301 = arith.subf %295, %300 : vector<56x32xf32>
    %302 = arith.mulf %301, %301 : vector<56x32xf32>
    %cst_102 = arith.constant dense<0.000000e+00> : vector<56xf32>
    %303 = vector.multi_reduction <add>, %302, %cst_102 [1] : vector<56x32xf32> to vector<56xf32>
    %304 = vector.shape_cast %303 : vector<56xf32> to vector<56x1xf32>
    %cst_103 = arith.constant 3.200000e+01 : f32
    %305 = vector.broadcast %cst_103 : f32 to vector<56x1xf32>
    %306 = arith.divf %304, %305 : vector<56x1xf32>
    %307 = vector.broadcast %299 : vector<56x1xf32> to vector<56x32xf32>
    %308 = arith.subf %295, %307 : vector<56x32xf32>
    %cst_104 = arith.constant 9.99999974E-6 : f32
    %309 = vector.broadcast %cst_104 : f32 to vector<56x1xf32>
    %310 = arith.addf %306, %309 : vector<56x1xf32>
    %311 = math.rsqrt %310 : vector<56x1xf32>
    %312 = vector.broadcast %311 : vector<56x1xf32> to vector<56x32xf32>
    %313 = arith.mulf %308, %312 : vector<56x32xf32>
    %314 = vector.broadcast %189 : vector<1x32xf32> to vector<56x32xf32>
    %315 = arith.mulf %313, %314 : vector<56x32xf32>
    %316 = vector.broadcast %190 : vector<1x32xf32> to vector<56x32xf32>
    %317 = arith.addf %315, %316 : vector<56x32xf32>
    %318 = arith.truncf %317 : vector<56x32xf32> to vector<56x32xbf16>
    %cst_105 = arith.constant dense<0.000000e+00> : vector<56x64xf32>
    %319 = tpu.matmul %318, %195, %cst_105 {dimension_numbers = #tpu.dot_dimension_numbers<[1], [0], [0], [1], [0, 0, 1, 1], [], []>} : vector<56x32xbf16>, vector<32x64xbf16>, vector<56x64xf32> -> vector<56x64xf32>
    %320 = vector.broadcast %197 : vector<1x64xf32> to vector<56x64xf32>
    %321 = arith.addf %319, %320 : vector<56x64xf32>
    %cst_106 = arith.constant 0.000000e+00 : f32
    %322 = vector.broadcast %cst_106 : f32 to vector<56x64xf32>
    %323 = arith.maximumf %321, %322 : vector<56x64xf32>
    %324 = arith.truncf %323 : vector<56x64xf32> to vector<56x64xbf16>
    %cst_107 = arith.constant dense<0.000000e+00> : vector<56x32xf32>
    %325 = tpu.matmul %324, %199, %cst_107 {dimension_numbers = #tpu.dot_dimension_numbers<[1], [0], [0], [1], [0, 0, 1, 1], [], []>} : vector<56x64xbf16>, vector<64x32xbf16>, vector<56x32xf32> -> vector<56x32xf32>
    %326 = vector.broadcast %191 : vector<1x32xf32> to vector<56x32xf32>
    %327 = arith.addf %325, %326 : vector<56x32xf32>
    %328 = arith.addf %317, %327 : vector<56x32xf32>
    %cst_108 = arith.constant dense<0.000000e+00> : vector<56xf32>
    %329 = vector.multi_reduction <add>, %328, %cst_108 [1] : vector<56x32xf32> to vector<56xf32>
    %330 = vector.shape_cast %329 : vector<56xf32> to vector<56x1xf32>
    %cst_109 = arith.constant 3.200000e+01 : f32
    %331 = vector.broadcast %cst_109 : f32 to vector<56x1xf32>
    %332 = arith.divf %330, %331 : vector<56x1xf32>
    %333 = vector.broadcast %332 : vector<56x1xf32> to vector<56x32xf32>
    %334 = arith.subf %328, %333 : vector<56x32xf32>
    %335 = arith.mulf %334, %334 : vector<56x32xf32>
    %cst_110 = arith.constant dense<0.000000e+00> : vector<56xf32>
    %336 = vector.multi_reduction <add>, %335, %cst_110 [1] : vector<56x32xf32> to vector<56xf32>
    %337 = vector.shape_cast %336 : vector<56xf32> to vector<56x1xf32>
    %cst_111 = arith.constant 3.200000e+01 : f32
    %338 = vector.broadcast %cst_111 : f32 to vector<56x1xf32>
    %339 = arith.divf %337, %338 : vector<56x1xf32>
    %340 = vector.broadcast %332 : vector<56x1xf32> to vector<56x32xf32>
    %341 = arith.subf %328, %340 : vector<56x32xf32>
    %cst_112 = arith.constant 9.99999974E-6 : f32
    %342 = vector.broadcast %cst_112 : f32 to vector<56x1xf32>
    %343 = arith.addf %339, %342 : vector<56x1xf32>
    %344 = math.rsqrt %343 : vector<56x1xf32>
    %345 = vector.broadcast %344 : vector<56x1xf32> to vector<56x32xf32>
    %346 = arith.mulf %341, %345 : vector<56x32xf32>
    %347 = vector.broadcast %192 : vector<1x32xf32> to vector<56x32xf32>
    %348 = arith.mulf %346, %347 : vector<56x32xf32>
    %349 = vector.broadcast %193 : vector<1x32xf32> to vector<56x32xf32>
    %350 = arith.addf %348, %349 : vector<56x32xf32>
    %351 = vector.shape_cast %350 : vector<56x32xf32> to vector<1x56x32xf32>
    %c0_113 = arith.constant 0 : index
    %c0_114 = arith.constant 0 : index
    %c0_115 = arith.constant 0 : index
    %352 = vector.load %arg3[%c0_113, %c0_114, %c0_115] : memref<1x5x56xf32, #tpu.memory_space<vmem>>, vector<1x5x56xf32>
    "tpu.trace_start"() <{level = 10 : i32, message = "bps,bsd->bpd"}> : () -> ()
    %cst_116 = arith.constant dense<0.000000e+00> : vector<1x5x32xf32>
    %353 = tpu.matmul %352, %351, %cst_116 {dimension_numbers = #tpu.dot_dimension_numbers<[2], [1], [1], [2], [0, 0, 0, 1, 1, 2], [0], [0]>} : vector<1x5x56xf32>, vector<1x56x32xf32>, vector<1x5x32xf32> -> vector<1x5x32xf32>
    "tpu.trace_stop"() : () -> ()
    %354 = vector.shape_cast %353 : vector<1x5x32xf32> to vector<1x160xf32>
    %c0_117 = arith.constant 0 : index
    %c0_118 = arith.constant 0 : index
    %355 = vector.load %arg13[%c0_117, %c0_118] : memref<160x32xf32, #tpu.memory_space<vmem>>, vector<160x32xf32>
    %cst_119 = arith.constant dense<0.000000e+00> : vector<1x32xf32>
    %356 = tpu.matmul %354, %355, %cst_119 {dimension_numbers = #tpu.dot_dimension_numbers<[1], [0], [0], [1], [0, 0, 1, 1], [], []>} : vector<1x160xf32>, vector<160x32xf32>, vector<1x32xf32> -> vector<1x32xf32>
    %c0_120 = arith.constant 0 : index
    %c0_121 = arith.constant 0 : index
    %357 = vector.load %arg14[%c0_120, %c0_121] : memref<1x32xf32, #tpu.memory_space<vmem>>, vector<1x32xf32>
    %358 = arith.addf %356, %357 : vector<1x32xf32>
    %359 = vector.shape_cast %358 : vector<1x32xf32> to vector<1x1x32xf32>
    %c0_122 = arith.constant 0 : index
    %c0_123 = arith.constant 0 : index
    %c0_124 = arith.constant 0 : index
    %360 = vector.load %arg15[%c0_122, %c0_123, %c0_124] : memref<1x1x32xf32, #tpu.memory_space<vmem>>, vector<1x1x32xf32>
    tpu.vector_store %arg15[%c0_122, %c0_123, %c0_124], %359 {strides = array<i32>} : memref<1x1x32xf32, #tpu.memory_space<vmem>>, vector<1x1x32xf32>,
    return
  }
  func.func @transform_0(%arg0: i32) -> (i32, i32, i32) {
    %c0_i32 = arith.constant 0 : i32
    %c0_i32_0 = arith.constant 0 : i32
    %c0_i32_1 = arith.constant 0 : i32
    return %arg0, %c0_i32, %c0_i32_0 : i32, i32, i32
  }
  func.func @transform_1(%arg0: i32) -> (i32, i32, i32) {
    %c0_i32 = arith.constant 0 : i32
    %c0_i32_0 = arith.constant 0 : i32
    %c0_i32_1 = arith.constant 0 : i32
    return %arg0, %c0_i32, %c0_i32_0 : i32, i32, i32
  }
  func.func @transform_2(%arg0: i32) -> (i32, i32, i32) {
    %c0_i32 = arith.constant 0 : i32
    %c0_i32_0 = arith.constant 0 : i32
    %c0_i32_1 = arith.constant 0 : i32
    return %arg0, %c0_i32, %c0_i32_0 : i32, i32, i32
  }
  func.func @transform_3(%arg0: i32) -> (i32, i32, i32) {
    %c0_i32 = arith.constant 0 : i32
    %c0_i32_0 = arith.constant 0 : i32
    %c0_i32_1 = arith.constant 0 : i32
    %c0_i32_2 = arith.constant 0 : i32
    return %c0_i32, %c0_i32_0, %c0_i32_1 : i32, i32, i32
  }
  func.func @transform_4(%arg0: i32) -> (i32, i32) {
    %c0_i32 = arith.constant 0 : i32
    %c0_i32_0 = arith.constant 0 : i32
    %c0_i32_1 = arith.constant 0 : i32
    return %c0_i32, %c0_i32_0 : i32, i32
  }
  func.func @transform_5(%arg0: i32) -> (i32, i32, i32) {
    %c0_i32 = arith.constant 0 : i32
    %c0_i32_0 = arith.constant 0 : i32
    %c0_i32_1 = arith.constant 0 : i32
    %c0_i32_2 = arith.constant 0 : i32
    return %c0_i32, %c0_i32_0, %c0_i32_1 : i32, i32, i32
  }
  func.func @transform_6(%arg0: i32) -> (i32, i32, i32) {
    %c0_i32 = arith.constant 0 : i32
    %c0_i32_0 = arith.constant 0 : i32
    %c0_i32_1 = arith.constant 0 : i32
    %c0_i32_2 = arith.constant 0 : i32
    return %c0_i32, %c0_i32_0, %c0_i32_1 : i32, i32, i32
  }
  func.func @transform_7(%arg0: i32) -> (i32, i32, i32) {
    %c0_i32 = arith.constant 0 : i32
    %c0_i32_0 = arith.constant 0 : i32
    %c0_i32_1 = arith.constant 0 : i32
    %c0_i32_2 = arith.constant 0 : i32
    return %c0_i32, %c0_i32_0, %c0_i32_1 : i32, i32, i32
  }
  func.func @transform_8(%arg0: i32) -> (i32, i32, i32) {
    %c0_i32 = arith.constant 0 : i32
    %c0_i32_0 = arith.constant 0 : i32
    %c0_i32_1 = arith.constant 0 : i32
    %c0_i32_2 = arith.constant 0 : i32
    return %c0_i32, %c0_i32_0, %c0_i32_1 : i32, i32, i32
  }
  func.func @transform_9(%arg0: i32) -> (i32, i32, i32) {
    %c0_i32 = arith.constant 0 : i32
    %c0_i32_0 = arith.constant 0 : i32
    %c0_i32_1 = arith.constant 0 : i32
    %c0_i32_2 = arith.constant 0 : i32
    return %c0_i32, %c0_i32_0, %c0_i32_1 : i32, i32, i32
  }
  func.func @transform_10(%arg0: i32) -> (i32, i32, i32) {
    %c0_i32 = arith.constant 0 : i32
    %c0_i32_0 = arith.constant 0 : i32
    %c0_i32_1 = arith.constant 0 : i32
    %c0_i32_2 = arith.constant 0 : i32
    return %c0_i32, %c0_i32_0, %c0_i32_1 : i32, i32, i32
  }
  func.func @transform_11(%arg0: i32) -> (i32, i32, i32) {
    %c0_i32 = arith.constant 0 : i32
    %c0_i32_0 = arith.constant 0 : i32
    %c0_i32_1 = arith.constant 0 : i32
    %c0_i32_2 = arith.constant 0 : i32
    return %c0_i32, %c0_i32_0, %c0_i32_1 : i32, i32, i32
  }
  func.func @transform_12(%arg0: i32) -> (i32, i32) {
    %c0_i32 = arith.constant 0 : i32
    %c0_i32_0 = arith.constant 0 : i32
    %c0_i32_1 = arith.constant 0 : i32
    return %c0_i32, %c0_i32_0 : i32, i32
  }
  func.func @transform_13(%arg0: i32) -> (i32, i32) {
    %c0_i32 = arith.constant 0 : i32
    %c0_i32_0 = arith.constant 0 : i32
    %c0_i32_1 = arith.constant 0 : i32
    return %c0_i32, %c0_i32_0 : i32, i32
  }
  func.func @transform_14(%arg0: i32) -> (i32, i32, i32) {
    %c0_i32 = arith.constant 0 : i32
    %c0_i32_0 = arith.constant 0 : i32
    %c0_i32_1 = arith.constant 0 : i32
    return %arg0, %c0_i32, %c0_i32_0 : i32, i32, i32
  }
}

</mosaic_0001>

<llo_original>
// kernel: tpu_custom_call.1
$region0: #{tpu_custom_call.1}
  #allocation0 [shape = 'u32[]', space=smem, size = 0x4, offset = 0x4, fixed_abs, tag = 'smem constant byte address 0x4 - core index']
  #allocation1 [shape = 'u32[144,128]{1,0:T(1,128)}', space=vmem, size = 0x12000, scoped, tag = 'internal scratch']
  %s0 = inlined_call_operand.vmem [shape: bf16[2,56,8], index: 0, kind: input, shape index: {}]
  %s1 = inlined_call_operand.vmem [shape: f32[2,1,56], index: 1, kind: input, shape index: {}]
  %s2 = inlined_call_operand.vmem [shape: f32[2,5,56], index: 2, kind: input, shape index: {}]
  %s3 = inlined_call_operand.vmem [shape: f32[1,56,32], index: 3, kind: input, shape index: {}]
  %s4 = inlined_call_operand.vmem [shape: bf16[8,32], index: 4, kind: input, shape index: {}]
  %s5 = inlined_call_operand.vmem [shape: bf16[2,32,96], index: 5, kind: input, shape index: {}]
  %s6 = inlined_call_operand.vmem [shape: f32[2,1,96], index: 6, kind: input, shape index: {}]
  %s7 = inlined_call_operand.vmem [shape: bf16[2,32,32], index: 7, kind: input, shape index: {}]
  %s8 = inlined_call_operand.vmem [shape: f32[2,6,32], index: 8, kind: input, shape index: {}]
  %s9 = inlined_call_operand.vmem [shape: bf16[2,32,64], index: 9, kind: input, shape index: {}]
  %s10 = inlined_call_operand.vmem [shape: f32[2,1,64], index: 10, kind: input, shape index: {}]
  %s11 = inlined_call_operand.vmem [shape: bf16[2,64,32], index: 11, kind: input, shape index: {}]
  %s12 = inlined_call_operand.vmem [shape: f32[160,32], index: 12, kind: input, shape index: {}]
  %s13 = inlined_call_operand.vmem [shape: f32[1,32], index: 13, kind: input, shape index: {}]
  %s14 = inlined_call_operand.hbm [shape: f32[2,1,32], index: 14, kind: output, shape index: {}]
  %s15 = sld [smem:[#allocation0]]
  $region89: #{tpu_custom_call.1} parent=0
    _
  %s17 = ssub.s32 1, %s15
  %s18 = scalar_select 0, %s17, %s15
  $region1: #{tpu_custom_call.1} parent=0
    #allocation2 [shape = 'u8[1024]{0}', space=vmem, size = 0x400, scoped, tag = 'output window, operand 0']
    #allocation3 [shape = 's32[2]{0}', space=sflag, size = 0x8, scoped, tag = 'scoped memory for tpu_custom_call.1']
    %19 = vsyncpa [#allocation3], 0
    %s20 = scalar_lea.sflag [#allocation3], 1
    %21 = vsyncpa %s20, 0
    loop: start=0, step=1, limit=4
    $region2: #{tpu_custom_call.1} parent=1 // loop_pre_header
      _
    $region3: #{tpu_custom_call.1} parent=1 // loop_header
      %s23 = sphi 0, %s27
      %p24 = scmp.ge.s32.totalorder %s23, 4
      %s33 = sphi 0, %s35
      %s36 = sphi 0, %s33
      %s37 = sphi 0, %s36
      %s53 = sphi 0, %s37
      %s59 = sphi 0, %s61
      %s62 = sphi 0, %s59
      %s63 = sphi 0, %s62
      %s79 = sphi 0, %s63
      %s85 = sphi 0, %s87
      %s88 = sphi 0, %s85
      %s89 = sphi 0, %s88
      %s105 = sphi 0, %s89
      %s109 = sphi 0, %s109
      %s111 = sphi 0, %s109
      %s112 = sphi 0, %s111
      %s126 = sphi 0, %s112
      %s130 = sphi 0, %s130
      %s132 = sphi 0, %s130
      %s133 = sphi 0, %s132
      %s147 = sphi 0, %s133
      %s151 = sphi 0, %s151
      %s153 = sphi 0, %s151
      %s154 = sphi 0, %s153
      %s168 = sphi 0, %s154
      %s172 = sphi 0, %s172
      %s174 = sphi 0, %s172
      %s175 = sphi 0, %s174
      %s189 = sphi 0, %s175
      %s193 = sphi 0, %s193
      %s195 = sphi 0, %s193
      %s196 = sphi 0, %s195
      %s210 = sphi 0, %s196
      %s214 = sphi 0, %s214
      %s216 = sphi 0, %s214
      %s217 = sphi 0, %s216
      %s231 = sphi 0, %s217
      %s235 = sphi 0, %s235
      %s237 = sphi 0, %s235
      %s238 = sphi 0, %s237
      %s252 = sphi 0, %s238
      %s256 = sphi 0, %s256
      %s258 = sphi 0, %s256
      %s259 = sphi 0, %s258
      %s273 = sphi 0, %s259
      %s277 = sphi 0, %s277
      %s279 = sphi 0, %s277
      %s280 = sphi 0, %s279
      %s294 = sphi 0, %s280
      %s298 = sphi 0, %s298
      %s300 = sphi 0, %s298
      %s301 = sphi 0, %s300
      %s315 = sphi 0, %s301
      %s319 = sphi 0, %s319
      %s321 = sphi 0, %s319
      %s322 = sphi 0, %s321
      %s336 = sphi 0, %s322
      %s342 = sphi 0, %s344
      %s345 = sphi 0, %s342
      %s346 = sphi 0, %s345
      %s362 = sphi 0, %s346
    $region4: #{tpu_custom_call.1} parent=1 // loop_header_branch
      %26 = sbr.rel (%p24) target = $region8
    $region5: #{tpu_custom_call.1} parent=1 // loop_body
      %s28 = ssub.s32 %s23, 1
      %s29 = ssub.s32 %s23, 2
      %s30 = sadd.s32 %s23, 1
      %s31 = ssub.s32 %s23, %s30
      %p32 = scmp.eq.s32.totalorder %s31, 0
      %s34 = sadd.s32 %s33, 1
      %s35 = scalar_select %p32, %s33, %s34
      %p38 = pneg %p32
      %p39 = scmp.eq.s32.totalorder %s23, 1
      %p40 = por %p38, %p39
      %p41 = scmp.ne.s32.totalorder %s33, %s36
      %p42 = scmp.eq.s32.totalorder %s23, 0
      %p43 = por %p41, %p42
      %p44 = scmp.ne.s32.totalorder %s33, %s36
      %p45 = scmp.eq.s32.totalorder %s28, 1
      %p46 = por %p44, %p45
      %p47 = scmp.ne.s32.totalorder %s36, %s37
      %p48 = scmp.eq.s32.totalorder %s28, 0
      %p49 = por %p47, %p48
      %p50 = scmp.ne.s32.totalorder %s36, %s37
      %p51 = scmp.eq.s32.totalorder %s29, 1
      %p52 = por %p50, %p51
      %p54 = scmp.ne.s32.totalorder %s37, %s53
      %p55 = scmp.eq.s32.totalorder %s29, 0
      %p56 = por %p54, %p55
      %s57 = ssub.s32 %s23, %s30
      %p58 = scmp.eq.s32.totalorder %s57, 0
      %s60 = sadd.s32 %s59, 1
      %s61 = scalar_select %p58, %s59, %s60
      %p64 = pneg %p58
      %p65 = scmp.eq.s32.totalorder %s23, 1
      %p66 = por %p64, %p65
      %p67 = scmp.ne.s32.totalorder %s59, %s62
      %p68 = scmp.eq.s32.totalorder %s23, 0
      %p69 = por %p67, %p68
      %p70 = scmp.ne.s32.totalorder %s59, %s62
      %p71 = scmp.eq.s32.totalorder %s28, 1
      %p72 = por %p70, %p71
      %p73 = scmp.ne.s32.totalorder %s62, %s63
      %p74 = scmp.eq.s32.totalorder %s28, 0
      %p75 = por %p73, %p74
      %p76 = scmp.ne.s32.totalorder %s62, %s63
      %p77 = scmp.eq.s32.totalorder %s29, 1
      %p78 = por %p76, %p77
      %p80 = scmp.ne.s32.totalorder %s63, %s79
      %p81 = scmp.eq.s32.totalorder %s29, 0
      %p82 = por %p80, %p81
      %s83 = ssub.s32 %s23, %s30
      %p84 = scmp.eq.s32.totalorder %s83, 0
      %s86 = sadd.s32 %s85, 1
      %s87 = scalar_select %p84, %s85, %s86
      %p90 = pneg %p84
      %p91 = scmp.eq.s32.totalorder %s23, 1
      %p92 = por %p90, %p91
      %p93 = scmp.ne.s32.totalorder %s85, %s88
      %p94 = scmp.eq.s32.totalorder %s23, 0
      %p95 = por %p93, %p94
      %p96 = scmp.ne.s32.totalorder %s85, %s88
      %p97 = scmp.eq.s32.totalorder %s28, 1
      %p98 = por %p96, %p97
      %p99 = scmp.ne.s32.totalorder %s88, %s89
      %p100 = scmp.eq.s32.totalorder %s28, 0
      %p101 = por %p99, %p100
      %p102 = scmp.ne.s32.totalorder %s88, %s89
      %p103 = scmp.eq.s32.totalorder %s29, 1
      %p104 = por %p102, %p103
      %p106 = scmp.ne.s32.totalorder %s89, %s105
      %p107 = scmp.eq.s32.totalorder %s29, 0
      %p108 = por %p106, %p107
      %s110 = sadd.s32 %s109, 1
      %p113 = scmp.eq.s32.totalorder %s23, 1
      %p114 = scmp.ne.s32.totalorder %s109, %s111
      %p115 = scmp.eq.s32.totalorder %s23, 0
      %p116 = por %p114, %p115
      %p117 = scmp.ne.s32.totalorder %s109, %s111
      %p118 = scmp.eq.s32.totalorder %s28, 1
      %p119 = por %p117, %p118
      %p120 = scmp.ne.s32.totalorder %s111, %s112
      %p121 = scmp.eq.s32.totalorder %s28, 0
      %p122 = por %p120, %p121
      %p123 = scmp.ne.s32.totalorder %s111, %s112
      %p124 = scmp.eq.s32.totalorder %s29, 1
      %p125 = por %p123, %p124
      %p127 = scmp.ne.s32.totalorder %s112, %s126
      %p128 = scmp.eq.s32.totalorder %s29, 0
      %p129 = por %p127, %p128
      %s131 = sadd.s32 %s130, 1
      %p134 = scmp.eq.s32.totalorder %s23, 1
      %p135 = scmp.ne.s32.totalorder %s130, %s132
      %p136 = scmp.eq.s32.totalorder %s23, 0
      %p137 = por %p135, %p136
      %p138 = scmp.ne.s32.totalorder %s130, %s132
      %p139 = scmp.eq.s32.totalorder %s28, 1
      %p140 = por %p138, %p139
      %p141 = scmp.ne.s32.totalorder %s132, %s133
      %p142 = scmp.eq.s32.totalorder %s28, 0
      %p143 = por %p141, %p142
      %p144 = scmp.ne.s32.totalorder %s132, %s133
      %p145 = scmp.eq.s32.totalorder %s29, 1
      %p146 = por %p144, %p145
      %p148 = scmp.ne.s32.totalorder %s133, %s147
      %p149 = scmp.eq.s32.totalorder %s29, 0
      %p150 = por %p148, %p149
      %s152 = sadd.s32 %s151, 1
      %p155 = scmp.eq.s32.totalorder %s23, 1
      %p156 = scmp.ne.s32.totalorder %s151, %s153
      %p157 = scmp.eq.s32.totalorder %s23, 0
      %p158 = por %p156, %p157
      %p159 = scmp.ne.s32.totalorder %s151, %s153
      %p160 = scmp.eq.s32.totalorder %s28, 1
      %p161 = por %p159, %p160
      %p162 = scmp.ne.s32.totalorder %s153, %s154
      %p163 = scmp.eq.s32.totalorder %s28, 0
      %p164 = por %p162, %p163
      %p165 = scmp.ne.s32.totalorder %s153, %s154
      %p166 = scmp.eq.s32.totalorder %s29, 1
      %p167 = por %p165, %p166
      %p169 = scmp.ne.s32.totalorder %s154, %s168
      %p170 = scmp.eq.s32.totalorder %s29, 0
      %p171 = por %p169, %p170
      %s173 = sadd.s32 %s172, 1
      %p176 = scmp.eq.s32.totalorder %s23, 1
      %p177 = scmp.ne.s32.totalorder %s172, %s174
      %p178 = scmp.eq.s32.totalorder %s23, 0
      %p179 = por %p177, %p178
      %p180 = scmp.ne.s32.totalorder %s172, %s174
      %p181 = scmp.eq.s32.totalorder %s28, 1
      %p182 = por %p180, %p181
      %p183 = scmp.ne.s32.totalorder %s174, %s175
      %p184 = scmp.eq.s32.totalorder %s28, 0
      %p185 = por %p183, %p184
      %p186 = scmp.ne.s32.totalorder %s174, %s175
      %p187 = scmp.eq.s32.totalorder %s29, 1
      %p188 = por %p186, %p187
      %p190 = scmp.ne.s32.totalorder %s175, %s189
      %p191 = scmp.eq.s32.totalorder %s29, 0
      %p192 = por %p190, %p191
      %s194 = sadd.s32 %s193, 1
      %p197 = scmp.eq.s32.totalorder %s23, 1
      %p198 = scmp.ne.s32.totalorder %s193, %s195
      %p199 = scmp.eq.s32.totalorder %s23, 0
      %p200 = por %p198, %p199
      %p201 = scmp.ne.s32.totalorder %s193, %s195
      %p202 = scmp.eq.s32.totalorder %s28, 1
      %p203 = por %p201, %p202
      %p204 = scmp.ne.s32.totalorder %s195, %s196
      %p205 = scmp.eq.s32.totalorder %s28, 0
      %p206 = por %p204, %p205
      %p207 = scmp.ne.s32.totalorder %s195, %s196
      %p208 = scmp.eq.s32.totalorder %s29, 1
      %p209 = por %p207, %p208
      %p211 = scmp.ne.s32.totalorder %s196, %s210
      %p212 = scmp.eq.s32.totalorder %s29, 0
      %p213 = por %p211, %p212
      %s215 = sadd.s32 %s214, 1
      %p218 = scmp.eq.s32.totalorder %s23, 1
      %p219 = scmp.ne.s32.totalorder %s214, %s216
      %p220 = scmp.eq.s32.totalorder %s23, 0
      %p221 = por %p219, %p220
      %p222 = scmp.ne.s32.totalorder %s214, %s216
      %p223 = scmp.eq.s32.totalorder %s28, 1
      %p224 = por %p222, %p223
      %p225 = scmp.ne.s32.totalorder %s216, %s217
      %p226 = scmp.eq.s32.totalorder %s28, 0
      %p227 = por %p225, %p226
      %p228 = scmp.ne.s32.totalorder %s216, %s217
      %p229 = scmp.eq.s32.totalorder %s29, 1
      %p230 = por %p228, %p229
      %p232 = scmp.ne.s32.totalorder %s217, %s231
      %p233 = scmp.eq.s32.totalorder %s29, 0
      %p234 = por %p232, %p233
      %s236 = sadd.s32 %s235, 1
      %p239 = scmp.eq.s32.totalorder %s23, 1
      %p240 = scmp.ne.s32.totalorder %s235, %s237
      %p241 = scmp.eq.s32.totalorder %s23, 0
      %p242 = por %p240, %p241
      %p243 = scmp.ne.s32.totalorder %s235, %s237
      %p244 = scmp.eq.s32.totalorder %s28, 1
      %p245 = por %p243, %p244
      %p246 = scmp.ne.s32.totalorder %s237, %s238
      %p247 = scmp.eq.s32.totalorder %s28, 0
      %p248 = por %p246, %p247
      %p249 = scmp.ne.s32.totalorder %s237, %s238
      %p250 = scmp.eq.s32.totalorder %s29, 1
      %p251 = por %p249, %p250
      %p253 = scmp.ne.s32.totalorder %s238, %s252
      %p254 = scmp.eq.s32.totalorder %s29, 0
      %p255 = por %p253, %p254
      %s257 = sadd.s32 %s256, 1
      %p260 = scmp.eq.s32.totalorder %s23, 1
      %p261 = scmp.ne.s32.totalorder %s256, %s258
      %p262 = scmp.eq.s32.totalorder %s23, 0
      %p263 = por %p261, %p262
      %p264 = scmp.ne.s32.totalorder %s256, %s258
      %p265 = scmp.eq.s32.totalorder %s28, 1
      %p266 = por %p264, %p265
      %p267 = scmp.ne.s32.totalorder %s258, %s259
      %p268 = scmp.eq.s32.totalorder %s28, 0
      %p269 = por %p267, %p268
      %p270 = scmp.ne.s32.totalorder %s258, %s259
      %p271 = scmp.eq.s32.totalorder %s29, 1
      %p272 = por %p270, %p271
      %p274 = scmp.ne.s32.totalorder %s259, %s273
      %p275 = scmp.eq.s32.totalorder %s29, 0
      %p276 = por %p274, %p275
      %s278 = sadd.s32 %s277, 1
      %p281 = scmp.eq.s32.totalorder %s23, 1
      %p282 = scmp.ne.s32.totalorder %s277, %s279
      %p283 = scmp.eq.s32.totalorder %s23, 0
      %p284 = por %p282, %p283
      %p285 = scmp.ne.s32.totalorder %s277, %s279
      %p286 = scmp.eq.s32.totalorder %s28, 1
      %p287 = por %p285, %p286
      %p288 = scmp.ne.s32.totalorder %s279, %s280
      %p289 = scmp.eq.s32.totalorder %s28, 0
      %p290 = por %p288, %p289
      %p291 = scmp.ne.s32.totalorder %s279, %s280
      %p292 = scmp.eq.s32.totalorder %s29, 1
      %p293 = por %p291, %p292
      %p295 = scmp.ne.s32.totalorder %s280, %s294
      %p296 = scmp.eq.s32.totalorder %s29, 0
      %p297 = por %p295, %p296
      %s299 = sadd.s32 %s298, 1
      %p302 = scmp.eq.s32.totalorder %s23, 1
      %p303 = scmp.ne.s32.totalorder %s298, %s300
      %p304 = scmp.eq.s32.totalorder %s23, 0
      %p305 = por %p303, %p304
      %p306 = scmp.ne.s32.totalorder %s298, %s300
      %p307 = scmp.eq.s32.totalorder %s28, 1
      %p308 = por %p306, %p307
      %p309 = scmp.ne.s32.totalorder %s300, %s301
      %p310 = scmp.eq.s32.totalorder %s28, 0
      %p311 = por %p309, %p310
      %p312 = scmp.ne.s32.totalorder %s300, %s301
      %p313 = scmp.eq.s32.totalorder %s29, 1
      %p314 = por %p312, %p313
      %p316 = scmp.ne.s32.totalorder %s301, %s315
      %p317 = scmp.eq.s32.totalorder %s29, 0
      %p318 = por %p316, %p317
      %s320 = sadd.s32 %s319, 1
      %p323 = scmp.eq.s32.totalorder %s23, 1
      %p324 = scmp.ne.s32.totalorder %s319, %s321
      %p325 = scmp.eq.s32.totalorder %s23, 0
      %p326 = por %p324, %p325
      %p327 = scmp.ne.s32.totalorder %s319, %s321
      %p328 = scmp.eq.s32.totalorder %s28, 1
      %p329 = por %p327, %p328
      %p330 = scmp.ne.s32.totalorder %s321, %s322
      %p331 = scmp.eq.s32.totalorder %s28, 0
      %p332 = por %p330, %p331
      %p333 = scmp.ne.s32.totalorder %s321, %s322
      %p334 = scmp.eq.s32.totalorder %s29, 1
      %p335 = por %p333, %p334
      %p337 = scmp.ne.s32.totalorder %s322, %s336
      %p338 = scmp.eq.s32.totalorder %s29, 0
      %p339 = por %p337, %p338
      %s340 = ssub.s32 %s23, %s30
      %p341 = scmp.eq.s32.totalorder %s340, 0
      %s343 = sadd.s32 %s342, 1
      %s344 = scalar_select %p341, %s342, %s343
      %p347 = pneg %p341
      %p348 = scmp.eq.s32.totalorder %s23, 1
      %p349 = por %p347, %p348
      %p350 = scmp.ne.s32.totalorder %s342, %s345
      %p351 = scmp.eq.s32.totalorder %s23, 0
      %p352 = por %p350, %p351
      %p353 = scmp.ne.s32.totalorder %s342, %s345
      %p354 = scmp.eq.s32.totalorder %s28, 1
      %p355 = por %p353, %p354
      %p356 = scmp.ne.s32.totalorder %s345, %s346
      %p357 = scmp.eq.s32.totalorder %s28, 0
      %p358 = por %p356, %p357
      %p359 = scmp.ne.s32.totalorder %s345, %s346
      %p360 = scmp.eq.s32.totalorder %s29, 1
      %p361 = por %p359, %p360
      %p363 = scmp.ne.s32.totalorder %s346, %s362
      %p364 = scmp.eq.s32.totalorder %s29, 0
      %p365 = por %p363, %p364
      %p366 = scmp.le.s32.totalorder 1, %s23
      %p367 = scmp.lt.s32.totalorder %s23, 3
      %p368 = pnand %p366, %p367
      %p369 = pneg %p368
      // Predicated region
      $region9: #{tpu_custom_call.1} parent=5 // pred_check
        _
      $region10: #{tpu_custom_call.1} parent=5 // pred_check_branch
        %371 = sbr.rel (%p368) target = $region12
      $region11: #{tpu_custom_call.1} parent=5 // pred_region
        %s372 = ssub.s32 %s23, 1
        // Predicated region
        $region13: #{tpu_custom_call.1} parent=11 // pred_check
          %p373 = pneg %p122
        $region14: #{tpu_custom_call.1} parent=11 // pred_check_branch
          %375 = sbr.rel (%p373) target = $region16
        $region15: #{tpu_custom_call.1} parent=11 // pred_region
          _
        $region16: #{tpu_custom_call.1} parent=11 // pred_fallthru
          _
        // Predicated region
        $region17: #{tpu_custom_call.1} parent=11 // pred_check
          %p376 = pneg %p143
        $region18: #{tpu_custom_call.1} parent=11 // pred_check_branch
          %378 = sbr.rel (%p376) target = $region20
        $region19: #{tpu_custom_call.1} parent=11 // pred_region
          _
        $region20: #{tpu_custom_call.1} parent=11 // pred_fallthru
          _
        // Predicated region
        $region21: #{tpu_custom_call.1} parent=11 // pred_check
          %p379 = pneg %p164
        $region22: #{tpu_custom_call.1} parent=11 // pred_check_branch
          %381 = sbr.rel (%p379) target = $region24
        $region23: #{tpu_custom_call.1} parent=11 // pred_region
          _
        $region24: #{tpu_custom_call.1} parent=11 // pred_fallthru
          _
        // Predicated region
        $region25: #{tpu_custom_call.1} parent=11 // pred_check
          %p382 = pneg %p185
        $region26: #{tpu_custom_call.1} parent=11 // pred_check_branch
          %384 = sbr.rel (%p382) target = $region28
        $region27: #{tpu_custom_call.1} parent=11 // pred_region
          _
        $region28: #{tpu_custom_call.1} parent=11 // pred_fallthru
          _
        // Predicated region
        $region29: #{tpu_custom_call.1} parent=11 // pred_check
          %p385 = pneg %p206
        $region30: #{tpu_custom_call.1} parent=11 // pred_check_branch
          %387 = sbr.rel (%p385) target = $region32
        $region31: #{tpu_custom_call.1} parent=11 // pred_region
          _
        $region32: #{tpu_custom_call.1} parent=11 // pred_fallthru
          _
        // Predicated region
        $region33: #{tpu_custom_call.1} parent=11 // pred_check
          %p388 = pneg %p227
        $region34: #{tpu_custom_call.1} parent=11 // pred_check_branch
          %390 = sbr.rel (%p388) target = $region36
        $region35: #{tpu_custom_call.1} parent=11 // pred_region
          _
        $region36: #{tpu_custom_call.1} parent=11 // pred_fallthru
          _
        // Predicated region
        $region37: #{tpu_custom_call.1} parent=11 // pred_check
          %p391 = pneg %p248
        $region38: #{tpu_custom_call.1} parent=11 // pred_check_branch
          %393 = sbr.rel (%p391) target = $region40
        $region39: #{tpu_custom_call.1} parent=11 // pred_region
          _
        $region40: #{tpu_custom_call.1} parent=11 // pred_fallthru
          _
        // Predicated region
        $region41: #{tpu_custom_call.1} parent=11 // pred_check
          %p394 = pneg %p269
        $region42: #{tpu_custom_call.1} parent=11 // pred_check_branch
          %396 = sbr.rel (%p394) target = $region44
        $region43: #{tpu_custom_call.1} parent=11 // pred_region
          _
        $region44: #{tpu_custom_call.1} parent=11 // pred_fallthru
          _
        // Predicated region
        $region45: #{tpu_custom_call.1} parent=11 // pred_check
          %p397 = pneg %p290
        $region46: #{tpu_custom_call.1} parent=11 // pred_check_branch
          %399 = sbr.rel (%p397) target = $region48
        $region47: #{tpu_custom_call.1} parent=11 // pred_region
          _
        $region48: #{tpu_custom_call.1} parent=11 // pred_fallthru
          _
        // Predicated region
        $region49: #{tpu_custom_call.1} parent=11 // pred_check
          %p400 = pneg %p311
        $region50: #{tpu_custom_call.1} parent=11 // pred_check_branch
          %402 = sbr.rel (%p400) target = $region52
        $region51: #{tpu_custom_call.1} parent=11 // pred_region
          _
        $region52: #{tpu_custom_call.1} parent=11 // pred_fallthru
          _
        // Predicated region
        $region53: #{tpu_custom_call.1} parent=11 // pred_check
          %p403 = pneg %p332
        $region54: #{tpu_custom_call.1} parent=11 // pred_check_branch
          %405 = sbr.rel (%p403) target = $region56
        $region55: #{tpu_custom_call.1} parent=11 // pred_region
          _
        $region56: #{tpu_custom_call.1} parent=11 // pred_fallthru
          _
      $region12: #{tpu_custom_call.1} parent=5 // pred_fallthru
        _
      %p406 = scmp.lt.s32.totalorder %s23, 2
      // Predicated region
      $region57: #{tpu_custom_call.1} parent=5 // pred_check
        %p407 = pneg %p406
      $region58: #{tpu_custom_call.1} parent=5 // pred_check_branch
        %409 = sbr.rel (%p407) target = $region60
      $region59: #{tpu_custom_call.1} parent=5 // pred_region
        // Predicated region
        $region61: #{tpu_custom_call.1} parent=59 // pred_check
          %p410 = pneg %p43
        $region62: #{tpu_custom_call.1} parent=59 // pred_check_branch
          %412 = sbr.rel (%p410) target = $region64
        $region63: #{tpu_custom_call.1} parent=59 // pred_region
          %p413 = scmp.lt.s32.totalorder %s23, 1
          %s414 = scalar_select %p413, %s23, 1
          %s415 = smul.addr %s414, 7
          %s416 = smul.addr %s415, 4
          %s417 = scalar_lea.vmem %s0, %s416
        $region64: #{tpu_custom_call.1} parent=59 // pred_fallthru
          _
        // Predicated region
        $region65: #{tpu_custom_call.1} parent=59 // pred_check
          %p418 = pneg %p69
        $region66: #{tpu_custom_call.1} parent=59 // pred_check_branch
          %420 = sbr.rel (%p418) target = $region68
        $region67: #{tpu_custom_call.1} parent=59 // pred_region
          %p421 = scmp.lt.s32.totalorder %s23, 1
          %s422 = scalar_select %p421, %s23, 1
          %s423 = scalar_lea.vmem %s1, %s422
        $region68: #{tpu_custom_call.1} parent=59 // pred_fallthru
          _
        // Predicated region
        $region69: #{tpu_custom_call.1} parent=59 // pred_check
          %p424 = pneg %p95
        $region70: #{tpu_custom_call.1} parent=59 // pred_check_branch
          %426 = sbr.rel (%p424) target = $region72
        $region71: #{tpu_custom_call.1} parent=59 // pred_region
          %p427 = scmp.lt.s32.totalorder %s23, 1
          %s428 = scalar_select %p427, %s23, 1
          %s429 = smul.addr %s428, 8
          %s430 = scalar_lea.vmem %s2, %s429
        $region72: #{tpu_custom_call.1} parent=59 // pred_fallthru
          _
      $region60: #{tpu_custom_call.1} parent=5 // pred_fallthru
        _
      %p431 = scmp.le.s32.totalorder 1, %s23
      %p432 = scmp.lt.s32.totalorder %s23, 3
      %p433 = pnand %p431, %p432
      %p434 = pneg %p433
      // Predicated region
      $region73: #{tpu_custom_call.1} parent=5 // pred_check
        _
      $region74: #{tpu_custom_call.1} parent=5 // pred_check_branch
        %436 = sbr.rel (%p433) target = $region76
      $region75: #{tpu_custom_call.1} parent=5 // pred_region
        %s437 = ssub.s32 %s23, 1
        %p438 = scmp.lt.s32.totalorder %s28, 1
        %s439 = scalar_select %p438, %s28, 1
        %s440 = smul.addr %s439, 7
        %s441 = smul.addr %s440, 4
        %s442 = scalar_lea.vmem %s0, %s441
        %p443 = pneg %p49
        %p444 = pneg %p46
        %p445 = scmp.lt.s32.totalorder %s28, 1
        %s446 = scalar_select %p445, %s28, 1
        %s447 = scalar_lea.vmem %s1, %s446
        %p448 = pneg %p75
        %p449 = pneg %p72
        %p450 = scmp.lt.s32.totalorder %s28, 1
        %s451 = scalar_select %p450, %s28, 1
        %s452 = smul.addr %s451, 8
        %s453 = scalar_lea.vmem %s2, %s452
        %p454 = pneg %p101
        %p455 = pneg %p98
        %p456 = pneg %p122
        %p457 = pneg %p119
        %p458 = pneg %p143
        %p459 = pneg %p140
        %p460 = pneg %p164
        %p461 = pneg %p161
        %p462 = pneg %p185
        %p463 = pneg %p182
        %p464 = pneg %p206
        %p465 = pneg %p203
        %p466 = pneg %p227
        %p467 = pneg %p224
        %p468 = pneg %p248
        %p469 = pneg %p245
        %p470 = pneg %p269
        %p471 = pneg %p266
        %p472 = pneg %p290
        %p473 = pneg %p287
        %p474 = pneg %p311
        %p475 = pneg %p308
        %p476 = pneg %p332
        %p477 = pneg %p329
        %p478 = pneg %p358
        %p479 = pneg %p355
        %s480 = sand.u32 %s345, 1
        %s481 = scalar_lea.sflag [#allocation3], %s480
        %s482 = sand.u32 %s345, 1
        %s483 = scalar_lea.vmem [#allocation2], %s482
        %p484 = scmp.lt.s32.totalorder %s28, 1
        %s485 = scalar_select %p484, %s28, 1
        %s486 = smul.addr %s485, 7
        %s487 = smul.addr %s486, 4
        %s488 = scalar_lea.vmem %s0, %s487
        %p489 = scmp.lt.s32.totalorder %s28, 1
        %s490 = scalar_select %p489, %s28, 1
        %s491 = scalar_lea.vmem %s1, %s490
        %p492 = scmp.lt.s32.totalorder %s28, 1
        %s493 = scalar_select %p492, %s28, 1
        %s494 = smul.addr %s493, 8
        %s495 = scalar_lea.vmem %s2, %s494
        %v497 = vld [vmem:[%s491] sm:$0x1]
        %v498 = vld [vmem:[%s488] sm:$0xf]
        %v499 = vld [vmem:[%s488 + $0x4] sm:$0xf]
        %v500 = vld [vmem:[%s488 + $0x8] sm:$0xf]
        %v501 = vld [vmem:[%s488 + $0xc] sm:$0xf]
        %v502 = vld [vmem:[%s488 + $0x10] sm:$0xf]
        %v503 = vld [vmem:[%s488 + $0x14] sm:$0xf]
        %v504 = vld [vmem:[%s488 + $0x18] sm:$0xf]
        %v505 = vld [vmem:[%s4] sm:$0xf]
        %v513 = vunpack.c.l.b16 %v498
        %v514 = vunpack.c.l.b16 %v499
        %v515 = vunpack.c.l.b16 %v500
        %v516 = vunpack.c.l.b16 %v501
        %v517 = vunpack.c.l.b16 %v502
        %v518 = vunpack.c.l.b16 %v503
        %v519 = vunpack.c.l.b16 %v504
        %v520 = vpack.c.b16 %v514, %v513
        %v521 = vpack.c.b16 %v516, %v515
        %v522 = vpack.c.b16 %v518, %v517
        %v523 = vpack.c.b16 %v519, %v519
        %vm524 = vcmask 64512
        %v526 = vsel %vm524, %v520, 0
        %v529 = vsel %vm524, %v521, 0
        %v532 = vsel %vm524, %v522, 0
        %v535 = vsel %vm524, %v523, 0
        %vm537 = vcmask 1043456
        %v539 = vsel %vm537, %v505, 0
        %541 = vmatprep.subr.bf16.mxu0 0
        %542 = vmatpush1.bf16.msra.mxu0 0
        %543 = vmatprep.subr.bf16.mxu0 0
        %544 = vmatpush1.bf16.msra.mxu0 0
        %545 = vmatprep.subr.bf16.mxu0 0
        %546 = vmatpush1.bf16.msra.mxu0 0
        %547 = vmatprep.subr.bf16.mxu0 0
        %548 = vmatpush1.bf16.msra.mxu0 0
        %549 = vmatprep.subr.bf16.mxu0 0
        %550 = vmatpush1.bf16.msra.mxu0 0
        %551 = vmatprep.subr.bf16.mxu0 0
        %552 = vmatpush1.bf16.msra.mxu0 0
        %553 = vmatprep.subr.bf16.mxu0 0
        %554 = vmatpush1.bf16.msra.mxu0 0
        %555 = vmatprep.subr.bf16.mxu0 0
        %556 = vmatpush1.bf16.msra.mxu0 %v539
        %557 = vmatprep.subr.bf16.mxu0 0
        %558 = vmatpush2.bf16.msra.mxu0 0
        %559 = vmatprep.subr.bf16.mxu0 0
        %560 = vmatpush2.bf16.msra.mxu0 0
        %561 = vmatprep.subr.bf16.mxu0 0
        %562 = vmatpush2.bf16.msra.mxu0 0
        %563 = vmatprep.subr.bf16.mxu0 0
        %564 = vmatpush2.bf16.msra.mxu0 0
        %565 = vmatprep.subr.bf16.mxu0 0
        %566 = vmatpush2.bf16.msra.mxu0 0
        %567 = vmatprep.subr.bf16.mxu0 0
        %568 = vmatpush2.bf16.msra.mxu0 0
        %569 = vmatprep.subr.bf16.mxu0 0
        %570 = vmatpush2.bf16.msra.mxu0 0
        %571 = vmatprep.subr.bf16.mxu0 0
        %572 = vmatpush2.bf16.msra.mxu0 0
        %573 = vmatprep.mubr.bf16.mxu0 0
        %574 = vmatmul.mubr.bf16.gmra.mxu0 %v526
        %v575 = vpop.f32.mrf.mxu0
        %v576 = vadd.f32 0.0, %v575
        %v577 = vpop.f32.mrf.mxu0
        %v578 = vpop.f32.mrf.mxu0
        %v579 = vadd.f32 0.0, %v578
        %v580 = vpop.f32.mrf.mxu0
        %581 = vmatprep.mubr.bf16.mxu0 0
        %582 = vmatmul.mubr.bf16.gmra.mxu0 %v529
        %v583 = vpop.f32.mrf.mxu0
        %v584 = vadd.f32 0.0, %v583
        %v585 = vpop.f32.mrf.mxu0
        %v586 = vpop.f32.mrf.mxu0
        %v587 = vadd.f32 0.0, %v586
        %v588 = vpop.f32.mrf.mxu0
        %589 = vmatprep.mubr.bf16.mxu0 0
        %590 = vmatmul.mubr.bf16.gmra.mxu0 %v532
        %v591 = vpop.f32.mrf.mxu0
        %v592 = vadd.f32 0.0, %v591
        %v593 = vpop.f32.mrf.mxu0
        %v594 = vpop.f32.mrf.mxu0
        %v595 = vadd.f32 0.0, %v594
        %v596 = vpop.f32.mrf.mxu0
        %597 = vmatprep.mubr.bf16.mxu0 0
        %598 = vmatmul.mubr.bf16.gmra.mxu0 %v535
        %v599 = vpop.f32.mrf.mxu0
        %v600 = vadd.f32 0.0, %v599
        %v601 = vpop.f32.mrf.mxu0
        %v602 = vpop.f32.mrf.mxu0
        %v603 = vpop.f32.mrf.mxu0
        %604 = vdwg.mxu0
        %v605 = vld [vmem:[%s3] sm:$0xff]
        %v606 = vld [vmem:[%s3 + $0x8] sm:$0xff]
        %v607 = vld [vmem:[%s3 + $0x10] sm:$0xff]
        %v608 = vld [vmem:[%s3 + $0x18] sm:$0xff]
        %v609 = vld [vmem:[%s3 + $0x20] sm:$0xff]
        %v610 = vld [vmem:[%s3 + $0x28] sm:$0xff]
        %v611 = vld [vmem:[%s3 + $0x30] sm:$0xff]
        %v612 = vadd.f32 %v576, %v605
        %v613 = vadd.f32 %v579, %v606
        %v614 = vadd.f32 %v584, %v607
        %v615 = vadd.f32 %v587, %v608
        %v616 = vadd.f32 %v592, %v609
        %v617 = vadd.f32 %v595, %v610
        %v618 = vadd.f32 %v600, %v611
        %v619 = vld [vmem:[%s5] sm:$0xf]
        %v620 = vld [vmem:[%s5 + $0x4] sm:$0xf]
        %v621 = vld [vmem:[%s5 + $0x8] sm:$0xf]
        %v622 = vld [vmem:[%s5 + $0xc] sm:$0xf]
        %v623 = vld [vmem:[%s6] sm:$0x1]
        %v624 = vld [vmem:[%s7] sm:$0xf]
        %v625 = vld [vmem:[%s7 + $0x4] sm:$0xf]
        %v626 = vld [vmem:[%s7 + $0x8] sm:$0xf]
        %v627 = vld [vmem:[%s7 + $0xc] sm:$0xf]
        %v628 = vld [vmem:[%s8] sm:$0x3f]
        %v629 = vld [vmem:[%s9] sm:$0xf]
        %v630 = vld [vmem:[%s9 + $0x4] sm:$0xf]
        %v631 = vld [vmem:[%s9 + $0x8] sm:$0xf]
        %v632 = vld [vmem:[%s9 + $0xc] sm:$0xf]
        %v633 = vld [vmem:[%s10] sm:$0x1]
        %v634 = vld [vmem:[%s11] sm:$0xf]
        %v635 = vld [vmem:[%s11 + $0x4] sm:$0xf]
        %v636 = vld [vmem:[%s11 + $0x8] sm:$0xf]
        %v637 = vld [vmem:[%s11 + $0xc] sm:$0xf]
        %v638 = vld [vmem:[%s11 + $0x10] sm:$0xf]
        %v639 = vld [vmem:[%s11 + $0x14] sm:$0xf]
        %v640 = vld [vmem:[%s11 + $0x18] sm:$0xf]
        %v641 = vld [vmem:[%s11 + $0x1c] sm:$0xf]
        %v642 = vpack.c.bf16 %v613, %v612
        %v643 = vpack.c.bf16 %v615, %v614
        %v644 = vpack.c.bf16 %v617, %v616
        %v645 = vpack.c.bf16 %v618, %v618
        %v647 = vlaneseq
        %v648 = vshrl.u32 %v647, 7
        %v649 = vsub.s32 0, %v648
        %v650 = vrot.slane %v623, %v649
        %v656 = vunpack.c.l.b16 %v619
        %v657 = vunpack.c.l.b16 %v620
        %v658 = vunpack.c.l.b16 %v621
        %v659 = vunpack.c.l.b16 %v622
        %v660 = vpack.c.b16 %v657, %v656
        %v661 = vpack.c.b16 %v659, %v658
        %vm664 = vcmask 261120
        %v666 = vsel %vm664, %v642, 0
        %v669 = vsel %vm664, %v643, 0
        %v672 = vsel %vm664, %v644, 0
        %v675 = vsel %vm664, %v645, 0
        %677 = vmatprep.subr.bf16.mxu0 0
        %678 = vmatpush1.bf16.msra.mxu0 0
        %679 = vmatprep.subr.bf16.mxu0 0
        %680 = vmatpush1.bf16.msra.mxu0 0
        %681 = vmatprep.subr.bf16.mxu0 0
        %682 = vmatpush1.bf16.msra.mxu0 0
        %683 = vmatprep.subr.bf16.mxu0 0
        %684 = vmatpush1.bf16.msra.mxu0 0
        %685 = vmatprep.subr.bf16.mxu0 0
        %686 = vmatpush1.bf16.msra.mxu0 0
        %687 = vmatprep.subr.bf16.mxu0 0
        %688 = vmatpush1.bf16.msra.mxu0 0
        %689 = vmatprep.subr.bf16.mxu0 0
        %690 = vmatpush1.bf16.msra.mxu0 %v661
        %691 = vmatprep.subr.bf16.mxu0 0
        %692 = vmatpush1.bf16.msra.mxu0 %v660
        %693 = vmatprep.subr.bf16.mxu0 0
        %694 = vmatpush2.bf16.msra.mxu0 0
        %695 = vmatprep.subr.bf16.mxu0 0
        %696 = vmatpush2.bf16.msra.mxu0 0
        %697 = vmatprep.subr.bf16.mxu0 0
        %698 = vmatpush2.bf16.msra.mxu0 0
        %699 = vmatprep.subr.bf16.mxu0 0
        %700 = vmatpush2.bf16.msra.mxu0 0
        %701 = vmatprep.subr.bf16.mxu0 0
        %702 = vmatpush2.bf16.msra.mxu0 0
        %703 = vmatprep.subr.bf16.mxu0 0
        %704 = vmatpush2.bf16.msra.mxu0 0
        %705 = vmatprep.subr.bf16.mxu0 0
        %706 = vmatpush2.bf16.msra.mxu0 0
        %707 = vmatprep.subr.bf16.mxu0 0
        %708 = vmatpush2.bf16.msra.mxu0 0
        %709 = vmatprep.mubr.bf16.mxu0 0
        %710 = vmatmul.mubr.bf16.gmra.mxu0 %v666
        %v711 = vpop.f32.mrf.mxu0
        %v712 = vadd.f32 %v650, %v711
        %v713 = vpop.f32.mrf.mxu0
        %v714 = vpop.f32.mrf.mxu0
        %v715 = vadd.f32 %v650, %v714
        %v716 = vpop.f32.mrf.mxu0
        %717 = vmatprep.mubr.bf16.mxu0 0
        %718 = vmatmul.mubr.bf16.gmra.mxu0 %v669
        %v719 = vpop.f32.mrf.mxu0
        %v720 = vadd.f32 %v650, %v719
        %v721 = vpop.f32.mrf.mxu0
        %v722 = vpop.f32.mrf.mxu0
        %v723 = vadd.f32 %v650, %v722
        %v724 = vpop.f32.mrf.mxu0
        %725 = vmatprep.mubr.bf16.mxu0 0
        %726 = vmatmul.mubr.bf16.gmra.mxu0 %v672
        %v727 = vpop.f32.mrf.mxu0
        %v728 = vadd.f32 %v650, %v727
        %v729 = vpop.f32.mrf.mxu0
        %v730 = vpop.f32.mrf.mxu0
        %v731 = vadd.f32 %v650, %v730
        %v732 = vpop.f32.mrf.mxu0
        %733 = vmatprep.mubr.bf16.mxu0 0
        %734 = vmatmul.mubr.bf16.gmra.mxu0 %v675
        %v735 = vpop.f32.mrf.mxu0
        %v736 = vadd.f32 %v650, %v735
        %v737 = vpop.f32.mrf.mxu0
        %v738 = vpop.f32.mrf.mxu0
        %v739 = vpop.f32.mrf.mxu0
        %740 = vdwg.mxu0
        %v741 = vpack.c.bf16 %v715, %v712
        %v742 = vpack.c.bf16 %v723, %v720
        %v743 = vpack.c.bf16 %v731, %v728
        %v744 = vpack.c.bf16 %v736, %v736
        %v746 = vlaneseq
        %v747 = vshrl.u32 %v746, 7
        %v748 = vsub.s32 0, %v747
        %v749 = vrot.slane %v497, %v748
        %755 = vrot.lane.b32.xlu0 %v741, 96
        %v756 = vpop.permute.xlu0 %755
        %757 = vrot.lane.b32.xlu0 %v742, 96
        %v758 = vpop.permute.xlu0 %757
        %759 = vrot.lane.b32.xlu0 %v743, 96
        %v760 = vpop.permute.xlu0 %759
        %761 = vrot.lane.b32.xlu0 %v744, 96
        %v762 = vpop.permute.xlu0 %761
        %v764 = vsel %vm524, %v741, 0
        %v767 = vsel %vm524, %v742, 0
        %v770 = vsel %vm524, %v743, 0
        %v773 = vsel %vm524, %v744, 0
        %v776 = vsel %vm524, %v756, 0
        %v779 = vsel %vm524, %v758, 0
        %v782 = vsel %vm524, %v760, 0
        %v785 = vsel %vm524, %v762, 0
        %787 = vmatprep.subr.bf16.mxu0 0
        %788 = vmatpush1.bf16.xpose.msra.mxu0 0
        %789 = vmatprep.subr.bf16.mxu0 0
        %790 = vmatpush1.bf16.xpose.msra.mxu0 0
        %791 = vmatprep.subr.bf16.mxu0 0
        %792 = vmatpush1.bf16.xpose.msra.mxu0 0
        %793 = vmatprep.subr.bf16.mxu0 0
        %794 = vmatpush1.bf16.xpose.msra.mxu0 0
        %795 = vmatprep.subr.bf16.mxu0 0
        %796 = vmatpush1.bf16.xpose.msra.mxu0 %v785
        %797 = vmatprep.subr.bf16.mxu0 0
        %798 = vmatpush1.bf16.xpose.msra.mxu0 %v782
        %799 = vmatprep.subr.bf16.mxu0 0
        %800 = vmatpush1.bf16.xpose.msra.mxu0 %v779
        %801 = vmatprep.subr.bf16.mxu0 0
        %802 = vmatpush1.bf16.xpose.msra.mxu0 %v776
        %803 = vmatprep.subr.bf16.mxu0 0
        %804 = vmatpush2.bf16.xpose.msra.mxu0 0
        %805 = vmatprep.subr.bf16.mxu0 0
        %806 = vmatpush2.bf16.xpose.msra.mxu0 0
        %807 = vmatprep.subr.bf16.mxu0 0
        %808 = vmatpush2.bf16.xpose.msra.mxu0 0
        %809 = vmatprep.subr.bf16.mxu0 0
        %810 = vmatpush2.bf16.xpose.msra.mxu0 0
        %811 = vmatprep.subr.bf16.mxu0 0
        %812 = vmatpush2.bf16.xpose.msra.mxu0 0
        %813 = vmatprep.subr.bf16.mxu0 0
        %814 = vmatpush2.bf16.xpose.msra.mxu0 0
        %815 = vmatprep.subr.bf16.mxu0 0
        %816 = vmatpush2.bf16.xpose.msra.mxu0 0
        %817 = vmatprep.subr.bf16.mxu0 0
        %818 = vmatpush2.bf16.xpose.msra.mxu0 0
        %819 = vmatprep.mubr.bf16.mxu0 0
        %820 = vmatmul.mubr.bf16.gmra.mxu0 %v764
        %v821 = vpop.f32.mrf.mxu0
        %v822 = vadd.f32 %v749, %v821
        %v823 = vpop.f32.mrf.mxu0
        %v824 = vpop.f32.mrf.mxu0
        %v825 = vadd.f32 %v749, %v824
        %v826 = vpop.f32.mrf.mxu0
        %827 = vmatprep.mubr.bf16.mxu0 0
        %828 = vmatmul.mubr.bf16.gmra.mxu0 %v767
        %v829 = vpop.f32.mrf.mxu0
        %v830 = vadd.f32 %v749, %v829
        %v831 = vpop.f32.mrf.mxu0
        %v832 = vpop.f32.mrf.mxu0
        %v833 = vadd.f32 %v749, %v832
        %v834 = vpop.f32.mrf.mxu0
        %835 = vmatprep.mubr.bf16.mxu0 0
        %836 = vmatmul.mubr.bf16.gmra.mxu0 %v770
        %v837 = vpop.f32.mrf.mxu0
        %v838 = vadd.f32 %v749, %v837
        %v839 = vpop.f32.mrf.mxu0
        %v840 = vpop.f32.mrf.mxu0
        %v841 = vadd.f32 %v749, %v840
        %v842 = vpop.f32.mrf.mxu0
        %843 = vmatprep.mubr.bf16.mxu0 0
        %844 = vmatmul.mubr.bf16.gmra.mxu0 %v773
        %v845 = vpop.f32.mrf.mxu0
        %v846 = vadd.f32 %v749, %v845
        %v847 = vpop.f32.mrf.mxu0
        %v848 = vpop.f32.mrf.mxu0
        %v849 = vpop.f32.mrf.mxu0
        %850 = vdwg.mxu0
        %vm851 = vcmask 457728
        %v852 = vsel %vm851, %v822, -inf
        %853 = vmax.xlane.f32.xlu0 %v852
        %v854 = vpop.xlane.xlu0 %853
        %v855 = vsel %vm851, %v825, -inf
        %856 = vmax.xlane.f32.xlu0 %v855
        %v857 = vpop.xlane.xlu0 %856
        %v858 = vsel %vm851, %v830, -inf
        %859 = vmax.xlane.f32.xlu0 %v858
        %v860 = vpop.xlane.xlu0 %859
        %v861 = vsel %vm851, %v833, -inf
        %862 = vmax.xlane.f32.xlu0 %v861
        %v863 = vpop.xlane.xlu0 %862
        %v864 = vsel %vm851, %v838, -inf
        %865 = vmax.xlane.f32.xlu0 %v864
        %v866 = vpop.xlane.xlu0 %865
        %v867 = vsel %vm851, %v841, -inf
        %868 = vmax.xlane.f32.xlu0 %v867
        %v869 = vpop.xlane.xlu0 %868
        %v870 = vsel %vm851, %v846, -inf
        %871 = vmax.xlane.f32.xlu0 %v870
        %v872 = vpop.xlane.xlu0 %871
        %v873 = vsub.f32 %v822, %v854
        %v874 = vsub.f32 %v825, %v857
        %v875 = vsub.f32 %v830, %v860
        %v876 = vsub.f32 %v833, %v863
        %v877 = vsub.f32 %v838, %v866
        %v878 = vsub.f32 %v841, %v869
        %v879 = vsub.f32 %v846, %v872
        %v880 = vmul.f32 %v873, 1.442695
        %v881 = vpow.pop %v880
        %v882 = vmul.f32 %v874, 1.442695
        %v883 = vpow.pop %v882
        %v884 = vmul.f32 %v875, 1.442695
        %v885 = vpow.pop %v884
        %v886 = vmul.f32 %v876, 1.442695
        %v887 = vpow.pop %v886
        %v888 = vmul.f32 %v877, 1.442695
        %v889 = vpow.pop %v888
        %v890 = vmul.f32 %v878, 1.442695
        %v891 = vpow.pop %v890
        %v892 = vmul.f32 %v879, 1.442695
        %v893 = vpow.pop %v892
        %v894 = vsel %vm851, %v881, 0.0
        %895 = vadd.xlane.f32.xlu0 %v894
        %v896 = vpop.xlane.xlu0 %895
        %v897 = vsel %vm851, %v883, 0.0
        %898 = vadd.xlane.f32.xlu0 %v897
        %v899 = vpop.xlane.xlu0 %898
        %v900 = vsel %vm851, %v885, 0.0
        %901 = vadd.xlane.f32.xlu0 %v900
        %v902 = vpop.xlane.xlu0 %901
        %v903 = vsel %vm851, %v887, 0.0
        %904 = vadd.xlane.f32.xlu0 %v903
        %v905 = vpop.xlane.xlu0 %904
        %v906 = vsel %vm851, %v889, 0.0
        %907 = vadd.xlane.f32.xlu0 %v906
        %v908 = vpop.xlane.xlu0 %907
        %v909 = vsel %vm851, %v891, 0.0
        %910 = vadd.xlane.f32.xlu0 %v909
        %v911 = vpop.xlane.xlu0 %910
        %v912 = vsel %vm851, %v893, 0.0
        %913 = vadd.xlane.f32.xlu0 %v912
        %v914 = vpop.xlane.xlu0 %913
        %v915 = vrcp.pop %v896
        %v916 = vrcp.pop %v899
        %v917 = vrcp.pop %v902
        %v918 = vrcp.pop %v905
        %v919 = vrcp.pop %v908
        %v920 = vrcp.pop %v911
        %v921 = vrcp.pop %v914
        %v922 = vmul.f32 %v881, %v915
        %v923 = vmul.f32 %v883, %v916
        %v924 = vmul.f32 %v885, %v917
        %v925 = vmul.f32 %v887, %v918
        %v926 = vmul.f32 %v889, %v919
        %v927 = vmul.f32 %v891, %v920
        %v928 = vmul.f32 %v893, %v921
        %v929 = vpack.c.bf16 %v923, %v922
        %v930 = vpack.c.bf16 %v925, %v924
        %v931 = vpack.c.bf16 %v927, %v926
        %v932 = vpack.c.bf16 %v928, %v928
        %933 = vrot.lane.b32.xlu0 %v741, 64
        %v934 = vpop.permute.xlu0 %933
        %935 = vrot.lane.b32.xlu0 %v742, 64
        %v936 = vpop.permute.xlu0 %935
        %937 = vrot.lane.b32.xlu0 %v743, 64
        %v938 = vpop.permute.xlu0 %937
        %939 = vrot.lane.b32.xlu0 %v744, 64
        %v940 = vpop.permute.xlu0 %939
        %v945 = vsel %vm851, %v929, 0
        %v948 = vsel %vm851, %v930, 0
        %v951 = vsel %vm851, %v931, 0
        %v954 = vsel %vm851, %v932, 0
        %v957 = vsel %vm537, %v940, 0
        %959 = vmatprep.subr.bf16.mxu0 0
        %960 = vmatpush1.bf16.msra.mxu0 0
        %961 = vmatprep.subr.bf16.mxu0 0
        %962 = vmatpush1.bf16.msra.mxu0 0
        %963 = vmatprep.subr.bf16.mxu0 0
        %964 = vmatpush1.bf16.msra.mxu0 0
        %965 = vmatprep.subr.bf16.mxu0 0
        %966 = vmatpush1.bf16.msra.mxu0 0
        %967 = vmatprep.subr.bf16.mxu0 0
        %968 = vmatpush1.bf16.msra.mxu0 %v957
        %969 = vmatprep.subr.bf16.mxu0 0
        %970 = vmatpush1.bf16.msra.mxu0 %v938
        %971 = vmatprep.subr.bf16.mxu0 0
        %972 = vmatpush1.bf16.msra.mxu0 %v936
        %973 = vmatprep.subr.bf16.mxu0 0
        %974 = vmatpush1.bf16.msra.mxu0 %v934
        %975 = vmatprep.subr.bf16.mxu0 0
        %976 = vmatpush2.bf16.msra.mxu0 0
        %977 = vmatprep.subr.bf16.mxu0 0
        %978 = vmatpush2.bf16.msra.mxu0 0
        %979 = vmatprep.subr.bf16.mxu0 0
        %980 = vmatpush2.bf16.msra.mxu0 0
        %981 = vmatprep.subr.bf16.mxu0 0
        %982 = vmatpush2.bf16.msra.mxu0 0
        %983 = vmatprep.subr.bf16.mxu0 0
        %984 = vmatpush2.bf16.msra.mxu0 0
        %985 = vmatprep.subr.bf16.mxu0 0
        %986 = vmatpush2.bf16.msra.mxu0 0
        %987 = vmatprep.subr.bf16.mxu0 0
        %988 = vmatpush2.bf16.msra.mxu0 0
        %989 = vmatprep.subr.bf16.mxu0 0
        %990 = vmatpush2.bf16.msra.mxu0 0
        %991 = vmatprep.mubr.bf16.mxu0 0
        %992 = vmatmul.mubr.bf16.gmra.mxu0 %v945
        %v993 = vpop.f32.mrf.mxu0
        %v994 = vadd.f32 0.0, %v993
        %v995 = vpop.f32.mrf.mxu0
        %v996 = vpop.f32.mrf.mxu0
        %v997 = vadd.f32 0.0, %v996
        %v998 = vpop.f32.mrf.mxu0
        %999 = vmatprep.mubr.bf16.mxu0 0
        %1000 = vmatmul.mubr.bf16.gmra.mxu0 %v948
        %v1001 = vpop.f32.mrf.mxu0
        %v1002 = vadd.f32 0.0, %v1001
        %v1003 = vpop.f32.mrf.mxu0
        %v1004 = vpop.f32.mrf.mxu0
        %v1005 = vadd.f32 0.0, %v1004
        %v1006 = vpop.f32.mrf.mxu0
        %1007 = vmatprep.mubr.bf16.mxu0 0
        %1008 = vmatmul.mubr.bf16.gmra.mxu0 %v951
        %v1009 = vpop.f32.mrf.mxu0
        %v1010 = vadd.f32 0.0, %v1009
        %v1011 = vpop.f32.mrf.mxu0
        %v1012 = vpop.f32.mrf.mxu0
        %v1013 = vadd.f32 0.0, %v1012
        %v1014 = vpop.f32.mrf.mxu0
        %1015 = vmatprep.mubr.bf16.mxu0 0
        %1016 = vmatmul.mubr.bf16.gmra.mxu0 %v954
        %v1017 = vpop.f32.mrf.mxu0
        %v1018 = vadd.f32 0.0, %v1017
        %v1019 = vpop.f32.mrf.mxu0
        %v1020 = vpop.f32.mrf.mxu0
        %v1021 = vpop.f32.mrf.mxu0
        %1022 = vdwg.mxu0
        %1023 = vrot.lane.b32.xlu0 %v741, 120
        %v1024 = vpop.permute.xlu0 %1023
        %1025 = vrot.lane.b32.xlu0 %v742, 120
        %v1026 = vpop.permute.xlu0 %1025
        %1027 = vrot.lane.b32.xlu0 %v743, 120
        %v1028 = vpop.permute.xlu0 %1027
        %1029 = vrot.lane.b32.xlu0 %v744, 120
        %v1030 = vpop.permute.xlu0 %1029
        %1031 = vrot.lane.b32.xlu0 %v741, 88
        %v1032 = vpop.permute.xlu0 %1031
        %1033 = vrot.lane.b32.xlu0 %v742, 88
        %v1034 = vpop.permute.xlu0 %1033
        %1035 = vrot.lane.b32.xlu0 %v743, 88
        %v1036 = vpop.permute.xlu0 %1035
        %1037 = vrot.lane.b32.xlu0 %v744, 88
        %v1038 = vpop.permute.xlu0 %1037
        %v1040 = vsel %vm524, %v1024, 0
        %v1043 = vsel %vm524, %v1026, 0
        %v1046 = vsel %vm524, %v1028, 0
        %v1049 = vsel %vm524, %v1030, 0
        %v1052 = vsel %vm524, %v1032, 0
        %v1055 = vsel %vm524, %v1034, 0
        %v1058 = vsel %vm524, %v1036, 0
        %v1061 = vsel %vm524, %v1038, 0
        %1063 = vmatprep.subr.bf16.mxu0 0
        %1064 = vmatpush1.bf16.xpose.msra.mxu0 0
        %1065 = vmatprep.subr.bf16.mxu0 0
        %1066 = vmatpush1.bf16.xpose.msra.mxu0 0
        %1067 = vmatprep.subr.bf16.mxu0 0
        %1068 = vmatpush1.bf16.xpose.msra.mxu0 0
        %1069 = vmatprep.subr.bf16.mxu0 0
        %1070 = vmatpush1.bf16.xpose.msra.mxu0 0
        %1071 = vmatprep.subr.bf16.mxu0 0
        %1072 = vmatpush1.bf16.xpose.msra.mxu0 %v1061
        %1073 = vmatprep.subr.bf16.mxu0 0
        %1074 = vmatpush1.bf16.xpose.msra.mxu0 %v1058
        %1075 = vmatprep.subr.bf16.mxu0 0
        %1076 = vmatpush1.bf16.xpose.msra.mxu0 %v1055
        %1077 = vmatprep.subr.bf16.mxu0 0
        %1078 = vmatpush1.bf16.xpose.msra.mxu0 %v1052
        %1079 = vmatprep.subr.bf16.mxu0 0
        %1080 = vmatpush2.bf16.xpose.msra.mxu0 0
        %1081 = vmatprep.subr.bf16.mxu0 0
        %1082 = vmatpush2.bf16.xpose.msra.mxu0 0
        %1083 = vmatprep.subr.bf16.mxu0 0
        %1084 = vmatpush2.bf16.xpose.msra.mxu0 0
        %1085 = vmatprep.subr.bf16.mxu0 0
        %1086 = vmatpush2.bf16.xpose.msra.mxu0 0
        %1087 = vmatprep.subr.bf16.mxu0 0
        %1088 = vmatpush2.bf16.xpose.msra.mxu0 0
        %1089 = vmatprep.subr.bf16.mxu0 0
        %1090 = vmatpush2.bf16.xpose.msra.mxu0 0
        %1091 = vmatprep.subr.bf16.mxu0 0
        %1092 = vmatpush2.bf16.xpose.msra.mxu0 0
        %1093 = vmatprep.subr.bf16.mxu0 0
        %1094 = vmatpush2.bf16.xpose.msra.mxu0 0
        %1095 = vmatprep.mubr.bf16.mxu0 0
        %1096 = vmatmul.mubr.bf16.gmra.mxu0 %v1040
        %v1097 = vpop.f32.mrf.mxu0
        %v1098 = vadd.f32 %v749, %v1097
        %v1099 = vpop.f32.mrf.mxu0
        %v1100 = vpop.f32.mrf.mxu0
        %v1101 = vadd.f32 %v749, %v1100
        %v1102 = vpop.f32.mrf.mxu0
        %1103 = vmatprep.mubr.bf16.mxu0 0
        %1104 = vmatmul.mubr.bf16.gmra.mxu0 %v1043
        %v1105 = vpop.f32.mrf.mxu0
        %v1106 = vadd.f32 %v749, %v1105
        %v1107 = vpop.f32.mrf.mxu0
        %v1108 = vpop.f32.mrf.mxu0
        %v1109 = vadd.f32 %v749, %v1108
        %v1110 = vpop.f32.mrf.mxu0
        %1111 = vmatprep.mubr.bf16.mxu0 0
        %1112 = vmatmul.mubr.bf16.gmra.mxu0 %v1046
        %v1113 = vpop.f32.mrf.mxu0
        %v1114 = vadd.f32 %v749, %v1113
        %v1115 = vpop.f32.mrf.mxu0
        %v1116 = vpop.f32.mrf.mxu0
        %v1117 = vadd.f32 %v749, %v1116
        %v1118 = vpop.f32.mrf.mxu0
        %1119 = vmatprep.mubr.bf16.mxu0 0
        %1120 = vmatmul.mubr.bf16.gmra.mxu0 %v1049
        %v1121 = vpop.f32.mrf.mxu0
        %v1122 = vadd.f32 %v749, %v1121
        %v1123 = vpop.f32.mrf.mxu0
        %v1124 = vpop.f32.mrf.mxu0
        %v1125 = vpop.f32.mrf.mxu0
        %1126 = vdwg.mxu0
        %v1127 = vsel %vm851, %v1098, -inf
        %1128 = vmax.xlane.f32.xlu0 %v1127
        %v1129 = vpop.xlane.xlu0 %1128
        %v1130 = vsel %vm851, %v1101, -inf
        %1131 = vmax.xlane.f32.xlu0 %v1130
        %v1132 = vpop.xlane.xlu0 %1131
        %v1133 = vsel %vm851, %v1106, -inf
        %1134 = vmax.xlane.f32.xlu0 %v1133
        %v1135 = vpop.xlane.xlu0 %1134
        %v1136 = vsel %vm851, %v1109, -inf
        %1137 = vmax.xlane.f32.xlu0 %v1136
        %v1138 = vpop.xlane.xlu0 %1137
        %v1139 = vsel %vm851, %v1114, -inf
        %1140 = vmax.xlane.f32.xlu0 %v1139
        %v1141 = vpop.xlane.xlu0 %1140
        %v1142 = vsel %vm851, %v1117, -inf
        %1143 = vmax.xlane.f32.xlu0 %v1142
        %v1144 = vpop.xlane.xlu0 %1143
        %v1145 = vsel %vm851, %v1122, -inf
        %1146 = vmax.xlane.f32.xlu0 %v1145
        %v1147 = vpop.xlane.xlu0 %1146
        %v1148 = vsub.f32 %v1098, %v1129
        %v1149 = vsub.f32 %v1101, %v1132
        %v1150 = vsub.f32 %v1106, %v1135
        %v1151 = vsub.f32 %v1109, %v1138
        %v1152 = vsub.f32 %v1114, %v1141
        %v1153 = vsub.f32 %v1117, %v1144
        %v1154 = vsub.f32 %v1122, %v1147
        %v1155 = vmul.f32 %v1148, 1.442695
        %v1156 = vpow.pop %v1155
        %v1157 = vmul.f32 %v1149, 1.442695
        %v1158 = vpow.pop %v1157
        %v1159 = vmul.f32 %v1150, 1.442695
        %v1160 = vpow.pop %v1159
        %v1161 = vmul.f32 %v1151, 1.442695
        %v1162 = vpow.pop %v1161
        %v1163 = vmul.f32 %v1152, 1.442695
        %v1164 = vpow.pop %v1163
        %v1165 = vmul.f32 %v1153, 1.442695
        %v1166 = vpow.pop %v1165
        %v1167 = vmul.f32 %v1154, 1.442695
        %v1168 = vpow.pop %v1167
        %v1169 = vsel %vm851, %v1156, 0.0
        %1170 = vadd.xlane.f32.xlu0 %v1169
        %v1171 = vpop.xlane.xlu0 %1170
        %v1172 = vsel %vm851, %v1158, 0.0
        %1173 = vadd.xlane.f32.xlu0 %v1172
        %v1174 = vpop.xlane.xlu0 %1173
        %v1175 = vsel %vm851, %v1160, 0.0
        %1176 = vadd.xlane.f32.xlu0 %v1175
        %v1177 = vpop.xlane.xlu0 %1176
        %v1178 = vsel %vm851, %v1162, 0.0
        %1179 = vadd.xlane.f32.xlu0 %v1178
        %v1180 = vpop.xlane.xlu0 %1179
        %v1181 = vsel %vm851, %v1164, 0.0
        %1182 = vadd.xlane.f32.xlu0 %v1181
        %v1183 = vpop.xlane.xlu0 %1182
        %v1184 = vsel %vm851, %v1166, 0.0
        %1185 = vadd.xlane.f32.xlu0 %v1184
        %v1186 = vpop.xlane.xlu0 %1185
        %v1187 = vsel %vm851, %v1168, 0.0
        %1188 = vadd.xlane.f32.xlu0 %v1187
        %v1189 = vpop.xlane.xlu0 %1188
        %v1190 = vrcp.pop %v1171
        %v1191 = vrcp.pop %v1174
        %v1192 = vrcp.pop %v1177
        %v1193 = vrcp.pop %v1180
        %v1194 = vrcp.pop %v1183
        %v1195 = vrcp.pop %v1186
        %v1196 = vrcp.pop %v1189
        %v1197 = vmul.f32 %v1156, %v1190
        %v1198 = vmul.f32 %v1158, %v1191
        %v1199 = vmul.f32 %v1160, %v1192
        %v1200 = vmul.f32 %v1162, %v1193
        %v1201 = vmul.f32 %v1164, %v1194
        %v1202 = vmul.f32 %v1166, %v1195
        %v1203 = vmul.f32 %v1168, %v1196
        %v1204 = vpack.c.bf16 %v1198, %v1197
        %v1205 = vpack.c.bf16 %v1200, %v1199
        %v1206 = vpack.c.bf16 %v1202, %v1201
        %v1207 = vpack.c.bf16 %v1203, %v1203
        %1208 = vrot.lane.b32.xlu0 %v741, 56
        %v1209 = vpop.permute.xlu0 %1208
        %1210 = vrot.lane.b32.xlu0 %v742, 56
        %v1211 = vpop.permute.xlu0 %1210
        %1212 = vrot.lane.b32.xlu0 %v743, 56
        %v1213 = vpop.permute.xlu0 %1212
        %1214 = vrot.lane.b32.xlu0 %v744, 56
        %v1215 = vpop.permute.xlu0 %1214
        %v1220 = vsel %vm851, %v1204, 0
        %v1223 = vsel %vm851, %v1205, 0
        %v1226 = vsel %vm851, %v1206, 0
        %v1229 = vsel %vm851, %v1207, 0
        %v1232 = vsel %vm537, %v1215, 0
        %1234 = vmatprep.subr.bf16.mxu0 0
        %1235 = vmatpush1.bf16.msra.mxu0 0
        %1236 = vmatprep.subr.bf16.mxu0 0
        %1237 = vmatpush1.bf16.msra.mxu0 0
        %1238 = vmatprep.subr.bf16.mxu0 0
        %1239 = vmatpush1.bf16.msra.mxu0 0
        %1240 = vmatprep.subr.bf16.mxu0 0
        %1241 = vmatpush1.bf16.msra.mxu0 0
        %1242 = vmatprep.subr.bf16.mxu0 0
        %1243 = vmatpush1.bf16.msra.mxu0 %v1232
        %1244 = vmatprep.subr.bf16.mxu0 0
        %1245 = vmatpush1.bf16.msra.mxu0 %v1213
        %1246 = vmatprep.subr.bf16.mxu0 0
        %1247 = vmatpush1.bf16.msra.mxu0 %v1211
        %1248 = vmatprep.subr.bf16.mxu0 0
        %1249 = vmatpush1.bf16.msra.mxu0 %v1209
        %1250 = vmatprep.subr.bf16.mxu0 0
        %1251 = vmatpush2.bf16.msra.mxu0 0
        %1252 = vmatprep.subr.bf16.mxu0 0
        %1253 = vmatpush2.bf16.msra.mxu0 0
        %1254 = vmatprep.subr.bf16.mxu0 0
        %1255 = vmatpush2.bf16.msra.mxu0 0
        %1256 = vmatprep.subr.bf16.mxu0 0
        %1257 = vmatpush2.bf16.msra.mxu0 0
        %1258 = vmatprep.subr.bf16.mxu0 0
        %1259 = vmatpush2.bf16.msra.mxu0 0
        %1260 = vmatprep.subr.bf16.mxu0 0
        %1261 = vmatpush2.bf16.msra.mxu0 0
        %1262 = vmatprep.subr.bf16.mxu0 0
        %1263 = vmatpush2.bf16.msra.mxu0 0
        %1264 = vmatprep.subr.bf16.mxu0 0
        %1265 = vmatpush2.bf16.msra.mxu0 0
        %1266 = vmatprep.mubr.bf16.mxu0 0
        %1267 = vmatmul.mubr.bf16.gmra.mxu0 %v1220
        %v1268 = vpop.f32.mrf.mxu0
        %v1269 = vadd.f32 0.0, %v1268
        %v1270 = vpop.f32.mrf.mxu0
        %v1271 = vpop.f32.mrf.mxu0
        %v1272 = vadd.f32 0.0, %v1271
        %v1273 = vpop.f32.mrf.mxu0
        %1274 = vmatprep.mubr.bf16.mxu0 0
        %1275 = vmatmul.mubr.bf16.gmra.mxu0 %v1223
        %v1276 = vpop.f32.mrf.mxu0
        %v1277 = vadd.f32 0.0, %v1276
        %v1278 = vpop.f32.mrf.mxu0
        %v1279 = vpop.f32.mrf.mxu0
        %v1280 = vadd.f32 0.0, %v1279
        %v1281 = vpop.f32.mrf.mxu0
        %1282 = vmatprep.mubr.bf16.mxu0 0
        %1283 = vmatmul.mubr.bf16.gmra.mxu0 %v1226
        %v1284 = vpop.f32.mrf.mxu0
        %v1285 = vadd.f32 0.0, %v1284
        %v1286 = vpop.f32.mrf.mxu0
        %v1287 = vpop.f32.mrf.mxu0
        %v1288 = vadd.f32 0.0, %v1287
        %v1289 = vpop.f32.mrf.mxu0
        %1290 = vmatprep.mubr.bf16.mxu0 0
        %1291 = vmatmul.mubr.bf16.gmra.mxu0 %v1229
        %v1292 = vpop.f32.mrf.mxu0
        %v1293 = vadd.f32 0.0, %v1292
        %v1294 = vpop.f32.mrf.mxu0
        %v1295 = vpop.f32.mrf.mxu0
        %v1296 = vpop.f32.mrf.mxu0
        %1297 = vdwg.mxu0
        %1298 = vrot.lane.b32.xlu0 %v741, 112
        %v1299 = vpop.permute.xlu0 %1298
        %1300 = vrot.lane.b32.xlu0 %v742, 112
        %v1301 = vpop.permute.xlu0 %1300
        %1302 = vrot.lane.b32.xlu0 %v743, 112
        %v1303 = vpop.permute.xlu0 %1302
        %1304 = vrot.lane.b32.xlu0 %v744, 112
        %v1305 = vpop.permute.xlu0 %1304
        %1306 = vrot.lane.b32.xlu0 %v741, 80
        %v1307 = vpop.permute.xlu0 %1306
        %1308 = vrot.lane.b32.xlu0 %v742, 80
        %v1309 = vpop.permute.xlu0 %1308
        %1310 = vrot.lane.b32.xlu0 %v743, 80
        %v1311 = vpop.permute.xlu0 %1310
        %1312 = vrot.lane.b32.xlu0 %v744, 80
        %v1313 = vpop.permute.xlu0 %1312
        %v1315 = vsel %vm524, %v1299, 0
        %v1318 = vsel %vm524, %v1301, 0
        %v1321 = vsel %vm524, %v1303, 0
        %v1324 = vsel %vm524, %v1305, 0
        %v1327 = vsel %vm524, %v1307, 0
        %v1330 = vsel %vm524, %v1309, 0
        %v1333 = vsel %vm524, %v1311, 0
        %v1336 = vsel %vm524, %v1313, 0
        %1338 = vmatprep.subr.bf16.mxu0 0
        %1339 = vmatpush1.bf16.xpose.msra.mxu0 0
        %1340 = vmatprep.subr.bf16.mxu0 0
        %1341 = vmatpush1.bf16.xpose.msra.mxu0 0
        %1342 = vmatprep.subr.bf16.mxu0 0
        %1343 = vmatpush1.bf16.xpose.msra.mxu0 0
        %1344 = vmatprep.subr.bf16.mxu0 0
        %1345 = vmatpush1.bf16.xpose.msra.mxu0 0
        %1346 = vmatprep.subr.bf16.mxu0 0
        %1347 = vmatpush1.bf16.xpose.msra.mxu0 %v1336
        %1348 = vmatprep.subr.bf16.mxu0 0
        %1349 = vmatpush1.bf16.xpose.msra.mxu0 %v1333
        %1350 = vmatprep.subr.bf16.mxu0 0
        %1351 = vmatpush1.bf16.xpose.msra.mxu0 %v1330
        %1352 = vmatprep.subr.bf16.mxu0 0
        %1353 = vmatpush1.bf16.xpose.msra.mxu0 %v1327
        %1354 = vmatprep.subr.bf16.mxu0 0
        %1355 = vmatpush2.bf16.xpose.msra.mxu0 0
        %1356 = vmatprep.subr.bf16.mxu0 0
        %1357 = vmatpush2.bf16.xpose.msra.mxu0 0
        %1358 = vmatprep.subr.bf16.mxu0 0
        %1359 = vmatpush2.bf16.xpose.msra.mxu0 0
        %1360 = vmatprep.subr.bf16.mxu0 0
        %1361 = vmatpush2.bf16.xpose.msra.mxu0 0
        %1362 = vmatprep.subr.bf16.mxu0 0
        %1363 = vmatpush2.bf16.xpose.msra.mxu0 0
        %1364 = vmatprep.subr.bf16.mxu0 0
        %1365 = vmatpush2.bf16.xpose.msra.mxu0 0
        %1366 = vmatprep.subr.bf16.mxu0 0
        %1367 = vmatpush2.bf16.xpose.msra.mxu0 0
        %1368 = vmatprep.subr.bf16.mxu0 0
        %1369 = vmatpush2.bf16.xpose.msra.mxu0 0
        %1370 = vmatprep.mubr.bf16.mxu0 0
        %1371 = vmatmul.mubr.bf16.gmra.mxu0 %v1315
        %v1372 = vpop.f32.mrf.mxu0
        %v1373 = vadd.f32 %v749, %v1372
        %v1374 = vpop.f32.mrf.mxu0
        %v1375 = vpop.f32.mrf.mxu0
        %v1376 = vadd.f32 %v749, %v1375
        %v1377 = vpop.f32.mrf.mxu0
        %1378 = vmatprep.mubr.bf16.mxu0 0
        %1379 = vmatmul.mubr.bf16.gmra.mxu0 %v1318
        %v1380 = vpop.f32.mrf.mxu0
        %v1381 = vadd.f32 %v749, %v1380
        %v1382 = vpop.f32.mrf.mxu0
        %v1383 = vpop.f32.mrf.mxu0
        %v1384 = vadd.f32 %v749, %v1383
        %v1385 = vpop.f32.mrf.mxu0
        %1386 = vmatprep.mubr.bf16.mxu0 0
        %1387 = vmatmul.mubr.bf16.gmra.mxu0 %v1321
        %v1388 = vpop.f32.mrf.mxu0
        %v1389 = vadd.f32 %v749, %v1388
        %v1390 = vpop.f32.mrf.mxu0
        %v1391 = vpop.f32.mrf.mxu0
        %v1392 = vadd.f32 %v749, %v1391
        %v1393 = vpop.f32.mrf.mxu0
        %1394 = vmatprep.mubr.bf16.mxu0 0
        %1395 = vmatmul.mubr.bf16.gmra.mxu0 %v1324
        %v1396 = vpop.f32.mrf.mxu0
        %v1397 = vadd.f32 %v749, %v1396
        %v1398 = vpop.f32.mrf.mxu0
        %v1399 = vpop.f32.mrf.mxu0
        %v1400 = vpop.f32.mrf.mxu0
        %1401 = vdwg.mxu0
        %v1402 = vsel %vm851, %v1373, -inf
        %1403 = vmax.xlane.f32.xlu0 %v1402
        %v1404 = vpop.xlane.xlu0 %1403
        %v1405 = vsel %vm851, %v1376, -inf
        %1406 = vmax.xlane.f32.xlu0 %v1405
        %v1407 = vpop.xlane.xlu0 %1406
        %v1408 = vsel %vm851, %v1381, -inf
        %1409 = vmax.xlane.f32.xlu0 %v1408
        %v1410 = vpop.xlane.xlu0 %1409
        %v1411 = vsel %vm851, %v1384, -inf
        %1412 = vmax.xlane.f32.xlu0 %v1411
        %v1413 = vpop.xlane.xlu0 %1412
        %v1414 = vsel %vm851, %v1389, -inf
        %1415 = vmax.xlane.f32.xlu0 %v1414
        %v1416 = vpop.xlane.xlu0 %1415
        %v1417 = vsel %vm851, %v1392, -inf
        %1418 = vmax.xlane.f32.xlu0 %v1417
        %v1419 = vpop.xlane.xlu0 %1418
        %v1420 = vsel %vm851, %v1397, -inf
        %1421 = vmax.xlane.f32.xlu0 %v1420
        %v1422 = vpop.xlane.xlu0 %1421
        %v1423 = vsub.f32 %v1373, %v1404
        %v1424 = vsub.f32 %v1376, %v1407
        %v1425 = vsub.f32 %v1381, %v1410
        %v1426 = vsub.f32 %v1384, %v1413
        %v1427 = vsub.f32 %v1389, %v1416
        %v1428 = vsub.f32 %v1392, %v1419
        %v1429 = vsub.f32 %v1397, %v1422
        %v1430 = vmul.f32 %v1423, 1.442695
        %v1431 = vpow.pop %v1430
        %v1432 = vmul.f32 %v1424, 1.442695
        %v1433 = vpow.pop %v1432
        %v1434 = vmul.f32 %v1425, 1.442695
        %v1435 = vpow.pop %v1434
        %v1436 = vmul.f32 %v1426, 1.442695
        %v1437 = vpow.pop %v1436
        %v1438 = vmul.f32 %v1427, 1.442695
        %v1439 = vpow.pop %v1438
        %v1440 = vmul.f32 %v1428, 1.442695
        %v1441 = vpow.pop %v1440
        %v1442 = vmul.f32 %v1429, 1.442695
        %v1443 = vpow.pop %v1442
        %v1444 = vsel %vm851, %v1431, 0.0
        %1445 = vadd.xlane.f32.xlu0 %v1444
        %v1446 = vpop.xlane.xlu0 %1445
        %v1447 = vsel %vm851, %v1433, 0.0
        %1448 = vadd.xlane.f32.xlu0 %v1447
        %v1449 = vpop.xlane.xlu0 %1448
        %v1450 = vsel %vm851, %v1435, 0.0
        %1451 = vadd.xlane.f32.xlu0 %v1450
        %v1452 = vpop.xlane.xlu0 %1451
        %v1453 = vsel %vm851, %v1437, 0.0
        %1454 = vadd.xlane.f32.xlu0 %v1453
        %v1455 = vpop.xlane.xlu0 %1454
        %v1456 = vsel %vm851, %v1439, 0.0
        %1457 = vadd.xlane.f32.xlu0 %v1456
        %v1458 = vpop.xlane.xlu0 %1457
        %v1459 = vsel %vm851, %v1441, 0.0
        %1460 = vadd.xlane.f32.xlu0 %v1459
        %v1461 = vpop.xlane.xlu0 %1460
        %v1462 = vsel %vm851, %v1443, 0.0
        %1463 = vadd.xlane.f32.xlu0 %v1462
        %v1464 = vpop.xlane.xlu0 %1463
        %v1465 = vrcp.pop %v1446
        %v1466 = vrcp.pop %v1449
        %v1467 = vrcp.pop %v1452
        %v1468 = vrcp.pop %v1455
        %v1469 = vrcp.pop %v1458
        %v1470 = vrcp.pop %v1461
        %v1471 = vrcp.pop %v1464
        %v1472 = vmul.f32 %v1431, %v1465
        %v1473 = vmul.f32 %v1433, %v1466
        %v1474 = vmul.f32 %v1435, %v1467
        %v1475 = vmul.f32 %v1437, %v1468
        %v1476 = vmul.f32 %v1439, %v1469
        %v1477 = vmul.f32 %v1441, %v1470
        %v1478 = vmul.f32 %v1443, %v1471
        %v1479 = vpack.c.bf16 %v1473, %v1472
        %v1480 = vpack.c.bf16 %v1475, %v1474
        %v1481 = vpack.c.bf16 %v1477, %v1476
        %v1482 = vpack.c.bf16 %v1478, %v1478
        %1483 = vrot.lane.b32.xlu0 %v741, 48
        %v1484 = vpop.permute.xlu0 %1483
        %1485 = vrot.lane.b32.xlu0 %v742, 48
        %v1486 = vpop.permute.xlu0 %1485
        %1487 = vrot.lane.b32.xlu0 %v743, 48
        %v1488 = vpop.permute.xlu0 %1487
        %1489 = vrot.lane.b32.xlu0 %v744, 48
        %v1490 = vpop.permute.xlu0 %1489
        %v1495 = vsel %vm851, %v1479, 0
        %v1498 = vsel %vm851, %v1480, 0
        %v1501 = vsel %vm851, %v1481, 0
        %v1504 = vsel %vm851, %v1482, 0
        %v1507 = vsel %vm537, %v1490, 0
        %1509 = vmatprep.subr.bf16.mxu0 0
        %1510 = vmatpush1.bf16.msra.mxu0 0
        %1511 = vmatprep.subr.bf16.mxu0 0
        %1512 = vmatpush1.bf16.msra.mxu0 0
        %1513 = vmatprep.subr.bf16.mxu0 0
        %1514 = vmatpush1.bf16.msra.mxu0 0
        %1515 = vmatprep.subr.bf16.mxu0 0
        %1516 = vmatpush1.bf16.msra.mxu0 0
        %1517 = vmatprep.subr.bf16.mxu0 0
        %1518 = vmatpush1.bf16.msra.mxu0 %v1507
        %1519 = vmatprep.subr.bf16.mxu0 0
        %1520 = vmatpush1.bf16.msra.mxu0 %v1488
        %1521 = vmatprep.subr.bf16.mxu0 0
        %1522 = vmatpush1.bf16.msra.mxu0 %v1486
        %1523 = vmatprep.subr.bf16.mxu0 0
        %1524 = vmatpush1.bf16.msra.mxu0 %v1484
        %1525 = vmatprep.subr.bf16.mxu0 0
        %1526 = vmatpush2.bf16.msra.mxu0 0
        %1527 = vmatprep.subr.bf16.mxu0 0
        %1528 = vmatpush2.bf16.msra.mxu0 0
        %1529 = vmatprep.subr.bf16.mxu0 0
        %1530 = vmatpush2.bf16.msra.mxu0 0
        %1531 = vmatprep.subr.bf16.mxu0 0
        %1532 = vmatpush2.bf16.msra.mxu0 0
        %1533 = vmatprep.subr.bf16.mxu0 0
        %1534 = vmatpush2.bf16.msra.mxu0 0
        %1535 = vmatprep.subr.bf16.mxu0 0
        %1536 = vmatpush2.bf16.msra.mxu0 0
        %1537 = vmatprep.subr.bf16.mxu0 0
        %1538 = vmatpush2.bf16.msra.mxu0 0
        %1539 = vmatprep.subr.bf16.mxu0 0
        %1540 = vmatpush2.bf16.msra.mxu0 0
        %1541 = vmatprep.mubr.bf16.mxu0 0
        %1542 = vmatmul.mubr.bf16.gmra.mxu0 %v1495
        %v1543 = vpop.f32.mrf.mxu0
        %v1544 = vadd.f32 0.0, %v1543
        %v1545 = vpop.f32.mrf.mxu0
        %v1546 = vpop.f32.mrf.mxu0
        %v1547 = vadd.f32 0.0, %v1546
        %v1548 = vpop.f32.mrf.mxu0
        %1549 = vmatprep.mubr.bf16.mxu0 0
        %1550 = vmatmul.mubr.bf16.gmra.mxu0 %v1498
        %v1551 = vpop.f32.mrf.mxu0
        %v1552 = vadd.f32 0.0, %v1551
        %v1553 = vpop.f32.mrf.mxu0
        %v1554 = vpop.f32.mrf.mxu0
        %v1555 = vadd.f32 0.0, %v1554
        %v1556 = vpop.f32.mrf.mxu0
        %1557 = vmatprep.mubr.bf16.mxu0 0
        %1558 = vmatmul.mubr.bf16.gmra.mxu0 %v1501
        %v1559 = vpop.f32.mrf.mxu0
        %v1560 = vadd.f32 0.0, %v1559
        %v1561 = vpop.f32.mrf.mxu0
        %v1562 = vpop.f32.mrf.mxu0
        %v1563 = vadd.f32 0.0, %v1562
        %v1564 = vpop.f32.mrf.mxu0
        %1565 = vmatprep.mubr.bf16.mxu0 0
        %1566 = vmatmul.mubr.bf16.gmra.mxu0 %v1504
        %v1567 = vpop.f32.mrf.mxu0
        %v1568 = vadd.f32 0.0, %v1567
        %v1569 = vpop.f32.mrf.mxu0
        %v1570 = vpop.f32.mrf.mxu0
        %v1571 = vpop.f32.mrf.mxu0
        %1572 = vdwg.mxu0
        %1573 = vrot.lane.b32.xlu0 %v741, 104
        %v1574 = vpop.permute.xlu0 %1573
        %1575 = vrot.lane.b32.xlu0 %v742, 104
        %v1576 = vpop.permute.xlu0 %1575
        %1577 = vrot.lane.b32.xlu0 %v743, 104
        %v1578 = vpop.permute.xlu0 %1577
        %1579 = vrot.lane.b32.xlu0 %v744, 104
        %v1580 = vpop.permute.xlu0 %1579
        %1581 = vrot.lane.b32.xlu0 %v741, 72
        %v1582 = vpop.permute.xlu0 %1581
        %1583 = vrot.lane.b32.xlu0 %v742, 72
        %v1584 = vpop.permute.xlu0 %1583
        %1585 = vrot.lane.b32.xlu0 %v743, 72
        %v1586 = vpop.permute.xlu0 %1585
        %1587 = vrot.lane.b32.xlu0 %v744, 72
        %v1588 = vpop.permute.xlu0 %1587
        %v1590 = vsel %vm524, %v1574, 0
        %v1593 = vsel %vm524, %v1576, 0
        %v1596 = vsel %vm524, %v1578, 0
        %v1599 = vsel %vm524, %v1580, 0
        %v1602 = vsel %vm524, %v1582, 0
        %v1605 = vsel %vm524, %v1584, 0
        %v1608 = vsel %vm524, %v1586, 0
        %v1611 = vsel %vm524, %v1588, 0
        %1613 = vmatprep.subr.bf16.mxu0 0
        %1614 = vmatpush1.bf16.xpose.msra.mxu0 0
        %1615 = vmatprep.subr.bf16.mxu0 0
        %1616 = vmatpush1.bf16.xpose.msra.mxu0 0
        %1617 = vmatprep.subr.bf16.mxu0 0
        %1618 = vmatpush1.bf16.xpose.msra.mxu0 0
        %1619 = vmatprep.subr.bf16.mxu0 0
        %1620 = vmatpush1.bf16.xpose.msra.mxu0 0
        %1621 = vmatprep.subr.bf16.mxu0 0
        %1622 = vmatpush1.bf16.xpose.msra.mxu0 %v1611
        %1623 = vmatprep.subr.bf16.mxu0 0
        %1624 = vmatpush1.bf16.xpose.msra.mxu0 %v1608
        %1625 = vmatprep.subr.bf16.mxu0 0
        %1626 = vmatpush1.bf16.xpose.msra.mxu0 %v1605
        %1627 = vmatprep.subr.bf16.mxu0 0
        %1628 = vmatpush1.bf16.xpose.msra.mxu0 %v1602
        %1629 = vmatprep.subr.bf16.mxu0 0
        %1630 = vmatpush2.bf16.xpose.msra.mxu0 0
        %1631 = vmatprep.subr.bf16.mxu0 0
        %1632 = vmatpush2.bf16.xpose.msra.mxu0 0
        %1633 = vmatprep.subr.bf16.mxu0 0
        %1634 = vmatpush2.bf16.xpose.msra.mxu0 0
        %1635 = vmatprep.subr.bf16.mxu0 0
        %1636 = vmatpush2.bf16.xpose.msra.mxu0 0
        %1637 = vmatprep.subr.bf16.mxu0 0
        %1638 = vmatpush2.bf16.xpose.msra.mxu0 0
        %1639 = vmatprep.subr.bf16.mxu0 0
        %1640 = vmatpush2.bf16.xpose.msra.mxu0 0
        %1641 = vmatprep.subr.bf16.mxu0 0
        %1642 = vmatpush2.bf16.xpose.msra.mxu0 0
        %1643 = vmatprep.subr.bf16.mxu0 0
        %1644 = vmatpush2.bf16.xpose.msra.mxu0 0
        %1645 = vmatprep.mubr.bf16.mxu0 0
        %1646 = vmatmul.mubr.bf16.gmra.mxu0 %v1590
        %v1647 = vpop.f32.mrf.mxu0
        %v1648 = vadd.f32 %v749, %v1647
        %v1649 = vpop.f32.mrf.mxu0
        %v1650 = vpop.f32.mrf.mxu0
        %v1651 = vadd.f32 %v749, %v1650
        %v1652 = vpop.f32.mrf.mxu0
        %1653 = vmatprep.mubr.bf16.mxu0 0
        %1654 = vmatmul.mubr.bf16.gmra.mxu0 %v1593
        %v1655 = vpop.f32.mrf.mxu0
        %v1656 = vadd.f32 %v749, %v1655
        %v1657 = vpop.f32.mrf.mxu0
        %v1658 = vpop.f32.mrf.mxu0
        %v1659 = vadd.f32 %v749, %v1658
        %v1660 = vpop.f32.mrf.mxu0
        %1661 = vmatprep.mubr.bf16.mxu0 0
        %1662 = vmatmul.mubr.bf16.gmra.mxu0 %v1596
        %v1663 = vpop.f32.mrf.mxu0
        %v1664 = vadd.f32 %v749, %v1663
        %v1665 = vpop.f32.mrf.mxu0
        %v1666 = vpop.f32.mrf.mxu0
        %v1667 = vadd.f32 %v749, %v1666
        %v1668 = vpop.f32.mrf.mxu0
        %1669 = vmatprep.mubr.bf16.mxu0 0
        %1670 = vmatmul.mubr.bf16.gmra.mxu0 %v1599
        %v1671 = vpop.f32.mrf.mxu0
        %v1672 = vadd.f32 %v749, %v1671
        %v1673 = vpop.f32.mrf.mxu0
        %v1674 = vpop.f32.mrf.mxu0
        %v1675 = vpop.f32.mrf.mxu0
        %1676 = vdwg.mxu0
        %v1677 = vsel %vm851, %v1648, -inf
        %1678 = vmax.xlane.f32.xlu0 %v1677
        %v1679 = vpop.xlane.xlu0 %1678
        %v1680 = vsel %vm851, %v1651, -inf
        %1681 = vmax.xlane.f32.xlu0 %v1680
        %v1682 = vpop.xlane.xlu0 %1681
        %v1683 = vsel %vm851, %v1656, -inf
        %1684 = vmax.xlane.f32.xlu0 %v1683
        %v1685 = vpop.xlane.xlu0 %1684
        %v1686 = vsel %vm851, %v1659, -inf
        %1687 = vmax.xlane.f32.xlu0 %v1686
        %v1688 = vpop.xlane.xlu0 %1687
        %v1689 = vsel %vm851, %v1664, -inf
        %1690 = vmax.xlane.f32.xlu0 %v1689
        %v1691 = vpop.xlane.xlu0 %1690
        %v1692 = vsel %vm851, %v1667, -inf
        %1693 = vmax.xlane.f32.xlu0 %v1692
        %v1694 = vpop.xlane.xlu0 %1693
        %v1695 = vsel %vm851, %v1672, -inf
        %1696 = vmax.xlane.f32.xlu0 %v1695
        %v1697 = vpop.xlane.xlu0 %1696
        %v1698 = vsub.f32 %v1648, %v1679
        %v1699 = vsub.f32 %v1651, %v1682
        %v1700 = vsub.f32 %v1656, %v1685
        %v1701 = vsub.f32 %v1659, %v1688
        %v1702 = vsub.f32 %v1664, %v1691
        %v1703 = vsub.f32 %v1667, %v1694
        %v1704 = vsub.f32 %v1672, %v1697
        %v1705 = vmul.f32 %v1698, 1.442695
        %v1706 = vpow.pop %v1705
        %v1707 = vmul.f32 %v1699, 1.442695
        %v1708 = vpow.pop %v1707
        %v1709 = vmul.f32 %v1700, 1.442695
        %v1710 = vpow.pop %v1709
        %v1711 = vmul.f32 %v1701, 1.442695
        %v1712 = vpow.pop %v1711
        %v1713 = vmul.f32 %v1702, 1.442695
        %v1714 = vpow.pop %v1713
        %v1715 = vmul.f32 %v1703, 1.442695
        %v1716 = vpow.pop %v1715
        %v1717 = vmul.f32 %v1704, 1.442695
        %v1718 = vpow.pop %v1717
        %v1719 = vsel %vm851, %v1706, 0.0
        %1720 = vadd.xlane.f32.xlu0 %v1719
        %v1721 = vpop.xlane.xlu0 %1720
        %v1722 = vsel %vm851, %v1708, 0.0
        %1723 = vadd.xlane.f32.xlu0 %v1722
        %v1724 = vpop.xlane.xlu0 %1723
        %v1725 = vsel %vm851, %v1710, 0.0
        %1726 = vadd.xlane.f32.xlu0 %v1725
        %v1727 = vpop.xlane.xlu0 %1726
        %v1728 = vsel %vm851, %v1712, 0.0
        %1729 = vadd.xlane.f32.xlu0 %v1728
        %v1730 = vpop.xlane.xlu0 %1729
        %v1731 = vsel %vm851, %v1714, 0.0
        %1732 = vadd.xlane.f32.xlu0 %v1731
        %v1733 = vpop.xlane.xlu0 %1732
        %v1734 = vsel %vm851, %v1716, 0.0
        %1735 = vadd.xlane.f32.xlu0 %v1734
        %v1736 = vpop.xlane.xlu0 %1735
        %v1737 = vsel %vm851, %v1718, 0.0
        %1738 = vadd.xlane.f32.xlu0 %v1737
        %v1739 = vpop.xlane.xlu0 %1738
        %v1740 = vrcp.pop %v1721
        %v1741 = vrcp.pop %v1724
        %v1742 = vrcp.pop %v1727
        %v1743 = vrcp.pop %v1730
        %v1744 = vrcp.pop %v1733
        %v1745 = vrcp.pop %v1736
        %v1746 = vrcp.pop %v1739
        %v1747 = vmul.f32 %v1706, %v1740
        %v1748 = vmul.f32 %v1708, %v1741
        %v1749 = vmul.f32 %v1710, %v1742
        %v1750 = vmul.f32 %v1712, %v1743
        %v1751 = vmul.f32 %v1714, %v1744
        %v1752 = vmul.f32 %v1716, %v1745
        %v1753 = vmul.f32 %v1718, %v1746
        %v1754 = vpack.c.bf16 %v1748, %v1747
        %v1755 = vpack.c.bf16 %v1750, %v1749
        %v1756 = vpack.c.bf16 %v1752, %v1751
        %v1757 = vpack.c.bf16 %v1753, %v1753
        %1758 = vrot.lane.b32.xlu0 %v741, 40
        %v1759 = vpop.permute.xlu0 %1758
        %1760 = vrot.lane.b32.xlu0 %v742, 40
        %v1761 = vpop.permute.xlu0 %1760
        %1762 = vrot.lane.b32.xlu0 %v743, 40
        %v1763 = vpop.permute.xlu0 %1762
        %1764 = vrot.lane.b32.xlu0 %v744, 40
        %v1765 = vpop.permute.xlu0 %1764
        %v1770 = vsel %vm851, %v1754, 0
        %v1773 = vsel %vm851, %v1755, 0
        %v1776 = vsel %vm851, %v1756, 0
        %v1779 = vsel %vm851, %v1757, 0
        %v1782 = vsel %vm537, %v1765, 0
        %1784 = vmatprep.subr.bf16.mxu0 0
        %1785 = vmatpush1.bf16.msra.mxu0 0
        %1786 = vmatprep.subr.bf16.mxu0 0
        %1787 = vmatpush1.bf16.msra.mxu0 0
        %1788 = vmatprep.subr.bf16.mxu0 0
        %1789 = vmatpush1.bf16.msra.mxu0 0
        %1790 = vmatprep.subr.bf16.mxu0 0
        %1791 = vmatpush1.bf16.msra.mxu0 0
        %1792 = vmatprep.subr.bf16.mxu0 0
        %1793 = vmatpush1.bf16.msra.mxu0 %v1782
        %1794 = vmatprep.subr.bf16.mxu0 0
        %1795 = vmatpush1.bf16.msra.mxu0 %v1763
        %1796 = vmatprep.subr.bf16.mxu0 0
        %1797 = vmatpush1.bf16.msra.mxu0 %v1761
        %1798 = vmatprep.subr.bf16.mxu0 0
        %1799 = vmatpush1.bf16.msra.mxu0 %v1759
        %1800 = vmatprep.subr.bf16.mxu0 0
        %1801 = vmatpush2.bf16.msra.mxu0 0
        %1802 = vmatprep.subr.bf16.mxu0 0
        %1803 = vmatpush2.bf16.msra.mxu0 0
        %1804 = vmatprep.subr.bf16.mxu0 0
        %1805 = vmatpush2.bf16.msra.mxu0 0
        %1806 = vmatprep.subr.bf16.mxu0 0
        %1807 = vmatpush2.bf16.msra.mxu0 0
        %1808 = vmatprep.subr.bf16.mxu0 0
        %1809 = vmatpush2.bf16.msra.mxu0 0
        %1810 = vmatprep.subr.bf16.mxu0 0
        %1811 = vmatpush2.bf16.msra.mxu0 0
        %1812 = vmatprep.subr.bf16.mxu0 0
        %1813 = vmatpush2.bf16.msra.mxu0 0
        %1814 = vmatprep.subr.bf16.mxu0 0
        %1815 = vmatpush2.bf16.msra.mxu0 0
        %1816 = vmatprep.mubr.bf16.mxu0 0
        %1817 = vmatmul.mubr.bf16.gmra.mxu0 %v1770
        %v1818 = vpop.f32.mrf.mxu0
        %v1819 = vadd.f32 0.0, %v1818
        %v1820 = vpop.f32.mrf.mxu0
        %v1821 = vpop.f32.mrf.mxu0
        %v1822 = vadd.f32 0.0, %v1821
        %v1823 = vpop.f32.mrf.mxu0
        %1824 = vmatprep.mubr.bf16.mxu0 0
        %1825 = vmatmul.mubr.bf16.gmra.mxu0 %v1773
        %v1826 = vpop.f32.mrf.mxu0
        %v1827 = vadd.f32 0.0, %v1826
        %v1828 = vpop.f32.mrf.mxu0
        %v1829 = vpop.f32.mrf.mxu0
        %v1830 = vadd.f32 0.0, %v1829
        %v1831 = vpop.f32.mrf.mxu0
        %1832 = vmatprep.mubr.bf16.mxu0 0
        %1833 = vmatmul.mubr.bf16.gmra.mxu0 %v1776
        %v1834 = vpop.f32.mrf.mxu0
        %v1835 = vadd.f32 0.0, %v1834
        %v1836 = vpop.f32.mrf.mxu0
        %v1837 = vpop.f32.mrf.mxu0
        %v1838 = vadd.f32 0.0, %v1837
        %v1839 = vpop.f32.mrf.mxu0
        %1840 = vmatprep.mubr.bf16.mxu0 0
        %1841 = vmatmul.mubr.bf16.gmra.mxu0 %v1779
        %v1842 = vpop.f32.mrf.mxu0
        %v1843 = vadd.f32 0.0, %v1842
        %v1844 = vpop.f32.mrf.mxu0
        %v1845 = vpop.f32.mrf.mxu0
        %v1846 = vpop.f32.mrf.mxu0
        %1847 = vdwg.mxu0
        %1855 = vrot.lane.b32.xlu0 %v1269, 8
        %v1856 = vpop.permute.xlu0 %1855
        %1857 = vrot.lane.b32.xlu0 %v1272, 8
        %v1858 = vpop.permute.xlu0 %1857
        %1859 = vrot.lane.b32.xlu0 %v1277, 8
        %v1860 = vpop.permute.xlu0 %1859
        %1861 = vrot.lane.b32.xlu0 %v1280, 8
        %v1862 = vpop.permute.xlu0 %1861
        %1863 = vrot.lane.b32.xlu0 %v1285, 8
        %v1864 = vpop.permute.xlu0 %1863
        %1865 = vrot.lane.b32.xlu0 %v1288, 8
        %v1866 = vpop.permute.xlu0 %1865
        %1867 = vrot.lane.b32.xlu0 %v1293, 8
        %v1868 = vpop.permute.xlu0 %1867
        %1883 = vrot.lane.b32.xlu0 %v1544, 16
        %v1884 = vpop.permute.xlu0 %1883
        %1885 = vrot.lane.b32.xlu0 %v1547, 16
        %v1886 = vpop.permute.xlu0 %1885
        %1887 = vrot.lane.b32.xlu0 %v1552, 16
        %v1888 = vpop.permute.xlu0 %1887
        %1889 = vrot.lane.b32.xlu0 %v1555, 16
        %v1890 = vpop.permute.xlu0 %1889
        %1891 = vrot.lane.b32.xlu0 %v1560, 16
        %v1892 = vpop.permute.xlu0 %1891
        %1893 = vrot.lane.b32.xlu0 %v1563, 16
        %v1894 = vpop.permute.xlu0 %1893
        %1895 = vrot.lane.b32.xlu0 %v1568, 16
        %v1896 = vpop.permute.xlu0 %1895
        %1911 = vrot.lane.b32.xlu0 %v1819, 24
        %v1912 = vpop.permute.xlu0 %1911
        %1913 = vrot.lane.b32.xlu0 %v1822, 24
        %v1914 = vpop.permute.xlu0 %1913
        %1915 = vrot.lane.b32.xlu0 %v1827, 24
        %v1916 = vpop.permute.xlu0 %1915
        %1917 = vrot.lane.b32.xlu0 %v1830, 24
        %v1918 = vpop.permute.xlu0 %1917
        %1919 = vrot.lane.b32.xlu0 %v1835, 24
        %v1920 = vpop.permute.xlu0 %1919
        %1921 = vrot.lane.b32.xlu0 %v1838, 24
        %v1922 = vpop.permute.xlu0 %1921
        %1923 = vrot.lane.b32.xlu0 %v1843, 24
        %v1924 = vpop.permute.xlu0 %1923
        %v1932 = vsel %vm524, %v994, %v1856
        %v1933 = vsel %vm524, %v997, %v1858
        %v1934 = vsel %vm524, %v1002, %v1860
        %v1935 = vsel %vm524, %v1005, %v1862
        %v1936 = vsel %vm524, %v1010, %v1864
        %v1937 = vsel %vm524, %v1013, %v1866
        %v1938 = vsel %vm524, %v1018, %v1868
        %vm1939 = vcmask 130048
        %v1940 = vsel %vm1939, %v1932, %v1884
        %v1941 = vsel %vm1939, %v1933, %v1886
        %v1942 = vsel %vm1939, %v1934, %v1888
        %v1943 = vsel %vm1939, %v1935, %v1890
        %v1944 = vsel %vm1939, %v1936, %v1892
        %v1945 = vsel %vm1939, %v1937, %v1894
        %v1946 = vsel %vm1939, %v1938, %v1896
        %vm1947 = vcmask 195584
        %v1948 = vsel %vm1947, %v1940, %v1912
        %v1949 = vsel %vm1947, %v1941, %v1914
        %v1950 = vsel %vm1947, %v1942, %v1916
        %v1951 = vsel %vm1947, %v1943, %v1918
        %v1952 = vsel %vm1947, %v1944, %v1920
        %v1953 = vsel %vm1947, %v1945, %v1922
        %v1954 = vsel %vm1947, %v1946, %v1924
        %v1955 = vpack.c.bf16 %v1949, %v1948
        %v1956 = vpack.c.bf16 %v1951, %v1950
        %v1957 = vpack.c.bf16 %v1953, %v1952
        %v1958 = vpack.c.bf16 %v1954, %v1954
        %v1959 = vlaneseq
        %v1960 = vshrl.u32 %v1959, 7
        %v1961 = vsub.s32 0, %v1960
        %v1962 = vrot.slane %v628, %v1961
        %v1967 = vunpack.c.l.b16 %v624
        %v1968 = vunpack.c.l.b16 %v625
        %v1969 = vunpack.c.l.b16 %v626
        %v1970 = vunpack.c.l.b16 %v627
        %v1971 = vpack.c.b16 %v1968, %v1967
        %v1972 = vpack.c.b16 %v1970, %v1969
        %v1976 = vsel %vm664, %v1955, 0
        %v1979 = vsel %vm664, %v1956, 0
        %v1982 = vsel %vm664, %v1957, 0
        %v1985 = vsel %vm664, %v1958, 0
        %1987 = vmatprep.subr.bf16.mxu0 0
        %1988 = vmatpush1.bf16.msra.mxu0 0
        %1989 = vmatprep.subr.bf16.mxu0 0
        %1990 = vmatpush1.bf16.msra.mxu0 0
        %1991 = vmatprep.subr.bf16.mxu0 0
        %1992 = vmatpush1.bf16.msra.mxu0 0
        %1993 = vmatprep.subr.bf16.mxu0 0
        %1994 = vmatpush1.bf16.msra.mxu0 0
        %1995 = vmatprep.subr.bf16.mxu0 0
        %1996 = vmatpush1.bf16.msra.mxu0 0
        %1997 = vmatprep.subr.bf16.mxu0 0
        %1998 = vmatpush1.bf16.msra.mxu0 0
        %1999 = vmatprep.subr.bf16.mxu0 0
        %2000 = vmatpush1.bf16.msra.mxu0 %v1972
        %2001 = vmatprep.subr.bf16.mxu0 0
        %2002 = vmatpush1.bf16.msra.mxu0 %v1971
        %2003 = vmatprep.subr.bf16.mxu0 0
        %2004 = vmatpush2.bf16.msra.mxu0 0
        %2005 = vmatprep.subr.bf16.mxu0 0
        %2006 = vmatpush2.bf16.msra.mxu0 0
        %2007 = vmatprep.subr.bf16.mxu0 0
        %2008 = vmatpush2.bf16.msra.mxu0 0
        %2009 = vmatprep.subr.bf16.mxu0 0
        %2010 = vmatpush2.bf16.msra.mxu0 0
        %2011 = vmatprep.subr.bf16.mxu0 0
        %2012 = vmatpush2.bf16.msra.mxu0 0
        %2013 = vmatprep.subr.bf16.mxu0 0
        %2014 = vmatpush2.bf16.msra.mxu0 0
        %2015 = vmatprep.subr.bf16.mxu0 0
        %2016 = vmatpush2.bf16.msra.mxu0 0
        %2017 = vmatprep.subr.bf16.mxu0 0
        %2018 = vmatpush2.bf16.msra.mxu0 0
        %2019 = vmatprep.mubr.bf16.mxu0 0
        %2020 = vmatmul.mubr.bf16.gmra.mxu0 %v1976
        %v2021 = vpop.f32.mrf.mxu0
        %v2022 = vadd.f32 %v1962, %v2021
        %v2023 = vpop.f32.mrf.mxu0
        %v2024 = vpop.f32.mrf.mxu0
        %v2025 = vadd.f32 %v1962, %v2024
        %v2026 = vpop.f32.mrf.mxu0
        %2027 = vmatprep.mubr.bf16.mxu0 0
        %2028 = vmatmul.mubr.bf16.gmra.mxu0 %v1979
        %v2029 = vpop.f32.mrf.mxu0
        %v2030 = vadd.f32 %v1962, %v2029
        %v2031 = vpop.f32.mrf.mxu0
        %v2032 = vpop.f32.mrf.mxu0
        %v2033 = vadd.f32 %v1962, %v2032
        %v2034 = vpop.f32.mrf.mxu0
        %2035 = vmatprep.mubr.bf16.mxu0 0
        %2036 = vmatmul.mubr.bf16.gmra.mxu0 %v1982
        %v2037 = vpop.f32.mrf.mxu0
        %v2038 = vadd.f32 %v1962, %v2037
        %v2039 = vpop.f32.mrf.mxu0
        %v2040 = vpop.f32.mrf.mxu0
        %v2041 = vadd.f32 %v1962, %v2040
        %v2042 = vpop.f32.mrf.mxu0
        %2043 = vmatprep.mubr.bf16.mxu0 0
        %2044 = vmatmul.mubr.bf16.gmra.mxu0 %v1985
        %v2045 = vpop.f32.mrf.mxu0
        %v2046 = vadd.f32 %v1962, %v2045
        %v2047 = vpop.f32.mrf.mxu0
        %v2048 = vpop.f32.mrf.mxu0
        %v2049 = vpop.f32.mrf.mxu0
        %2050 = vdwg.mxu0
        %v2051 = vadd.f32 %v612, %v2022
        %v2052 = vadd.f32 %v613, %v2025
        %v2053 = vadd.f32 %v614, %v2030
        %v2054 = vadd.f32 %v615, %v2033
        %v2055 = vadd.f32 %v616, %v2038
        %v2056 = vadd.f32 %v617, %v2041
        %v2057 = vadd.f32 %v618, %v2046
        %v2058 = vsel %vm664, %v2051, 0.0
        %2059 = vadd.xlane.f32.xlu0 %v2058
        %v2060 = vpop.xlane.xlu0 %2059
        %v2061 = vsel %vm664, %v2052, 0.0
        %2062 = vadd.xlane.f32.xlu0 %v2061
        %v2063 = vpop.xlane.xlu0 %2062
        %v2064 = vsel %vm664, %v2053, 0.0
        %2065 = vadd.xlane.f32.xlu0 %v2064
        %v2066 = vpop.xlane.xlu0 %2065
        %v2067 = vsel %vm664, %v2054, 0.0
        %2068 = vadd.xlane.f32.xlu0 %v2067
        %v2069 = vpop.xlane.xlu0 %2068
        %v2070 = vsel %vm664, %v2055, 0.0
        %2071 = vadd.xlane.f32.xlu0 %v2070
        %v2072 = vpop.xlane.xlu0 %2071
        %v2073 = vsel %vm664, %v2056, 0.0
        %2074 = vadd.xlane.f32.xlu0 %v2073
        %v2075 = vpop.xlane.xlu0 %2074
        %v2076 = vsel %vm664, %v2057, 0.0
        %2077 = vadd.xlane.f32.xlu0 %v2076
        %v2078 = vpop.xlane.xlu0 %2077
        %v2079 = vrcp.pop 32.0
        %v2080 = vmul.f32 %v2060, %v2079
        %v2081 = vmul.f32 %v2063, %v2079
        %v2082 = vmul.f32 %v2066, %v2079
        %v2083 = vmul.f32 %v2069, %v2079
        %v2084 = vmul.f32 %v2072, %v2079
        %v2085 = vmul.f32 %v2075, %v2079
        %v2086 = vmul.f32 %v2078, %v2079
        %v2087 = vsub.f32 %v2051, %v2080
        %v2088 = vsub.f32 %v2052, %v2081
        %v2089 = vsub.f32 %v2053, %v2082
        %v2090 = vsub.f32 %v2054, %v2083
        %v2091 = vsub.f32 %v2055, %v2084
        %v2092 = vsub.f32 %v2056, %v2085
        %v2093 = vsub.f32 %v2057, %v2086
        %v2094 = vmul.f32 %v2087, %v2087
        %v2095 = vmul.f32 %v2088, %v2088
        %v2096 = vmul.f32 %v2089, %v2089
        %v2097 = vmul.f32 %v2090, %v2090
        %v2098 = vmul.f32 %v2091, %v2091
        %v2099 = vmul.f32 %v2092, %v2092
        %v2100 = vmul.f32 %v2093, %v2093
        %v2101 = vsel %vm664, %v2094, 0.0
        %2102 = vadd.xlane.f32.xlu0 %v2101
        %v2103 = vpop.xlane.xlu0 %2102
        %v2104 = vsel %vm664, %v2095, 0.0
        %2105 = vadd.xlane.f32.xlu0 %v2104
        %v2106 = vpop.xlane.xlu0 %2105
        %v2107 = vsel %vm664, %v2096, 0.0
        %2108 = vadd.xlane.f32.xlu0 %v2107
        %v2109 = vpop.xlane.xlu0 %2108
        %v2110 = vsel %vm664, %v2097, 0.0
        %2111 = vadd.xlane.f32.xlu0 %v2110
        %v2112 = vpop.xlane.xlu0 %2111
        %v2113 = vsel %vm664, %v2098, 0.0
        %2114 = vadd.xlane.f32.xlu0 %v2113
        %v2115 = vpop.xlane.xlu0 %2114
        %v2116 = vsel %vm664, %v2099, 0.0
        %2117 = vadd.xlane.f32.xlu0 %v2116
        %v2118 = vpop.xlane.xlu0 %2117
        %v2119 = vsel %vm664, %v2100, 0.0
        %2120 = vadd.xlane.f32.xlu0 %v2119
        %v2121 = vpop.xlane.xlu0 %2120
        %v2122 = vmul.f32 %v2103, %v2079
        %v2123 = vmul.f32 %v2106, %v2079
        %v2124 = vmul.f32 %v2109, %v2079
        %v2125 = vmul.f32 %v2112, %v2079
        %v2126 = vmul.f32 %v2115, %v2079
        %v2127 = vmul.f32 %v2118, %v2079
        %v2128 = vmul.f32 %v2121, %v2079
        %v2129 = vadd.f32 %v2122, 1e-05
        %v2130 = vadd.f32 %v2123, 1e-05
        %v2131 = vadd.f32 %v2124, 1e-05
        %v2132 = vadd.f32 %v2125, 1e-05
        %v2133 = vadd.f32 %v2126, 1e-05
        %v2134 = vadd.f32 %v2127, 1e-05
        %v2135 = vadd.f32 %v2128, 1e-05
        %v2136 = vrsqrt.pop %v2129
        %v2137 = vrsqrt.pop %v2130
        %v2138 = vrsqrt.pop %v2131
        %v2139 = vrsqrt.pop %v2132
        %v2140 = vrsqrt.pop %v2133
        %v2141 = vrsqrt.pop %v2134
        %v2142 = vrsqrt.pop %v2135
        %v2143 = vmul.f32 %v2087, %v2136
        %v2144 = vmul.f32 %v2088, %v2137
        %v2145 = vmul.f32 %v2089, %v2138
        %v2146 = vmul.f32 %v2090, %v2139
        %v2147 = vmul.f32 %v2091, %v2140
        %v2148 = vmul.f32 %v2092, %v2141
        %v2149 = vmul.f32 %v2093, %v2142
        %v2150 = vlaneseq
        %v2151 = vshrl.u32 %v2150, 7
        %v2152 = vsub.s32 1, %v2151
        %v2153 = vrot.slane %v628, %v2152
        %v2154 = vmul.f32 %v2143, %v2153
        %v2155 = vmul.f32 %v2144, %v2153
        %v2156 = vmul.f32 %v2145, %v2153
        %v2157 = vmul.f32 %v2146, %v2153
        %v2158 = vmul.f32 %v2147, %v2153
        %v2159 = vmul.f32 %v2148, %v2153
        %v2160 = vmul.f32 %v2149, %v2153
        %v2161 = vlaneseq
        %v2162 = vshrl.u32 %v2161, 7
        %v2163 = vsub.s32 2, %v2162
        %v2164 = vrot.slane %v628, %v2163
        %v2165 = vadd.f32 %v2154, %v2164
        %v2166 = vadd.f32 %v2155, %v2164
        %v2167 = vadd.f32 %v2156, %v2164
        %v2168 = vadd.f32 %v2157, %v2164
        %v2169 = vadd.f32 %v2158, %v2164
        %v2170 = vadd.f32 %v2159, %v2164
        %v2171 = vadd.f32 %v2160, %v2164
        %v2172 = vpack.c.bf16 %v2166, %v2165
        %v2173 = vpack.c.bf16 %v2168, %v2167
        %v2174 = vpack.c.bf16 %v2170, %v2169
        %v2175 = vpack.c.bf16 %v2171, %v2171
        %v2177 = vlaneseq
        %v2178 = vshrl.u32 %v2177, 7
        %v2179 = vsub.s32 0, %v2178
        %v2180 = vrot.slane %v633, %v2179
        %v2186 = vunpack.c.l.b16 %v629
        %v2187 = vunpack.c.l.b16 %v630
        %v2188 = vunpack.c.l.b16 %v631
        %v2189 = vunpack.c.l.b16 %v632
        %v2190 = vpack.c.b16 %v2187, %v2186
        %v2191 = vpack.c.b16 %v2189, %v2188
        %v2195 = vsel %vm664, %v2172, 0
        %v2198 = vsel %vm664, %v2173, 0
        %v2201 = vsel %vm664, %v2174, 0
        %v2204 = vsel %vm664, %v2175, 0
        %2206 = vmatprep.subr.bf16.mxu0 0
        %2207 = vmatpush1.bf16.msra.mxu0 0
        %2208 = vmatprep.subr.bf16.mxu0 0
        %2209 = vmatpush1.bf16.msra.mxu0 0
        %2210 = vmatprep.subr.bf16.mxu0 0
        %2211 = vmatpush1.bf16.msra.mxu0 0
        %2212 = vmatprep.subr.bf16.mxu0 0
        %2213 = vmatpush1.bf16.msra.mxu0 0
        %2214 = vmatprep.subr.bf16.mxu0 0
        %2215 = vmatpush1.bf16.msra.mxu0 0
        %2216 = vmatprep.subr.bf16.mxu0 0
        %2217 = vmatpush1.bf16.msra.mxu0 0
        %2218 = vmatprep.subr.bf16.mxu0 0
        %2219 = vmatpush1.bf16.msra.mxu0 %v2191
        %2220 = vmatprep.subr.bf16.mxu0 0
        %2221 = vmatpush1.bf16.msra.mxu0 %v2190
        %2222 = vmatprep.subr.bf16.mxu0 0
        %2223 = vmatpush2.bf16.msra.mxu0 0
        %2224 = vmatprep.subr.bf16.mxu0 0
        %2225 = vmatpush2.bf16.msra.mxu0 0
        %2226 = vmatprep.subr.bf16.mxu0 0
        %2227 = vmatpush2.bf16.msra.mxu0 0
        %2228 = vmatprep.subr.bf16.mxu0 0
        %2229 = vmatpush2.bf16.msra.mxu0 0
        %2230 = vmatprep.subr.bf16.mxu0 0
        %2231 = vmatpush2.bf16.msra.mxu0 0
        %2232 = vmatprep.subr.bf16.mxu0 0
        %2233 = vmatpush2.bf16.msra.mxu0 0
        %2234 = vmatprep.subr.bf16.mxu0 0
        %2235 = vmatpush2.bf16.msra.mxu0 0
        %2236 = vmatprep.subr.bf16.mxu0 0
        %2237 = vmatpush2.bf16.msra.mxu0 0
        %2238 = vmatprep.mubr.bf16.mxu0 0
        %2239 = vmatmul.mubr.bf16.gmra.mxu0 %v2195
        %v2240 = vpop.f32.mrf.mxu0
        %v2241 = vadd.f32 %v2180, %v2240
        %v2242 = vpop.f32.mrf.mxu0
        %v2243 = vpop.f32.mrf.mxu0
        %v2244 = vadd.f32 %v2180, %v2243
        %v2245 = vpop.f32.mrf.mxu0
        %2246 = vmatprep.mubr.bf16.mxu0 0
        %2247 = vmatmul.mubr.bf16.gmra.mxu0 %v2198
        %v2248 = vpop.f32.mrf.mxu0
        %v2249 = vadd.f32 %v2180, %v2248
        %v2250 = vpop.f32.mrf.mxu0
        %v2251 = vpop.f32.mrf.mxu0
        %v2252 = vadd.f32 %v2180, %v2251
        %v2253 = vpop.f32.mrf.mxu0
        %2254 = vmatprep.mubr.bf16.mxu0 0
        %2255 = vmatmul.mubr.bf16.gmra.mxu0 %v2201
        %v2256 = vpop.f32.mrf.mxu0
        %v2257 = vadd.f32 %v2180, %v2256
        %v2258 = vpop.f32.mrf.mxu0
        %v2259 = vpop.f32.mrf.mxu0
        %v2260 = vadd.f32 %v2180, %v2259
        %v2261 = vpop.f32.mrf.mxu0
        %2262 = vmatprep.mubr.bf16.mxu0 0
        %2263 = vmatmul.mubr.bf16.gmra.mxu0 %v2204
        %v2264 = vpop.f32.mrf.mxu0
        %v2265 = vadd.f32 %v2180, %v2264
        %v2266 = vpop.f32.mrf.mxu0
        %v2267 = vpop.f32.mrf.mxu0
        %v2268 = vpop.f32.mrf.mxu0
        %2269 = vdwg.mxu0
        %v2270 = vmax.f32 %v2241, 0.0
        %v2271 = vmax.f32 %v2244, 0.0
        %v2272 = vmax.f32 %v2249, 0.0
        %v2273 = vmax.f32 %v2252, 0.0
        %v2274 = vmax.f32 %v2257, 0.0
        %v2275 = vmax.f32 %v2260, 0.0
        %v2276 = vmax.f32 %v2265, 0.0
        %v2277 = vpack.c.bf16 %v2271, %v2270
        %v2278 = vpack.c.bf16 %v2273, %v2272
        %v2279 = vpack.c.bf16 %v2275, %v2274
        %v2280 = vpack.c.bf16 %v2276, %v2276
        %v2281 = vlaneseq
        %v2282 = vshrl.u32 %v2281, 7
        %v2283 = vsub.s32 3, %v2282
        %v2284 = vrot.slane %v628, %v2283
        %v2293 = vunpack.c.l.b16 %v634
        %v2294 = vunpack.c.l.b16 %v635
        %v2295 = vunpack.c.l.b16 %v636
        %v2296 = vunpack.c.l.b16 %v637
        %v2297 = vunpack.c.l.b16 %v638
        %v2298 = vunpack.c.l.b16 %v639
        %v2299 = vunpack.c.l.b16 %v640
        %v2300 = vunpack.c.l.b16 %v641
        %v2301 = vpack.c.b16 %v2294, %v2293
        %v2302 = vpack.c.b16 %v2296, %v2295
        %v2303 = vpack.c.b16 %v2298, %v2297
        %v2304 = vpack.c.b16 %v2300, %v2299
        %vm2309 = vcmask 523264
        %v2311 = vsel %vm2309, %v2277, 0
        %v2314 = vsel %vm2309, %v2278, 0
        %v2317 = vsel %vm2309, %v2279, 0
        %v2320 = vsel %vm2309, %v2280, 0
        %2322 = vmatprep.subr.bf16.mxu0 0
        %2323 = vmatpush1.bf16.msra.mxu0 0
        %2324 = vmatprep.subr.bf16.mxu0 0
        %2325 = vmatpush1.bf16.msra.mxu0 0
        %2326 = vmatprep.subr.bf16.mxu0 0
        %2327 = vmatpush1.bf16.msra.mxu0 0
        %2328 = vmatprep.subr.bf16.mxu0 0
        %2329 = vmatpush1.bf16.msra.mxu0 0
        %2330 = vmatprep.subr.bf16.mxu0 0
        %2331 = vmatpush1.bf16.msra.mxu0 %v2304
        %2332 = vmatprep.subr.bf16.mxu0 0
        %2333 = vmatpush1.bf16.msra.mxu0 %v2303
        %2334 = vmatprep.subr.bf16.mxu0 0
        %2335 = vmatpush1.bf16.msra.mxu0 %v2302
        %2336 = vmatprep.subr.bf16.mxu0 0
        %2337 = vmatpush1.bf16.msra.mxu0 %v2301
        %2338 = vmatprep.subr.bf16.mxu0 0
        %2339 = vmatpush2.bf16.msra.mxu0 0
        %2340 = vmatprep.subr.bf16.mxu0 0
        %2341 = vmatpush2.bf16.msra.mxu0 0
        %2342 = vmatprep.subr.bf16.mxu0 0
        %2343 = vmatpush2.bf16.msra.mxu0 0
        %2344 = vmatprep.subr.bf16.mxu0 0
        %2345 = vmatpush2.bf16.msra.mxu0 0
        %2346 = vmatprep.subr.bf16.mxu0 0
        %2347 = vmatpush2.bf16.msra.mxu0 0
        %2348 = vmatprep.subr.bf16.mxu0 0
        %2349 = vmatpush2.bf16.msra.mxu0 0
        %2350 = vmatprep.subr.bf16.mxu0 0
        %2351 = vmatpush2.bf16.msra.mxu0 0
        %2352 = vmatprep.subr.bf16.mxu0 0
        %2353 = vmatpush2.bf16.msra.mxu0 0
        %2354 = vmatprep.mubr.bf16.mxu0 0
        %2355 = vmatmul.mubr.bf16.gmra.mxu0 %v2311
        %v2356 = vpop.f32.mrf.mxu0
        %v2357 = vadd.f32 %v2284, %v2356
        %v2358 = vpop.f32.mrf.mxu0
        %v2359 = vpop.f32.mrf.mxu0
        %v2360 = vadd.f32 %v2284, %v2359
        %v2361 = vpop.f32.mrf.mxu0
        %2362 = vmatprep.mubr.bf16.mxu0 0
        %2363 = vmatmul.mubr.bf16.gmra.mxu0 %v2314
        %v2364 = vpop.f32.mrf.mxu0
        %v2365 = vadd.f32 %v2284, %v2364
        %v2366 = vpop.f32.mrf.mxu0
        %v2367 = vpop.f32.mrf.mxu0
        %v2368 = vadd.f32 %v2284, %v2367
        %v2369 = vpop.f32.mrf.mxu0
        %2370 = vmatprep.mubr.bf16.mxu0 0
        %2371 = vmatmul.mubr.bf16.gmra.mxu0 %v2317
        %v2372 = vpop.f32.mrf.mxu0
        %v2373 = vadd.f32 %v2284, %v2372
        %v2374 = vpop.f32.mrf.mxu0
        %v2375 = vpop.f32.mrf.mxu0
        %v2376 = vadd.f32 %v2284, %v2375
        %v2377 = vpop.f32.mrf.mxu0
        %2378 = vmatprep.mubr.bf16.mxu0 0
        %2379 = vmatmul.mubr.bf16.gmra.mxu0 %v2320
        %v2380 = vpop.f32.mrf.mxu0
        %v2381 = vadd.f32 %v2284, %v2380
        %v2382 = vpop.f32.mrf.mxu0
        %v2383 = vpop.f32.mrf.mxu0
        %v2384 = vpop.f32.mrf.mxu0
        %2385 = vdwg.mxu0
        %v2386 = vadd.f32 %v2165, %v2357
        %v2387 = vadd.f32 %v2166, %v2360
        %v2388 = vadd.f32 %v2167, %v2365
        %v2389 = vadd.f32 %v2168, %v2368
        %v2390 = vadd.f32 %v2169, %v2373
        %v2391 = vadd.f32 %v2170, %v2376
        %v2392 = vadd.f32 %v2171, %v2381
        %v2393 = vsel %vm664, %v2386, 0.0
        %2394 = vadd.xlane.f32.xlu0 %v2393
        %v2395 = vpop.xlane.xlu0 %2394
        %v2396 = vsel %vm664, %v2387, 0.0
        %2397 = vadd.xlane.f32.xlu0 %v2396
        %v2398 = vpop.xlane.xlu0 %2397
        %v2399 = vsel %vm664, %v2388, 0.0
        %2400 = vadd.xlane.f32.xlu0 %v2399
        %v2401 = vpop.xlane.xlu0 %2400
        %v2402 = vsel %vm664, %v2389, 0.0
        %2403 = vadd.xlane.f32.xlu0 %v2402
        %v2404 = vpop.xlane.xlu0 %2403
        %v2405 = vsel %vm664, %v2390, 0.0
        %2406 = vadd.xlane.f32.xlu0 %v2405
        %v2407 = vpop.xlane.xlu0 %2406
        %v2408 = vsel %vm664, %v2391, 0.0
        %2409 = vadd.xlane.f32.xlu0 %v2408
        %v2410 = vpop.xlane.xlu0 %2409
        %v2411 = vsel %vm664, %v2392, 0.0
        %2412 = vadd.xlane.f32.xlu0 %v2411
        %v2413 = vpop.xlane.xlu0 %2412
        %v2414 = vmul.f32 %v2395, %v2079
        %v2415 = vmul.f32 %v2398, %v2079
        %v2416 = vmul.f32 %v2401, %v2079
        %v2417 = vmul.f32 %v2404, %v2079
        %v2418 = vmul.f32 %v2407, %v2079
        %v2419 = vmul.f32 %v2410, %v2079
        %v2420 = vmul.f32 %v2413, %v2079
        %v2421 = vsub.f32 %v2386, %v2414
        %v2422 = vsub.f32 %v2387, %v2415
        %v2423 = vsub.f32 %v2388, %v2416
        %v2424 = vsub.f32 %v2389, %v2417
        %v2425 = vsub.f32 %v2390, %v2418
        %v2426 = vsub.f32 %v2391, %v2419
        %v2427 = vsub.f32 %v2392, %v2420
        %v2428 = vmul.f32 %v2421, %v2421
        %v2429 = vmul.f32 %v2422, %v2422
        %v2430 = vmul.f32 %v2423, %v2423
        %v2431 = vmul.f32 %v2424, %v2424
        %v2432 = vmul.f32 %v2425, %v2425
        %v2433 = vmul.f32 %v2426, %v2426
        %v2434 = vmul.f32 %v2427, %v2427
        %v2435 = vsel %vm664, %v2428, 0.0
        %2436 = vadd.xlane.f32.xlu0 %v2435
        %v2437 = vpop.xlane.xlu0 %2436
        %v2438 = vsel %vm664, %v2429, 0.0
        %2439 = vadd.xlane.f32.xlu0 %v2438
        %v2440 = vpop.xlane.xlu0 %2439
        %v2441 = vsel %vm664, %v2430, 0.0
        %2442 = vadd.xlane.f32.xlu0 %v2441
        %v2443 = vpop.xlane.xlu0 %2442
        %v2444 = vsel %vm664, %v2431, 0.0
        %2445 = vadd.xlane.f32.xlu0 %v2444
        %v2446 = vpop.xlane.xlu0 %2445
        %v2447 = vsel %vm664, %v2432, 0.0
        %2448 = vadd.xlane.f32.xlu0 %v2447
        %v2449 = vpop.xlane.xlu0 %2448
        %v2450 = vsel %vm664, %v2433, 0.0
        %2451 = vadd.xlane.f32.xlu0 %v2450
        %v2452 = vpop.xlane.xlu0 %2451
        %v2453 = vsel %vm664, %v2434, 0.0
        %2454 = vadd.xlane.f32.xlu0 %v2453
        %v2455 = vpop.xlane.xlu0 %2454
        %v2456 = vmul.f32 %v2437, %v2079
        %v2457 = vmul.f32 %v2440, %v2079
        %v2458 = vmul.f32 %v2443, %v2079
        %v2459 = vmul.f32 %v2446, %v2079
        %v2460 = vmul.f32 %v2449, %v2079
        %v2461 = vmul.f32 %v2452, %v2079
        %v2462 = vmul.f32 %v2455, %v2079
        %v2463 = vadd.f32 %v2456, 1e-05
        %v2464 = vadd.f32 %v2457, 1e-05
        %v2465 = vadd.f32 %v2458, 1e-05
        %v2466 = vadd.f32 %v2459, 1e-05
        %v2467 = vadd.f32 %v2460, 1e-05
        %v2468 = vadd.f32 %v2461, 1e-05
        %v2469 = vadd.f32 %v2462, 1e-05
        %v2470 = vrsqrt.pop %v2463
        %v2471 = vrsqrt.pop %v2464
        %v2472 = vrsqrt.pop %v2465
        %v2473 = vrsqrt.pop %v2466
        %v2474 = vrsqrt.pop %v2467
        %v2475 = vrsqrt.pop %v2468
        %v2476 = vrsqrt.pop %v2469
        %v2477 = vmul.f32 %v2421, %v2470
        %v2478 = vmul.f32 %v2422, %v2471
        %v2479 = vmul.f32 %v2423, %v2472
        %v2480 = vmul.f32 %v2424, %v2473
        %v2481 = vmul.f32 %v2425, %v2474
        %v2482 = vmul.f32 %v2426, %v2475
        %v2483 = vmul.f32 %v2427, %v2476
        %v2484 = vlaneseq
        %v2485 = vshrl.u32 %v2484, 7
        %v2486 = vsub.s32 4, %v2485
        %v2487 = vrot.slane %v628, %v2486
        %v2488 = vmul.f32 %v2477, %v2487
        %v2489 = vmul.f32 %v2478, %v2487
        %v2490 = vmul.f32 %v2479, %v2487
        %v2491 = vmul.f32 %v2480, %v2487
        %v2492 = vmul.f32 %v2481, %v2487
        %v2493 = vmul.f32 %v2482, %v2487
        %v2494 = vmul.f32 %v2483, %v2487
        %v2495 = vlaneseq
        %v2496 = vshrl.u32 %v2495, 7
        %v2497 = vsub.s32 5, %v2496
        %v2498 = vrot.slane %v628, %v2497
        %v2499 = vadd.f32 %v2488, %v2498
        %v2500 = vadd.f32 %v2489, %v2498
        %v2501 = vadd.f32 %v2490, %v2498
        %v2502 = vadd.f32 %v2491, %v2498
        %v2503 = vadd.f32 %v2492, %v2498
        %v2504 = vadd.f32 %v2493, %v2498
        %v2505 = vadd.f32 %v2494, %v2498
        %s2506 = scalar_lea.vmem %s5, 16
        %v2507 = vld [vmem:[%s2506] sm:$0xf]
        %v2508 = vld [vmem:[%s2506 + $0x4] sm:$0xf]
        %v2509 = vld [vmem:[%s2506 + $0x8] sm:$0xf]
        %v2510 = vld [vmem:[%s2506 + $0xc] sm:$0xf]
        %s2511 = scalar_lea.vmem %s6, 1
        %v2512 = vld [vmem:[%s2511] sm:$0x1]
        %s2513 = scalar_lea.vmem %s7, 16
        %v2514 = vld [vmem:[%s2513] sm:$0xf]
        %v2515 = vld [vmem:[%s2513 + $0x4] sm:$0xf]
        %v2516 = vld [vmem:[%s2513 + $0x8] sm:$0xf]
        %v2517 = vld [vmem:[%s2513 + $0xc] sm:$0xf]
        %s2518 = scalar_lea.vmem %s8, 8
        %v2519 = vld [vmem:[%s2518] sm:$0x3f]
        %s2520 = scalar_lea.vmem %s9, 16
        %v2521 = vld [vmem:[%s2520] sm:$0xf]
        %v2522 = vld [vmem:[%s2520 + $0x4] sm:$0xf]
        %v2523 = vld [vmem:[%s2520 + $0x8] sm:$0xf]
        %v2524 = vld [vmem:[%s2520 + $0xc] sm:$0xf]
        %s2525 = scalar_lea.vmem %s10, 1
        %v2526 = vld [vmem:[%s2525] sm:$0x1]
        %s2527 = scalar_lea.vmem %s11, 32
        %v2528 = vld [vmem:[%s2527] sm:$0xf]
        %v2529 = vld [vmem:[%s2527 + $0x4] sm:$0xf]
        %v2530 = vld [vmem:[%s2527 + $0x8] sm:$0xf]
        %v2531 = vld [vmem:[%s2527 + $0xc] sm:$0xf]
        %v2532 = vld [vmem:[%s2527 + $0x10] sm:$0xf]
        %v2533 = vld [vmem:[%s2527 + $0x14] sm:$0xf]
        %v2534 = vld [vmem:[%s2527 + $0x18] sm:$0xf]
        %v2535 = vld [vmem:[%s2527 + $0x1c] sm:$0xf]
        %v2536 = vpack.c.bf16 %v2500, %v2499
        %v2537 = vpack.c.bf16 %v2502, %v2501
        %v2538 = vpack.c.bf16 %v2504, %v2503
        %v2539 = vpack.c.bf16 %v2505, %v2505
        %v2541 = vlaneseq
        %v2542 = vshrl.u32 %v2541, 7
        %v2543 = vsub.s32 0, %v2542
        %v2544 = vrot.slane %v2512, %v2543
        %v2550 = vunpack.c.l.b16 %v2507
        %v2551 = vunpack.c.l.b16 %v2508
        %v2552 = vunpack.c.l.b16 %v2509
        %v2553 = vunpack.c.l.b16 %v2510
        %v2554 = vpack.c.b16 %v2551, %v2550
        %v2555 = vpack.c.b16 %v2553, %v2552
        %v2559 = vsel %vm664, %v2536, 0
        %v2562 = vsel %vm664, %v2537, 0
        %v2565 = vsel %vm664, %v2538, 0
        %v2568 = vsel %vm664, %v2539, 0
        %2570 = vmatprep.subr.bf16.mxu0 0
        %2571 = vmatpush1.bf16.msra.mxu0 0
        %2572 = vmatprep.subr.bf16.mxu0 0
        %2573 = vmatpush1.bf16.msra.mxu0 0
        %2574 = vmatprep.subr.bf16.mxu0 0
        %2575 = vmatpush1.bf16.msra.mxu0 0
        %2576 = vmatprep.subr.bf16.mxu0 0
        %2577 = vmatpush1.bf16.msra.mxu0 0
        %2578 = vmatprep.subr.bf16.mxu0 0
        %2579 = vmatpush1.bf16.msra.mxu0 0
        %2580 = vmatprep.subr.bf16.mxu0 0
        %2581 = vmatpush1.bf16.msra.mxu0 0
        %2582 = vmatprep.subr.bf16.mxu0 0
        %2583 = vmatpush1.bf16.msra.mxu0 %v2555
        %2584 = vmatprep.subr.bf16.mxu0 0
        %2585 = vmatpush1.bf16.msra.mxu0 %v2554
        %2586 = vmatprep.subr.bf16.mxu0 0
        %2587 = vmatpush2.bf16.msra.mxu0 0
        %2588 = vmatprep.subr.bf16.mxu0 0
        %2589 = vmatpush2.bf16.msra.mxu0 0
        %2590 = vmatprep.subr.bf16.mxu0 0
        %2591 = vmatpush2.bf16.msra.mxu0 0
        %2592 = vmatprep.subr.bf16.mxu0 0
        %2593 = vmatpush2.bf16.msra.mxu0 0
        %2594 = vmatprep.subr.bf16.mxu0 0
        %2595 = vmatpush2.bf16.msra.mxu0 0
        %2596 = vmatprep.subr.bf16.mxu0 0
        %2597 = vmatpush2.bf16.msra.mxu0 0
        %2598 = vmatprep.subr.bf16.mxu0 0
        %2599 = vmatpush2.bf16.msra.mxu0 0
        %2600 = vmatprep.subr.bf16.mxu0 0
        %2601 = vmatpush2.bf16.msra.mxu0 0
        %2602 = vmatprep.mubr.bf16.mxu0 0
        %2603 = vmatmul.mubr.bf16.gmra.mxu0 %v2559
        %v2604 = vpop.f32.mrf.mxu0
        %v2605 = vadd.f32 %v2544, %v2604
        %v2606 = vpop.f32.mrf.mxu0
        %v2607 = vpop.f32.mrf.mxu0
        %v2608 = vadd.f32 %v2544, %v2607
        %v2609 = vpop.f32.mrf.mxu0
        %2610 = vmatprep.mubr.bf16.mxu0 0
        %2611 = vmatmul.mubr.bf16.gmra.mxu0 %v2562
        %v2612 = vpop.f32.mrf.mxu0
        %v2613 = vadd.f32 %v2544, %v2612
        %v2614 = vpop.f32.mrf.mxu0
        %v2615 = vpop.f32.mrf.mxu0
        %v2616 = vadd.f32 %v2544, %v2615
        %v2617 = vpop.f32.mrf.mxu0
        %2618 = vmatprep.mubr.bf16.mxu0 0
        %2619 = vmatmul.mubr.bf16.gmra.mxu0 %v2565
        %v2620 = vpop.f32.mrf.mxu0
        %v2621 = vadd.f32 %v2544, %v2620
        %v2622 = vpop.f32.mrf.mxu0
        %v2623 = vpop.f32.mrf.mxu0
        %v2624 = vadd.f32 %v2544, %v2623
        %v2625 = vpop.f32.mrf.mxu0
        %2626 = vmatprep.mubr.bf16.mxu0 0
        %2627 = vmatmul.mubr.bf16.gmra.mxu0 %v2568
        %v2628 = vpop.f32.mrf.mxu0
        %v2629 = vadd.f32 %v2544, %v2628
        %v2630 = vpop.f32.mrf.mxu0
        %v2631 = vpop.f32.mrf.mxu0
        %v2632 = vpop.f32.mrf.mxu0
        %2633 = vdwg.mxu0
        %v2634 = vpack.c.bf16 %v2608, %v2605
        %v2635 = vpack.c.bf16 %v2616, %v2613
        %v2636 = vpack.c.bf16 %v2624, %v2621
        %v2637 = vpack.c.bf16 %v2629, %v2629
        %2642 = vrot.lane.b32.xlu0 %v2634, 96
        %v2643 = vpop.permute.xlu0 %2642
        %2644 = vrot.lane.b32.xlu0 %v2635, 96
        %v2645 = vpop.permute.xlu0 %2644
        %2646 = vrot.lane.b32.xlu0 %v2636, 96
        %v2647 = vpop.permute.xlu0 %2646
        %2648 = vrot.lane.b32.xlu0 %v2637, 96
        %v2649 = vpop.permute.xlu0 %2648
        %v2651 = vsel %vm524, %v2634, 0
        %v2654 = vsel %vm524, %v2635, 0
        %v2657 = vsel %vm524, %v2636, 0
        %v2660 = vsel %vm524, %v2637, 0
        %v2663 = vsel %vm524, %v2643, 0
        %v2666 = vsel %vm524, %v2645, 0
        %v2669 = vsel %vm524, %v2647, 0
        %v2672 = vsel %vm524, %v2649, 0
        %2674 = vmatprep.subr.bf16.mxu0 0
        %2675 = vmatpush1.bf16.xpose.msra.mxu0 0
        %2676 = vmatprep.subr.bf16.mxu0 0
        %2677 = vmatpush1.bf16.xpose.msra.mxu0 0
        %2678 = vmatprep.subr.bf16.mxu0 0
        %2679 = vmatpush1.bf16.xpose.msra.mxu0 0
        %2680 = vmatprep.subr.bf16.mxu0 0
        %2681 = vmatpush1.bf16.xpose.msra.mxu0 0
        %2682 = vmatprep.subr.bf16.mxu0 0
        %2683 = vmatpush1.bf16.xpose.msra.mxu0 %v2672
        %2684 = vmatprep.subr.bf16.mxu0 0
        %2685 = vmatpush1.bf16.xpose.msra.mxu0 %v2669
        %2686 = vmatprep.subr.bf16.mxu0 0
        %2687 = vmatpush1.bf16.xpose.msra.mxu0 %v2666
        %2688 = vmatprep.subr.bf16.mxu0 0
        %2689 = vmatpush1.bf16.xpose.msra.mxu0 %v2663
        %2690 = vmatprep.subr.bf16.mxu0 0
        %2691 = vmatpush2.bf16.xpose.msra.mxu0 0
        %2692 = vmatprep.subr.bf16.mxu0 0
        %2693 = vmatpush2.bf16.xpose.msra.mxu0 0
        %2694 = vmatprep.subr.bf16.mxu0 0
        %2695 = vmatpush2.bf16.xpose.msra.mxu0 0
        %2696 = vmatprep.subr.bf16.mxu0 0
        %2697 = vmatpush2.bf16.xpose.msra.mxu0 0
        %2698 = vmatprep.subr.bf16.mxu0 0
        %2699 = vmatpush2.bf16.xpose.msra.mxu0 0
        %2700 = vmatprep.subr.bf16.mxu0 0
        %2701 = vmatpush2.bf16.xpose.msra.mxu0 0
        %2702 = vmatprep.subr.bf16.mxu0 0
        %2703 = vmatpush2.bf16.xpose.msra.mxu0 0
        %2704 = vmatprep.subr.bf16.mxu0 0
        %2705 = vmatpush2.bf16.xpose.msra.mxu0 0
        %2706 = vmatprep.mubr.bf16.mxu0 0
        %2707 = vmatmul.mubr.bf16.gmra.mxu0 %v2651
        %v2708 = vpop.f32.mrf.mxu0
        %v2709 = vadd.f32 %v749, %v2708
        %v2710 = vpop.f32.mrf.mxu0
        %v2711 = vpop.f32.mrf.mxu0
        %v2712 = vadd.f32 %v749, %v2711
        %v2713 = vpop.f32.mrf.mxu0
        %2714 = vmatprep.mubr.bf16.mxu0 0
        %2715 = vmatmul.mubr.bf16.gmra.mxu0 %v2654
        %v2716 = vpop.f32.mrf.mxu0
        %v2717 = vadd.f32 %v749, %v2716
        %v2718 = vpop.f32.mrf.mxu0
        %v2719 = vpop.f32.mrf.mxu0
        %v2720 = vadd.f32 %v749, %v2719
        %v2721 = vpop.f32.mrf.mxu0
        %2722 = vmatprep.mubr.bf16.mxu0 0
        %2723 = vmatmul.mubr.bf16.gmra.mxu0 %v2657
        %v2724 = vpop.f32.mrf.mxu0
        %v2725 = vadd.f32 %v749, %v2724
        %v2726 = vpop.f32.mrf.mxu0
        %v2727 = vpop.f32.mrf.mxu0
        %v2728 = vadd.f32 %v749, %v2727
        %v2729 = vpop.f32.mrf.mxu0
        %2730 = vmatprep.mubr.bf16.mxu0 0
        %2731 = vmatmul.mubr.bf16.gmra.mxu0 %v2660
        %v2732 = vpop.f32.mrf.mxu0
        %v2733 = vadd.f32 %v749, %v2732
        %v2734 = vpop.f32.mrf.mxu0
        %v2735 = vpop.f32.mrf.mxu0
        %v2736 = vpop.f32.mrf.mxu0
        %2737 = vdwg.mxu0
        %v2738 = vsel %vm851, %v2709, -inf
        %2739 = vmax.xlane.f32.xlu0 %v2738
        %v2740 = vpop.xlane.xlu0 %2739
        %v2741 = vsel %vm851, %v2712, -inf
        %2742 = vmax.xlane.f32.xlu0 %v2741
        %v2743 = vpop.xlane.xlu0 %2742
        %v2744 = vsel %vm851, %v2717, -inf
        %2745 = vmax.xlane.f32.xlu0 %v2744
        %v2746 = vpop.xlane.xlu0 %2745
        %v2747 = vsel %vm851, %v2720, -inf
        %2748 = vmax.xlane.f32.xlu0 %v2747
        %v2749 = vpop.xlane.xlu0 %2748
        %v2750 = vsel %vm851, %v2725, -inf
        %2751 = vmax.xlane.f32.xlu0 %v2750
        %v2752 = vpop.xlane.xlu0 %2751
        %v2753 = vsel %vm851, %v2728, -inf
        %2754 = vmax.xlane.f32.xlu0 %v2753
        %v2755 = vpop.xlane.xlu0 %2754
        %v2756 = vsel %vm851, %v2733, -inf
        %2757 = vmax.xlane.f32.xlu0 %v2756
        %v2758 = vpop.xlane.xlu0 %2757
        %v2759 = vsub.f32 %v2709, %v2740
        %v2760 = vsub.f32 %v2712, %v2743
        %v2761 = vsub.f32 %v2717, %v2746
        %v2762 = vsub.f32 %v2720, %v2749
        %v2763 = vsub.f32 %v2725, %v2752
        %v2764 = vsub.f32 %v2728, %v2755
        %v2765 = vsub.f32 %v2733, %v2758
        %v2766 = vmul.f32 %v2759, 1.442695
        %v2767 = vpow.pop %v2766
        %v2768 = vmul.f32 %v2760, 1.442695
        %v2769 = vpow.pop %v2768
        %v2770 = vmul.f32 %v2761, 1.442695
        %v2771 = vpow.pop %v2770
        %v2772 = vmul.f32 %v2762, 1.442695
        %v2773 = vpow.pop %v2772
        %v2774 = vmul.f32 %v2763, 1.442695
        %v2775 = vpow.pop %v2774
        %v2776 = vmul.f32 %v2764, 1.442695
        %v2777 = vpow.pop %v2776
        %v2778 = vmul.f32 %v2765, 1.442695
        %v2779 = vpow.pop %v2778
        %v2780 = vsel %vm851, %v2767, 0.0
        %2781 = vadd.xlane.f32.xlu0 %v2780
        %v2782 = vpop.xlane.xlu0 %2781
        %v2783 = vsel %vm851, %v2769, 0.0
        %2784 = vadd.xlane.f32.xlu0 %v2783
        %v2785 = vpop.xlane.xlu0 %2784
        %v2786 = vsel %vm851, %v2771, 0.0
        %2787 = vadd.xlane.f32.xlu0 %v2786
        %v2788 = vpop.xlane.xlu0 %2787
        %v2789 = vsel %vm851, %v2773, 0.0
        %2790 = vadd.xlane.f32.xlu0 %v2789
        %v2791 = vpop.xlane.xlu0 %2790
        %v2792 = vsel %vm851, %v2775, 0.0
        %2793 = vadd.xlane.f32.xlu0 %v2792
        %v2794 = vpop.xlane.xlu0 %2793
        %v2795 = vsel %vm851, %v2777, 0.0
        %2796 = vadd.xlane.f32.xlu0 %v2795
        %v2797 = vpop.xlane.xlu0 %2796
        %v2798 = vsel %vm851, %v2779, 0.0
        %2799 = vadd.xlane.f32.xlu0 %v2798
        %v2800 = vpop.xlane.xlu0 %2799
        %v2801 = vrcp.pop %v2782
        %v2802 = vrcp.pop %v2785
        %v2803 = vrcp.pop %v2788
        %v2804 = vrcp.pop %v2791
        %v2805 = vrcp.pop %v2794
        %v2806 = vrcp.pop %v2797
        %v2807 = vrcp.pop %v2800
        %v2808 = vmul.f32 %v2767, %v2801
        %v2809 = vmul.f32 %v2769, %v2802
        %v2810 = vmul.f32 %v2771, %v2803
        %v2811 = vmul.f32 %v2773, %v2804
        %v2812 = vmul.f32 %v2775, %v2805
        %v2813 = vmul.f32 %v2777, %v2806
        %v2814 = vmul.f32 %v2779, %v2807
        %v2815 = vpack.c.bf16 %v2809, %v2808
        %v2816 = vpack.c.bf16 %v2811, %v2810
        %v2817 = vpack.c.bf16 %v2813, %v2812
        %v2818 = vpack.c.bf16 %v2814, %v2814
        %2819 = vrot.lane.b32.xlu0 %v2634, 64
        %v2820 = vpop.permute.xlu0 %2819
        %2821 = vrot.lane.b32.xlu0 %v2635, 64
        %v2822 = vpop.permute.xlu0 %2821
        %2823 = vrot.lane.b32.xlu0 %v2636, 64
        %v2824 = vpop.permute.xlu0 %2823
        %2825 = vrot.lane.b32.xlu0 %v2637, 64
        %v2826 = vpop.permute.xlu0 %2825
        %v2831 = vsel %vm851, %v2815, 0
        %v2834 = vsel %vm851, %v2816, 0
        %v2837 = vsel %vm851, %v2817, 0
        %v2840 = vsel %vm851, %v2818, 0
        %v2843 = vsel %vm537, %v2826, 0
        %2845 = vmatprep.subr.bf16.mxu0 0
        %2846 = vmatpush1.bf16.msra.mxu0 0
        %2847 = vmatprep.subr.bf16.mxu0 0
        %2848 = vmatpush1.bf16.msra.mxu0 0
        %2849 = vmatprep.subr.bf16.mxu0 0
        %2850 = vmatpush1.bf16.msra.mxu0 0
        %2851 = vmatprep.subr.bf16.mxu0 0
        %2852 = vmatpush1.bf16.msra.mxu0 0
        %2853 = vmatprep.subr.bf16.mxu0 0
        %2854 = vmatpush1.bf16.msra.mxu0 %v2843
        %2855 = vmatprep.subr.bf16.mxu0 0
        %2856 = vmatpush1.bf16.msra.mxu0 %v2824
        %2857 = vmatprep.subr.bf16.mxu0 0
        %2858 = vmatpush1.bf16.msra.mxu0 %v2822
        %2859 = vmatprep.subr.bf16.mxu0 0
        %2860 = vmatpush1.bf16.msra.mxu0 %v2820
        %2861 = vmatprep.subr.bf16.mxu0 0
        %2862 = vmatpush2.bf16.msra.mxu0 0
        %2863 = vmatprep.subr.bf16.mxu0 0
        %2864 = vmatpush2.bf16.msra.mxu0 0
        %2865 = vmatprep.subr.bf16.mxu0 0
        %2866 = vmatpush2.bf16.msra.mxu0 0
        %2867 = vmatprep.subr.bf16.mxu0 0
        %2868 = vmatpush2.bf16.msra.mxu0 0
        %2869 = vmatprep.subr.bf16.mxu0 0
        %2870 = vmatpush2.bf16.msra.mxu0 0
        %2871 = vmatprep.subr.bf16.mxu0 0
        %2872 = vmatpush2.bf16.msra.mxu0 0
        %2873 = vmatprep.subr.bf16.mxu0 0
        %2874 = vmatpush2.bf16.msra.mxu0 0
        %2875 = vmatprep.subr.bf16.mxu0 0
        %2876 = vmatpush2.bf16.msra.mxu0 0
        %2877 = vmatprep.mubr.bf16.mxu0 0
        %2878 = vmatmul.mubr.bf16.gmra.mxu0 %v2831
        %v2879 = vpop.f32.mrf.mxu0
        %v2880 = vadd.f32 0.0, %v2879
        %v2881 = vpop.f32.mrf.mxu0
        %v2882 = vpop.f32.mrf.mxu0
        %v2883 = vadd.f32 0.0, %v2882
        %v2884 = vpop.f32.mrf.mxu0
        %2885 = vmatprep.mubr.bf16.mxu0 0
        %2886 = vmatmul.mubr.bf16.gmra.mxu0 %v2834
        %v2887 = vpop.f32.mrf.mxu0
        %v2888 = vadd.f32 0.0, %v2887
        %v2889 = vpop.f32.mrf.mxu0
        %v2890 = vpop.f32.mrf.mxu0
        %v2891 = vadd.f32 0.0, %v2890
        %v2892 = vpop.f32.mrf.mxu0
        %2893 = vmatprep.mubr.bf16.mxu0 0
        %2894 = vmatmul.mubr.bf16.gmra.mxu0 %v2837
        %v2895 = vpop.f32.mrf.mxu0
        %v2896 = vadd.f32 0.0, %v2895
        %v2897 = vpop.f32.mrf.mxu0
        %v2898 = vpop.f32.mrf.mxu0
        %v2899 = vadd.f32 0.0, %v2898
        %v2900 = vpop.f32.mrf.mxu0
        %2901 = vmatprep.mubr.bf16.mxu0 0
        %2902 = vmatmul.mubr.bf16.gmra.mxu0 %v2840
        %v2903 = vpop.f32.mrf.mxu0
        %v2904 = vadd.f32 0.0, %v2903
        %v2905 = vpop.f32.mrf.mxu0
        %v2906 = vpop.f32.mrf.mxu0
        %v2907 = vpop.f32.mrf.mxu0
        %2908 = vdwg.mxu0
        %2909 = vrot.lane.b32.xlu0 %v2634, 120
        %v2910 = vpop.permute.xlu0 %2909
        %2911 = vrot.lane.b32.xlu0 %v2635, 120
        %v2912 = vpop.permute.xlu0 %2911
        %2913 = vrot.lane.b32.xlu0 %v2636, 120
        %v2914 = vpop.permute.xlu0 %2913
        %2915 = vrot.lane.b32.xlu0 %v2637, 120
        %v2916 = vpop.permute.xlu0 %2915
        %2917 = vrot.lane.b32.xlu0 %v2634, 88
        %v2918 = vpop.permute.xlu0 %2917
        %2919 = vrot.lane.b32.xlu0 %v2635, 88
        %v2920 = vpop.permute.xlu0 %2919
        %2921 = vrot.lane.b32.xlu0 %v2636, 88
        %v2922 = vpop.permute.xlu0 %2921
        %2923 = vrot.lane.b32.xlu0 %v2637, 88
        %v2924 = vpop.permute.xlu0 %2923
        %v2926 = vsel %vm524, %v2910, 0
        %v2929 = vsel %vm524, %v2912, 0
        %v2932 = vsel %vm524, %v2914, 0
        %v2935 = vsel %vm524, %v2916, 0
        %v2938 = vsel %vm524, %v2918, 0
        %v2941 = vsel %vm524, %v2920, 0
        %v2944 = vsel %vm524, %v2922, 0
        %v2947 = vsel %vm524, %v2924, 0
        %2949 = vmatprep.subr.bf16.mxu0 0
        %2950 = vmatpush1.bf16.xpose.msra.mxu0 0
        %2951 = vmatprep.subr.bf16.mxu0 0
        %2952 = vmatpush1.bf16.xpose.msra.mxu0 0
        %2953 = vmatprep.subr.bf16.mxu0 0
        %2954 = vmatpush1.bf16.xpose.msra.mxu0 0
        %2955 = vmatprep.subr.bf16.mxu0 0
        %2956 = vmatpush1.bf16.xpose.msra.mxu0 0
        %2957 = vmatprep.subr.bf16.mxu0 0
        %2958 = vmatpush1.bf16.xpose.msra.mxu0 %v2947
        %2959 = vmatprep.subr.bf16.mxu0 0
        %2960 = vmatpush1.bf16.xpose.msra.mxu0 %v2944
        %2961 = vmatprep.subr.bf16.mxu0 0
        %2962 = vmatpush1.bf16.xpose.msra.mxu0 %v2941
        %2963 = vmatprep.subr.bf16.mxu0 0
        %2964 = vmatpush1.bf16.xpose.msra.mxu0 %v2938
        %2965 = vmatprep.subr.bf16.mxu0 0
        %2966 = vmatpush2.bf16.xpose.msra.mxu0 0
        %2967 = vmatprep.subr.bf16.mxu0 0
        %2968 = vmatpush2.bf16.xpose.msra.mxu0 0
        %2969 = vmatprep.subr.bf16.mxu0 0
        %2970 = vmatpush2.bf16.xpose.msra.mxu0 0
        %2971 = vmatprep.subr.bf16.mxu0 0
        %2972 = vmatpush2.bf16.xpose.msra.mxu0 0
        %2973 = vmatprep.subr.bf16.mxu0 0
        %2974 = vmatpush2.bf16.xpose.msra.mxu0 0
        %2975 = vmatprep.subr.bf16.mxu0 0
        %2976 = vmatpush2.bf16.xpose.msra.mxu0 0
        %2977 = vmatprep.subr.bf16.mxu0 0
        %2978 = vmatpush2.bf16.xpose.msra.mxu0 0
        %2979 = vmatprep.subr.bf16.mxu0 0
        %2980 = vmatpush2.bf16.xpose.msra.mxu0 0
        %2981 = vmatprep.mubr.bf16.mxu0 0
        %2982 = vmatmul.mubr.bf16.gmra.mxu0 %v2926
        %v2983 = vpop.f32.mrf.mxu0
        %v2984 = vadd.f32 %v749, %v2983
        %v2985 = vpop.f32.mrf.mxu0
        %v2986 = vpop.f32.mrf.mxu0
        %v2987 = vadd.f32 %v749, %v2986
        %v2988 = vpop.f32.mrf.mxu0
        %2989 = vmatprep.mubr.bf16.mxu0 0
        %2990 = vmatmul.mubr.bf16.gmra.mxu0 %v2929
        %v2991 = vpop.f32.mrf.mxu0
        %v2992 = vadd.f32 %v749, %v2991
        %v2993 = vpop.f32.mrf.mxu0
        %v2994 = vpop.f32.mrf.mxu0
        %v2995 = vadd.f32 %v749, %v2994
        %v2996 = vpop.f32.mrf.mxu0
        %2997 = vmatprep.mubr.bf16.mxu0 0
        %2998 = vmatmul.mubr.bf16.gmra.mxu0 %v2932
        %v2999 = vpop.f32.mrf.mxu0
        %v3000 = vadd.f32 %v749, %v2999
        %v3001 = vpop.f32.mrf.mxu0
        %v3002 = vpop.f32.mrf.mxu0
        %v3003 = vadd.f32 %v749, %v3002
        %v3004 = vpop.f32.mrf.mxu0
        %3005 = vmatprep.mubr.bf16.mxu0 0
        %3006 = vmatmul.mubr.bf16.gmra.mxu0 %v2935
        %v3007 = vpop.f32.mrf.mxu0
        %v3008 = vadd.f32 %v749, %v3007
        %v3009 = vpop.f32.mrf.mxu0
        %v3010 = vpop.f32.mrf.mxu0
        %v3011 = vpop.f32.mrf.mxu0
        %3012 = vdwg.mxu0
        %v3013 = vsel %vm851, %v2984, -inf
        %3014 = vmax.xlane.f32.xlu0 %v3013
        %v3015 = vpop.xlane.xlu0 %3014
        %v3016 = vsel %vm851, %v2987, -inf
        %3017 = vmax.xlane.f32.xlu0 %v3016
        %v3018 = vpop.xlane.xlu0 %3017
        %v3019 = vsel %vm851, %v2992, -inf
        %3020 = vmax.xlane.f32.xlu0 %v3019
        %v3021 = vpop.xlane.xlu0 %3020
        %v3022 = vsel %vm851, %v2995, -inf
        %3023 = vmax.xlane.f32.xlu0 %v3022
        %v3024 = vpop.xlane.xlu0 %3023
        %v3025 = vsel %vm851, %v3000, -inf
        %3026 = vmax.xlane.f32.xlu0 %v3025
        %v3027 = vpop.xlane.xlu0 %3026
        %v3028 = vsel %vm851, %v3003, -inf
        %3029 = vmax.xlane.f32.xlu0 %v3028
        %v3030 = vpop.xlane.xlu0 %3029
        %v3031 = vsel %vm851, %v3008, -inf
        %3032 = vmax.xlane.f32.xlu0 %v3031
        %v3033 = vpop.xlane.xlu0 %3032
        %v3034 = vsub.f32 %v2984, %v3015
        %v3035 = vsub.f32 %v2987, %v3018
        %v3036 = vsub.f32 %v2992, %v3021
        %v3037 = vsub.f32 %v2995, %v3024
        %v3038 = vsub.f32 %v3000, %v3027
        %v3039 = vsub.f32 %v3003, %v3030
        %v3040 = vsub.f32 %v3008, %v3033
        %v3041 = vmul.f32 %v3034, 1.442695
        %v3042 = vpow.pop %v3041
        %v3043 = vmul.f32 %v3035, 1.442695
        %v3044 = vpow.pop %v3043
        %v3045 = vmul.f32 %v3036, 1.442695
        %v3046 = vpow.pop %v3045
        %v3047 = vmul.f32 %v3037, 1.442695
        %v3048 = vpow.pop %v3047
        %v3049 = vmul.f32 %v3038, 1.442695
        %v3050 = vpow.pop %v3049
        %v3051 = vmul.f32 %v3039, 1.442695
        %v3052 = vpow.pop %v3051
        %v3053 = vmul.f32 %v3040, 1.442695
        %v3054 = vpow.pop %v3053
        %v3055 = vsel %vm851, %v3042, 0.0
        %3056 = vadd.xlane.f32.xlu0 %v3055
        %v3057 = vpop.xlane.xlu0 %3056
        %v3058 = vsel %vm851, %v3044, 0.0
        %3059 = vadd.xlane.f32.xlu0 %v3058
        %v3060 = vpop.xlane.xlu0 %3059
        %v3061 = vsel %vm851, %v3046, 0.0
        %3062 = vadd.xlane.f32.xlu0 %v3061
        %v3063 = vpop.xlane.xlu0 %3062
        %v3064 = vsel %vm851, %v3048, 0.0
        %3065 = vadd.xlane.f32.xlu0 %v3064
        %v3066 = vpop.xlane.xlu0 %3065
        %v3067 = vsel %vm851, %v3050, 0.0
        %3068 = vadd.xlane.f32.xlu0 %v3067
        %v3069 = vpop.xlane.xlu0 %3068
        %v3070 = vsel %vm851, %v3052, 0.0
        %3071 = vadd.xlane.f32.xlu0 %v3070
        %v3072 = vpop.xlane.xlu0 %3071
        %v3073 = vsel %vm851, %v3054, 0.0
        %3074 = vadd.xlane.f32.xlu0 %v3073
        %v3075 = vpop.xlane.xlu0 %3074
        %v3076 = vrcp.pop %v3057
        %v3077 = vrcp.pop %v3060
        %v3078 = vrcp.pop %v3063
        %v3079 = vrcp.pop %v3066
        %v3080 = vrcp.pop %v3069
        %v3081 = vrcp.pop %v3072
        %v3082 = vrcp.pop %v3075
        %v3083 = vmul.f32 %v3042, %v3076
        %v3084 = vmul.f32 %v3044, %v3077
        %v3085 = vmul.f32 %v3046, %v3078
        %v3086 = vmul.f32 %v3048, %v3079
        %v3087 = vmul.f32 %v3050, %v3080
        %v3088 = vmul.f32 %v3052, %v3081
        %v3089 = vmul.f32 %v3054, %v3082
        %v3090 = vpack.c.bf16 %v3084, %v3083
        %v3091 = vpack.c.bf16 %v3086, %v3085
        %v3092 = vpack.c.bf16 %v3088, %v3087
        %v3093 = vpack.c.bf16 %v3089, %v3089
        %3094 = vrot.lane.b32.xlu0 %v2634, 56
        %v3095 = vpop.permute.xlu0 %3094
        %3096 = vrot.lane.b32.xlu0 %v2635, 56
        %v3097 = vpop.permute.xlu0 %3096
        %3098 = vrot.lane.b32.xlu0 %v2636, 56
        %v3099 = vpop.permute.xlu0 %3098
        %3100 = vrot.lane.b32.xlu0 %v2637, 56
        %v3101 = vpop.permute.xlu0 %3100
        %v3106 = vsel %vm851, %v3090, 0
        %v3109 = vsel %vm851, %v3091, 0
        %v3112 = vsel %vm851, %v3092, 0
        %v3115 = vsel %vm851, %v3093, 0
        %v3118 = vsel %vm537, %v3101, 0
        %3120 = vmatprep.subr.bf16.mxu0 0
        %3121 = vmatpush1.bf16.msra.mxu0 0
        %3122 = vmatprep.subr.bf16.mxu0 0
        %3123 = vmatpush1.bf16.msra.mxu0 0
        %3124 = vmatprep.subr.bf16.mxu0 0
        %3125 = vmatpush1.bf16.msra.mxu0 0
        %3126 = vmatprep.subr.bf16.mxu0 0
        %3127 = vmatpush1.bf16.msra.mxu0 0
        %3128 = vmatprep.subr.bf16.mxu0 0
        %3129 = vmatpush1.bf16.msra.mxu0 %v3118
        %3130 = vmatprep.subr.bf16.mxu0 0
        %3131 = vmatpush1.bf16.msra.mxu0 %v3099
        %3132 = vmatprep.subr.bf16.mxu0 0
        %3133 = vmatpush1.bf16.msra.mxu0 %v3097
        %3134 = vmatprep.subr.bf16.mxu0 0
        %3135 = vmatpush1.bf16.msra.mxu0 %v3095
        %3136 = vmatprep.subr.bf16.mxu0 0
        %3137 = vmatpush2.bf16.msra.mxu0 0
        %3138 = vmatprep.subr.bf16.mxu0 0
        %3139 = vmatpush2.bf16.msra.mxu0 0
        %3140 = vmatprep.subr.bf16.mxu0 0
        %3141 = vmatpush2.bf16.msra.mxu0 0
        %3142 = vmatprep.subr.bf16.mxu0 0
        %3143 = vmatpush2.bf16.msra.mxu0 0
        %3144 = vmatprep.subr.bf16.mxu0 0
        %3145 = vmatpush2.bf16.msra.mxu0 0
        %3146 = vmatprep.subr.bf16.mxu0 0
        %3147 = vmatpush2.bf16.msra.mxu0 0
        %3148 = vmatprep.subr.bf16.mxu0 0
        %3149 = vmatpush2.bf16.msra.mxu0 0
        %3150 = vmatprep.subr.bf16.mxu0 0
        %3151 = vmatpush2.bf16.msra.mxu0 0
        %3152 = vmatprep.mubr.bf16.mxu0 0
        %3153 = vmatmul.mubr.bf16.gmra.mxu0 %v3106
        %v3154 = vpop.f32.mrf.mxu0
        %v3155 = vadd.f32 0.0, %v3154
        %v3156 = vpop.f32.mrf.mxu0
        %v3157 = vpop.f32.mrf.mxu0
        %v3158 = vadd.f32 0.0, %v3157
        %v3159 = vpop.f32.mrf.mxu0
        %3160 = vmatprep.mubr.bf16.mxu0 0
        %3161 = vmatmul.mubr.bf16.gmra.mxu0 %v3109
        %v3162 = vpop.f32.mrf.mxu0
        %v3163 = vadd.f32 0.0, %v3162
        %v3164 = vpop.f32.mrf.mxu0
        %v3165 = vpop.f32.mrf.mxu0
        %v3166 = vadd.f32 0.0, %v3165
        %v3167 = vpop.f32.mrf.mxu0
        %3168 = vmatprep.mubr.bf16.mxu0 0
        %3169 = vmatmul.mubr.bf16.gmra.mxu0 %v3112
        %v3170 = vpop.f32.mrf.mxu0
        %v3171 = vadd.f32 0.0, %v3170
        %v3172 = vpop.f32.mrf.mxu0
        %v3173 = vpop.f32.mrf.mxu0
        %v3174 = vadd.f32 0.0, %v3173
        %v3175 = vpop.f32.mrf.mxu0
        %3176 = vmatprep.mubr.bf16.mxu0 0
        %3177 = vmatmul.mubr.bf16.gmra.mxu0 %v3115
        %v3178 = vpop.f32.mrf.mxu0
        %v3179 = vadd.f32 0.0, %v3178
        %v3180 = vpop.f32.mrf.mxu0
        %v3181 = vpop.f32.mrf.mxu0
        %v3182 = vpop.f32.mrf.mxu0
        %3183 = vdwg.mxu0
        %3184 = vrot.lane.b32.xlu0 %v2634, 112
        %v3185 = vpop.permute.xlu0 %3184
        %3186 = vrot.lane.b32.xlu0 %v2635, 112
        %v3187 = vpop.permute.xlu0 %3186
        %3188 = vrot.lane.b32.xlu0 %v2636, 112
        %v3189 = vpop.permute.xlu0 %3188
        %3190 = vrot.lane.b32.xlu0 %v2637, 112
        %v3191 = vpop.permute.xlu0 %3190
        %3192 = vrot.lane.b32.xlu0 %v2634, 80
        %v3193 = vpop.permute.xlu0 %3192
        %3194 = vrot.lane.b32.xlu0 %v2635, 80
        %v3195 = vpop.permute.xlu0 %3194
        %3196 = vrot.lane.b32.xlu0 %v2636, 80
        %v3197 = vpop.permute.xlu0 %3196
        %3198 = vrot.lane.b32.xlu0 %v2637, 80
        %v3199 = vpop.permute.xlu0 %3198
        %v3201 = vsel %vm524, %v3185, 0
        %v3204 = vsel %vm524, %v3187, 0
        %v3207 = vsel %vm524, %v3189, 0
        %v3210 = vsel %vm524, %v3191, 0
        %v3213 = vsel %vm524, %v3193, 0
        %v3216 = vsel %vm524, %v3195, 0
        %v3219 = vsel %vm524, %v3197, 0
        %v3222 = vsel %vm524, %v3199, 0
        %3224 = vmatprep.subr.bf16.mxu0 0
        %3225 = vmatpush1.bf16.xpose.msra.mxu0 0
        %3226 = vmatprep.subr.bf16.mxu0 0
        %3227 = vmatpush1.bf16.xpose.msra.mxu0 0
        %3228 = vmatprep.subr.bf16.mxu0 0
        %3229 = vmatpush1.bf16.xpose.msra.mxu0 0
        %3230 = vmatprep.subr.bf16.mxu0 0
        %3231 = vmatpush1.bf16.xpose.msra.mxu0 0
        %3232 = vmatprep.subr.bf16.mxu0 0
        %3233 = vmatpush1.bf16.xpose.msra.mxu0 %v3222
        %3234 = vmatprep.subr.bf16.mxu0 0
        %3235 = vmatpush1.bf16.xpose.msra.mxu0 %v3219
        %3236 = vmatprep.subr.bf16.mxu0 0
        %3237 = vmatpush1.bf16.xpose.msra.mxu0 %v3216
        %3238 = vmatprep.subr.bf16.mxu0 0
        %3239 = vmatpush1.bf16.xpose.msra.mxu0 %v3213
        %3240 = vmatprep.subr.bf16.mxu0 0
        %3241 = vmatpush2.bf16.xpose.msra.mxu0 0
        %3242 = vmatprep.subr.bf16.mxu0 0
        %3243 = vmatpush2.bf16.xpose.msra.mxu0 0
        %3244 = vmatprep.subr.bf16.mxu0 0
        %3245 = vmatpush2.bf16.xpose.msra.mxu0 0
        %3246 = vmatprep.subr.bf16.mxu0 0
        %3247 = vmatpush2.bf16.xpose.msra.mxu0 0
        %3248 = vmatprep.subr.bf16.mxu0 0
        %3249 = vmatpush2.bf16.xpose.msra.mxu0 0
        %3250 = vmatprep.subr.bf16.mxu0 0
        %3251 = vmatpush2.bf16.xpose.msra.mxu0 0
        %3252 = vmatprep.subr.bf16.mxu0 0
        %3253 = vmatpush2.bf16.xpose.msra.mxu0 0
        %3254 = vmatprep.subr.bf16.mxu0 0
        %3255 = vmatpush2.bf16.xpose.msra.mxu0 0
        %3256 = vmatprep.mubr.bf16.mxu0 0
        %3257 = vmatmul.mubr.bf16.gmra.mxu0 %v3201
        %v3258 = vpop.f32.mrf.mxu0
        %v3259 = vadd.f32 %v749, %v3258
        %v3260 = vpop.f32.mrf.mxu0
        %v3261 = vpop.f32.mrf.mxu0
        %v3262 = vadd.f32 %v749, %v3261
        %v3263 = vpop.f32.mrf.mxu0
        %3264 = vmatprep.mubr.bf16.mxu0 0
        %3265 = vmatmul.mubr.bf16.gmra.mxu0 %v3204
        %v3266 = vpop.f32.mrf.mxu0
        %v3267 = vadd.f32 %v749, %v3266
        %v3268 = vpop.f32.mrf.mxu0
        %v3269 = vpop.f32.mrf.mxu0
        %v3270 = vadd.f32 %v749, %v3269
        %v3271 = vpop.f32.mrf.mxu0
        %3272 = vmatprep.mubr.bf16.mxu0 0
        %3273 = vmatmul.mubr.bf16.gmra.mxu0 %v3207
        %v3274 = vpop.f32.mrf.mxu0
        %v3275 = vadd.f32 %v749, %v3274
        %v3276 = vpop.f32.mrf.mxu0
        %v3277 = vpop.f32.mrf.mxu0
        %v3278 = vadd.f32 %v749, %v3277
        %v3279 = vpop.f32.mrf.mxu0
        %3280 = vmatprep.mubr.bf16.mxu0 0
        %3281 = vmatmul.mubr.bf16.gmra.mxu0 %v3210
        %v3282 = vpop.f32.mrf.mxu0
        %v3283 = vadd.f32 %v749, %v3282
        %v3284 = vpop.f32.mrf.mxu0
        %v3285 = vpop.f32.mrf.mxu0
        %v3286 = vpop.f32.mrf.mxu0
        %3287 = vdwg.mxu0
        %v3288 = vsel %vm851, %v3259, -inf
        %3289 = vmax.xlane.f32.xlu0 %v3288
        %v3290 = vpop.xlane.xlu0 %3289
        %v3291 = vsel %vm851, %v3262, -inf
        %3292 = vmax.xlane.f32.xlu0 %v3291
        %v3293 = vpop.xlane.xlu0 %3292
        %v3294 = vsel %vm851, %v3267, -inf
        %3295 = vmax.xlane.f32.xlu0 %v3294
        %v3296 = vpop.xlane.xlu0 %3295
        %v3297 = vsel %vm851, %v3270, -inf
        %3298 = vmax.xlane.f32.xlu0 %v3297
        %v3299 = vpop.xlane.xlu0 %3298
        %v3300 = vsel %vm851, %v3275, -inf
        %3301 = vmax.xlane.f32.xlu0 %v3300
        %v3302 = vpop.xlane.xlu0 %3301
        %v3303 = vsel %vm851, %v3278, -inf
        %3304 = vmax.xlane.f32.xlu0 %v3303
        %v3305 = vpop.xlane.xlu0 %3304
        %v3306 = vsel %vm851, %v3283, -inf
        %3307 = vmax.xlane.f32.xlu0 %v3306
        %v3308 = vpop.xlane.xlu0 %3307
        %v3309 = vsub.f32 %v3259, %v3290
        %v3310 = vsub.f32 %v3262, %v3293
        %v3311 = vsub.f32 %v3267, %v3296
        %v3312 = vsub.f32 %v3270, %v3299
        %v3313 = vsub.f32 %v3275, %v3302
        %v3314 = vsub.f32 %v3278, %v3305
        %v3315 = vsub.f32 %v3283, %v3308
        %v3316 = vmul.f32 %v3309, 1.442695
        %v3317 = vpow.pop %v3316
        %v3318 = vmul.f32 %v3310, 1.442695
        %v3319 = vpow.pop %v3318
        %v3320 = vmul.f32 %v3311, 1.442695
        %v3321 = vpow.pop %v3320
        %v3322 = vmul.f32 %v3312, 1.442695
        %v3323 = vpow.pop %v3322
        %v3324 = vmul.f32 %v3313, 1.442695
        %v3325 = vpow.pop %v3324
        %v3326 = vmul.f32 %v3314, 1.442695
        %v3327 = vpow.pop %v3326
        %v3328 = vmul.f32 %v3315, 1.442695
        %v3329 = vpow.pop %v3328
        %v3330 = vsel %vm851, %v3317, 0.0
        %3331 = vadd.xlane.f32.xlu0 %v3330
        %v3332 = vpop.xlane.xlu0 %3331
        %v3333 = vsel %vm851, %v3319, 0.0
        %3334 = vadd.xlane.f32.xlu0 %v3333
        %v3335 = vpop.xlane.xlu0 %3334
        %v3336 = vsel %vm851, %v3321, 0.0
        %3337 = vadd.xlane.f32.xlu0 %v3336
        %v3338 = vpop.xlane.xlu0 %3337
        %v3339 = vsel %vm851, %v3323, 0.0
        %3340 = vadd.xlane.f32.xlu0 %v3339
        %v3341 = vpop.xlane.xlu0 %3340
        %v3342 = vsel %vm851, %v3325, 0.0
        %3343 = vadd.xlane.f32.xlu0 %v3342
        %v3344 = vpop.xlane.xlu0 %3343
        %v3345 = vsel %vm851, %v3327, 0.0
        %3346 = vadd.xlane.f32.xlu0 %v3345
        %v3347 = vpop.xlane.xlu0 %3346
        %v3348 = vsel %vm851, %v3329, 0.0
        %3349 = vadd.xlane.f32.xlu0 %v3348
        %v3350 = vpop.xlane.xlu0 %3349
        %v3351 = vrcp.pop %v3332
        %v3352 = vrcp.pop %v3335
        %v3353 = vrcp.pop %v3338
        %v3354 = vrcp.pop %v3341
        %v3355 = vrcp.pop %v3344
        %v3356 = vrcp.pop %v3347
        %v3357 = vrcp.pop %v3350
        %v3358 = vmul.f32 %v3317, %v3351
        %v3359 = vmul.f32 %v3319, %v3352
        %v3360 = vmul.f32 %v3321, %v3353
        %v3361 = vmul.f32 %v3323, %v3354
        %v3362 = vmul.f32 %v3325, %v3355
        %v3363 = vmul.f32 %v3327, %v3356
        %v3364 = vmul.f32 %v3329, %v3357
        %v3365 = vpack.c.bf16 %v3359, %v3358
        %v3366 = vpack.c.bf16 %v3361, %v3360
        %v3367 = vpack.c.bf16 %v3363, %v3362
        %v3368 = vpack.c.bf16 %v3364, %v3364
        %3369 = vrot.lane.b32.xlu0 %v2634, 48
        %v3370 = vpop.permute.xlu0 %3369
        %3371 = vrot.lane.b32.xlu0 %v2635, 48
        %v3372 = vpop.permute.xlu0 %3371
        %3373 = vrot.lane.b32.xlu0 %v2636, 48
        %v3374 = vpop.permute.xlu0 %3373
        %3375 = vrot.lane.b32.xlu0 %v2637, 48
        %v3376 = vpop.permute.xlu0 %3375
        %v3381 = vsel %vm851, %v3365, 0
        %v3384 = vsel %vm851, %v3366, 0
        %v3387 = vsel %vm851, %v3367, 0
        %v3390 = vsel %vm851, %v3368, 0
        %v3393 = vsel %vm537, %v3376, 0
        %3395 = vmatprep.subr.bf16.mxu0 0
        %3396 = vmatpush1.bf16.msra.mxu0 0
        %3397 = vmatprep.subr.bf16.mxu0 0
        %3398 = vmatpush1.bf16.msra.mxu0 0
        %3399 = vmatprep.subr.bf16.mxu0 0
        %3400 = vmatpush1.bf16.msra.mxu0 0
        %3401 = vmatprep.subr.bf16.mxu0 0
        %3402 = vmatpush1.bf16.msra.mxu0 0
        %3403 = vmatprep.subr.bf16.mxu0 0
        %3404 = vmatpush1.bf16.msra.mxu0 %v3393
        %3405 = vmatprep.subr.bf16.mxu0 0
        %3406 = vmatpush1.bf16.msra.mxu0 %v3374
        %3407 = vmatprep.subr.bf16.mxu0 0
        %3408 = vmatpush1.bf16.msra.mxu0 %v3372
        %3409 = vmatprep.subr.bf16.mxu0 0
        %3410 = vmatpush1.bf16.msra.mxu0 %v3370
        %3411 = vmatprep.subr.bf16.mxu0 0
        %3412 = vmatpush2.bf16.msra.mxu0 0
        %3413 = vmatprep.subr.bf16.mxu0 0
        %3414 = vmatpush2.bf16.msra.mxu0 0
        %3415 = vmatprep.subr.bf16.mxu0 0
        %3416 = vmatpush2.bf16.msra.mxu0 0
        %3417 = vmatprep.subr.bf16.mxu0 0
        %3418 = vmatpush2.bf16.msra.mxu0 0
        %3419 = vmatprep.subr.bf16.mxu0 0
        %3420 = vmatpush2.bf16.msra.mxu0 0
        %3421 = vmatprep.subr.bf16.mxu0 0
        %3422 = vmatpush2.bf16.msra.mxu0 0
        %3423 = vmatprep.subr.bf16.mxu0 0
        %3424 = vmatpush2.bf16.msra.mxu0 0
        %3425 = vmatprep.subr.bf16.mxu0 0
        %3426 = vmatpush2.bf16.msra.mxu0 0
        %3427 = vmatprep.mubr.bf16.mxu0 0
        %3428 = vmatmul.mubr.bf16.gmra.mxu0 %v3381
        %v3429 = vpop.f32.mrf.mxu0
        %v3430 = vadd.f32 0.0, %v3429
        %v3431 = vpop.f32.mrf.mxu0
        %v3432 = vpop.f32.mrf.mxu0
        %v3433 = vadd.f32 0.0, %v3432
        %v3434 = vpop.f32.mrf.mxu0
        %3435 = vmatprep.mubr.bf16.mxu0 0
        %3436 = vmatmul.mubr.bf16.gmra.mxu0 %v3384
        %v3437 = vpop.f32.mrf.mxu0
        %v3438 = vadd.f32 0.0, %v3437
        %v3439 = vpop.f32.mrf.mxu0
        %v3440 = vpop.f32.mrf.mxu0
        %v3441 = vadd.f32 0.0, %v3440
        %v3442 = vpop.f32.mrf.mxu0
        %3443 = vmatprep.mubr.bf16.mxu0 0
        %3444 = vmatmul.mubr.bf16.gmra.mxu0 %v3387
        %v3445 = vpop.f32.mrf.mxu0
        %v3446 = vadd.f32 0.0, %v3445
        %v3447 = vpop.f32.mrf.mxu0
        %v3448 = vpop.f32.mrf.mxu0
        %v3449 = vadd.f32 0.0, %v3448
        %v3450 = vpop.f32.mrf.mxu0
        %3451 = vmatprep.mubr.bf16.mxu0 0
        %3452 = vmatmul.mubr.bf16.gmra.mxu0 %v3390
        %v3453 = vpop.f32.mrf.mxu0
        %v3454 = vadd.f32 0.0, %v3453
        %v3455 = vpop.f32.mrf.mxu0
        %v3456 = vpop.f32.mrf.mxu0
        %v3457 = vpop.f32.mrf.mxu0
        %3458 = vdwg.mxu0
        %3459 = vrot.lane.b32.xlu0 %v2634, 104
        %v3460 = vpop.permute.xlu0 %3459
        %3461 = vrot.lane.b32.xlu0 %v2635, 104
        %v3462 = vpop.permute.xlu0 %3461
        %3463 = vrot.lane.b32.xlu0 %v2636, 104
        %v3464 = vpop.permute.xlu0 %3463
        %3465 = vrot.lane.b32.xlu0 %v2637, 104
        %v3466 = vpop.permute.xlu0 %3465
        %3467 = vrot.lane.b32.xlu0 %v2634, 72
        %v3468 = vpop.permute.xlu0 %3467
        %3469 = vrot.lane.b32.xlu0 %v2635, 72
        %v3470 = vpop.permute.xlu0 %3469
        %3471 = vrot.lane.b32.xlu0 %v2636, 72
        %v3472 = vpop.permute.xlu0 %3471
        %3473 = vrot.lane.b32.xlu0 %v2637, 72
        %v3474 = vpop.permute.xlu0 %3473
        %v3476 = vsel %vm524, %v3460, 0
        %v3479 = vsel %vm524, %v3462, 0
        %v3482 = vsel %vm524, %v3464, 0
        %v3485 = vsel %vm524, %v3466, 0
        %v3488 = vsel %vm524, %v3468, 0
        %v3491 = vsel %vm524, %v3470, 0
        %v3494 = vsel %vm524, %v3472, 0
        %v3497 = vsel %vm524, %v3474, 0
        %3499 = vmatprep.subr.bf16.mxu0 0
        %3500 = vmatpush1.bf16.xpose.msra.mxu0 0
        %3501 = vmatprep.subr.bf16.mxu0 0
        %3502 = vmatpush1.bf16.xpose.msra.mxu0 0
        %3503 = vmatprep.subr.bf16.mxu0 0
        %3504 = vmatpush1.bf16.xpose.msra.mxu0 0
        %3505 = vmatprep.subr.bf16.mxu0 0
        %3506 = vmatpush1.bf16.xpose.msra.mxu0 0
        %3507 = vmatprep.subr.bf16.mxu0 0
        %3508 = vmatpush1.bf16.xpose.msra.mxu0 %v3497
        %3509 = vmatprep.subr.bf16.mxu0 0
        %3510 = vmatpush1.bf16.xpose.msra.mxu0 %v3494
        %3511 = vmatprep.subr.bf16.mxu0 0
        %3512 = vmatpush1.bf16.xpose.msra.mxu0 %v3491
        %3513 = vmatprep.subr.bf16.mxu0 0
        %3514 = vmatpush1.bf16.xpose.msra.mxu0 %v3488
        %3515 = vmatprep.subr.bf16.mxu0 0
        %3516 = vmatpush2.bf16.xpose.msra.mxu0 0
        %3517 = vmatprep.subr.bf16.mxu0 0
        %3518 = vmatpush2.bf16.xpose.msra.mxu0 0
        %3519 = vmatprep.subr.bf16.mxu0 0
        %3520 = vmatpush2.bf16.xpose.msra.mxu0 0
        %3521 = vmatprep.subr.bf16.mxu0 0
        %3522 = vmatpush2.bf16.xpose.msra.mxu0 0
        %3523 = vmatprep.subr.bf16.mxu0 0
        %3524 = vmatpush2.bf16.xpose.msra.mxu0 0
        %3525 = vmatprep.subr.bf16.mxu0 0
        %3526 = vmatpush2.bf16.xpose.msra.mxu0 0
        %3527 = vmatprep.subr.bf16.mxu0 0
        %3528 = vmatpush2.bf16.xpose.msra.mxu0 0
        %3529 = vmatprep.subr.bf16.mxu0 0
        %3530 = vmatpush2.bf16.xpose.msra.mxu0 0
        %3531 = vmatprep.mubr.bf16.mxu0 0
        %3532 = vmatmul.mubr.bf16.gmra.mxu0 %v3476
        %v3533 = vpop.f32.mrf.mxu0
        %v3534 = vadd.f32 %v749, %v3533
        %v3535 = vpop.f32.mrf.mxu0
        %v3536 = vpop.f32.mrf.mxu0
        %v3537 = vadd.f32 %v749, %v3536
        %v3538 = vpop.f32.mrf.mxu0
        %3539 = vmatprep.mubr.bf16.mxu0 0
        %3540 = vmatmul.mubr.bf16.gmra.mxu0 %v3479
        %v3541 = vpop.f32.mrf.mxu0
        %v3542 = vadd.f32 %v749, %v3541
        %v3543 = vpop.f32.mrf.mxu0
        %v3544 = vpop.f32.mrf.mxu0
        %v3545 = vadd.f32 %v749, %v3544
        %v3546 = vpop.f32.mrf.mxu0
        %3547 = vmatprep.mubr.bf16.mxu0 0
        %3548 = vmatmul.mubr.bf16.gmra.mxu0 %v3482
        %v3549 = vpop.f32.mrf.mxu0
        %v3550 = vadd.f32 %v749, %v3549
        %v3551 = vpop.f32.mrf.mxu0
        %v3552 = vpop.f32.mrf.mxu0
        %v3553 = vadd.f32 %v749, %v3552
        %v3554 = vpop.f32.mrf.mxu0
        %3555 = vmatprep.mubr.bf16.mxu0 0
        %3556 = vmatmul.mubr.bf16.gmra.mxu0 %v3485
        %v3557 = vpop.f32.mrf.mxu0
        %v3558 = vadd.f32 %v749, %v3557
        %v3559 = vpop.f32.mrf.mxu0
        %v3560 = vpop.f32.mrf.mxu0
        %v3561 = vpop.f32.mrf.mxu0
        %3562 = vdwg.mxu0
        %v3563 = vsel %vm851, %v3534, -inf
        %3564 = vmax.xlane.f32.xlu0 %v3563
        %v3565 = vpop.xlane.xlu0 %3564
        %v3566 = vsel %vm851, %v3537, -inf
        %3567 = vmax.xlane.f32.xlu0 %v3566
        %v3568 = vpop.xlane.xlu0 %3567
        %v3569 = vsel %vm851, %v3542, -inf
        %3570 = vmax.xlane.f32.xlu0 %v3569
        %v3571 = vpop.xlane.xlu0 %3570
        %v3572 = vsel %vm851, %v3545, -inf
        %3573 = vmax.xlane.f32.xlu0 %v3572
        %v3574 = vpop.xlane.xlu0 %3573
        %v3575 = vsel %vm851, %v3550, -inf
        %3576 = vmax.xlane.f32.xlu0 %v3575
        %v3577 = vpop.xlane.xlu0 %3576
        %v3578 = vsel %vm851, %v3553, -inf
        %3579 = vmax.xlane.f32.xlu0 %v3578
        %v3580 = vpop.xlane.xlu0 %3579
        %v3581 = vsel %vm851, %v3558, -inf
        %3582 = vmax.xlane.f32.xlu0 %v3581
        %v3583 = vpop.xlane.xlu0 %3582
        %v3584 = vsub.f32 %v3534, %v3565
        %v3585 = vsub.f32 %v3537, %v3568
        %v3586 = vsub.f32 %v3542, %v3571
        %v3587 = vsub.f32 %v3545, %v3574
        %v3588 = vsub.f32 %v3550, %v3577
        %v3589 = vsub.f32 %v3553, %v3580
        %v3590 = vsub.f32 %v3558, %v3583
        %v3591 = vmul.f32 %v3584, 1.442695
        %v3592 = vpow.pop %v3591
        %v3593 = vmul.f32 %v3585, 1.442695
        %v3594 = vpow.pop %v3593
        %v3595 = vmul.f32 %v3586, 1.442695
        %v3596 = vpow.pop %v3595
        %v3597 = vmul.f32 %v3587, 1.442695
        %v3598 = vpow.pop %v3597
        %v3599 = vmul.f32 %v3588, 1.442695
        %v3600 = vpow.pop %v3599
        %v3601 = vmul.f32 %v3589, 1.442695
        %v3602 = vpow.pop %v3601
        %v3603 = vmul.f32 %v3590, 1.442695
        %v3604 = vpow.pop %v3603
        %v3605 = vsel %vm851, %v3592, 0.0
        %3606 = vadd.xlane.f32.xlu0 %v3605
        %v3607 = vpop.xlane.xlu0 %3606
        %v3608 = vsel %vm851, %v3594, 0.0
        %3609 = vadd.xlane.f32.xlu0 %v3608
        %v3610 = vpop.xlane.xlu0 %3609
        %v3611 = vsel %vm851, %v3596, 0.0
        %3612 = vadd.xlane.f32.xlu0 %v3611
        %v3613 = vpop.xlane.xlu0 %3612
        %v3614 = vsel %vm851, %v3598, 0.0
        %3615 = vadd.xlane.f32.xlu0 %v3614
        %v3616 = vpop.xlane.xlu0 %3615
        %v3617 = vsel %vm851, %v3600, 0.0
        %3618 = vadd.xlane.f32.xlu0 %v3617
        %v3619 = vpop.xlane.xlu0 %3618
        %v3620 = vsel %vm851, %v3602, 0.0
        %3621 = vadd.xlane.f32.xlu0 %v3620
        %v3622 = vpop.xlane.xlu0 %3621
        %v3623 = vsel %vm851, %v3604, 0.0
        %3624 = vadd.xlane.f32.xlu0 %v3623
        %v3625 = vpop.xlane.xlu0 %3624
        %v3626 = vrcp.pop %v3607
        %v3627 = vrcp.pop %v3610
        %v3628 = vrcp.pop %v3613
        %v3629 = vrcp.pop %v3616
        %v3630 = vrcp.pop %v3619
        %v3631 = vrcp.pop %v3622
        %v3632 = vrcp.pop %v3625
        %v3633 = vmul.f32 %v3592, %v3626
        %v3634 = vmul.f32 %v3594, %v3627
        %v3635 = vmul.f32 %v3596, %v3628
        %v3636 = vmul.f32 %v3598, %v3629
        %v3637 = vmul.f32 %v3600, %v3630
        %v3638 = vmul.f32 %v3602, %v3631
        %v3639 = vmul.f32 %v3604, %v3632
        %v3640 = vpack.c.bf16 %v3634, %v3633
        %v3641 = vpack.c.bf16 %v3636, %v3635
        %v3642 = vpack.c.bf16 %v3638, %v3637
        %v3643 = vpack.c.bf16 %v3639, %v3639
        %3644 = vrot.lane.b32.xlu0 %v2634, 40
        %v3645 = vpop.permute.xlu0 %3644
        %3646 = vrot.lane.b32.xlu0 %v2635, 40
        %v3647 = vpop.permute.xlu0 %3646
        %3648 = vrot.lane.b32.xlu0 %v2636, 40
        %v3649 = vpop.permute.xlu0 %3648
        %3650 = vrot.lane.b32.xlu0 %v2637, 40
        %v3651 = vpop.permute.xlu0 %3650
        %v3656 = vsel %vm851, %v3640, 0
        %v3659 = vsel %vm851, %v3641, 0
        %v3662 = vsel %vm851, %v3642, 0
        %v3665 = vsel %vm851, %v3643, 0
        %v3668 = vsel %vm537, %v3651, 0
        %3670 = vmatprep.subr.bf16.mxu0 0
        %3671 = vmatpush1.bf16.msra.mxu0 0
        %3672 = vmatprep.subr.bf16.mxu0 0
        %3673 = vmatpush1.bf16.msra.mxu0 0
        %3674 = vmatprep.subr.bf16.mxu0 0
        %3675 = vmatpush1.bf16.msra.mxu0 0
        %3676 = vmatprep.subr.bf16.mxu0 0
        %3677 = vmatpush1.bf16.msra.mxu0 0
        %3678 = vmatprep.subr.bf16.mxu0 0
        %3679 = vmatpush1.bf16.msra.mxu0 %v3668
        %3680 = vmatprep.subr.bf16.mxu0 0
        %3681 = vmatpush1.bf16.msra.mxu0 %v3649
        %3682 = vmatprep.subr.bf16.mxu0 0
        %3683 = vmatpush1.bf16.msra.mxu0 %v3647
        %3684 = vmatprep.subr.bf16.mxu0 0
        %3685 = vmatpush1.bf16.msra.mxu0 %v3645
        %3686 = vmatprep.subr.bf16.mxu0 0
        %3687 = vmatpush2.bf16.msra.mxu0 0
        %3688 = vmatprep.subr.bf16.mxu0 0
        %3689 = vmatpush2.bf16.msra.mxu0 0
        %3690 = vmatprep.subr.bf16.mxu0 0
        %3691 = vmatpush2.bf16.msra.mxu0 0
        %3692 = vmatprep.subr.bf16.mxu0 0
        %3693 = vmatpush2.bf16.msra.mxu0 0
        %3694 = vmatprep.subr.bf16.mxu0 0
        %3695 = vmatpush2.bf16.msra.mxu0 0
        %3696 = vmatprep.subr.bf16.mxu0 0
        %3697 = vmatpush2.bf16.msra.mxu0 0
        %3698 = vmatprep.subr.bf16.mxu0 0
        %3699 = vmatpush2.bf16.msra.mxu0 0
        %3700 = vmatprep.subr.bf16.mxu0 0
        %3701 = vmatpush2.bf16.msra.mxu0 0
        %3702 = vmatprep.mubr.bf16.mxu0 0
        %3703 = vmatmul.mubr.bf16.gmra.mxu0 %v3656
        %v3704 = vpop.f32.mrf.mxu0
        %v3705 = vadd.f32 0.0, %v3704
        %v3706 = vpop.f32.mrf.mxu0
        %v3707 = vpop.f32.mrf.mxu0
        %v3708 = vadd.f32 0.0, %v3707
        %v3709 = vpop.f32.mrf.mxu0
        %3710 = vmatprep.mubr.bf16.mxu0 0
        %3711 = vmatmul.mubr.bf16.gmra.mxu0 %v3659
        %v3712 = vpop.f32.mrf.mxu0
        %v3713 = vadd.f32 0.0, %v3712
        %v3714 = vpop.f32.mrf.mxu0
        %v3715 = vpop.f32.mrf.mxu0
        %v3716 = vadd.f32 0.0, %v3715
        %v3717 = vpop.f32.mrf.mxu0
        %3718 = vmatprep.mubr.bf16.mxu0 0
        %3719 = vmatmul.mubr.bf16.gmra.mxu0 %v3662
        %v3720 = vpop.f32.mrf.mxu0
        %v3721 = vadd.f32 0.0, %v3720
        %v3722 = vpop.f32.mrf.mxu0
        %v3723 = vpop.f32.mrf.mxu0
        %v3724 = vadd.f32 0.0, %v3723
        %v3725 = vpop.f32.mrf.mxu0
        %3726 = vmatprep.mubr.bf16.mxu0 0
        %3727 = vmatmul.mubr.bf16.gmra.mxu0 %v3665
        %v3728 = vpop.f32.mrf.mxu0
        %v3729 = vadd.f32 0.0, %v3728
        %v3730 = vpop.f32.mrf.mxu0
        %v3731 = vpop.f32.mrf.mxu0
        %v3732 = vpop.f32.mrf.mxu0
        %3733 = vdwg.mxu0
        %3741 = vrot.lane.b32.xlu0 %v3155, 8
        %v3742 = vpop.permute.xlu0 %3741
        %3743 = vrot.lane.b32.xlu0 %v3158, 8
        %v3744 = vpop.permute.xlu0 %3743
        %3745 = vrot.lane.b32.xlu0 %v3163, 8
        %v3746 = vpop.permute.xlu0 %3745
        %3747 = vrot.lane.b32.xlu0 %v3166, 8
        %v3748 = vpop.permute.xlu0 %3747
        %3749 = vrot.lane.b32.xlu0 %v3171, 8
        %v3750 = vpop.permute.xlu0 %3749
        %3751 = vrot.lane.b32.xlu0 %v3174, 8
        %v3752 = vpop.permute.xlu0 %3751
        %3753 = vrot.lane.b32.xlu0 %v3179, 8
        %v3754 = vpop.permute.xlu0 %3753
        %3769 = vrot.lane.b32.xlu0 %v3430, 16
        %v3770 = vpop.permute.xlu0 %3769
        %3771 = vrot.lane.b32.xlu0 %v3433, 16
        %v3772 = vpop.permute.xlu0 %3771
        %3773 = vrot.lane.b32.xlu0 %v3438, 16
        %v3774 = vpop.permute.xlu0 %3773
        %3775 = vrot.lane.b32.xlu0 %v3441, 16
        %v3776 = vpop.permute.xlu0 %3775
        %3777 = vrot.lane.b32.xlu0 %v3446, 16
        %v3778 = vpop.permute.xlu0 %3777
        %3779 = vrot.lane.b32.xlu0 %v3449, 16
        %v3780 = vpop.permute.xlu0 %3779
        %3781 = vrot.lane.b32.xlu0 %v3454, 16
        %v3782 = vpop.permute.xlu0 %3781
        %3797 = vrot.lane.b32.xlu0 %v3705, 24
        %v3798 = vpop.permute.xlu0 %3797
        %3799 = vrot.lane.b32.xlu0 %v3708, 24
        %v3800 = vpop.permute.xlu0 %3799
        %3801 = vrot.lane.b32.xlu0 %v3713, 24
        %v3802 = vpop.permute.xlu0 %3801
        %3803 = vrot.lane.b32.xlu0 %v3716, 24
        %v3804 = vpop.permute.xlu0 %3803
        %3805 = vrot.lane.b32.xlu0 %v3721, 24
        %v3806 = vpop.permute.xlu0 %3805
        %3807 = vrot.lane.b32.xlu0 %v3724, 24
        %v3808 = vpop.permute.xlu0 %3807
        %3809 = vrot.lane.b32.xlu0 %v3729, 24
        %v3810 = vpop.permute.xlu0 %3809
        %v3818 = vsel %vm524, %v2880, %v3742
        %v3819 = vsel %vm524, %v2883, %v3744
        %v3820 = vsel %vm524, %v2888, %v3746
        %v3821 = vsel %vm524, %v2891, %v3748
        %v3822 = vsel %vm524, %v2896, %v3750
        %v3823 = vsel %vm524, %v2899, %v3752
        %v3824 = vsel %vm524, %v2904, %v3754
        %v3825 = vsel %vm1939, %v3818, %v3770
        %v3826 = vsel %vm1939, %v3819, %v3772
        %v3827 = vsel %vm1939, %v3820, %v3774
        %v3828 = vsel %vm1939, %v3821, %v3776
        %v3829 = vsel %vm1939, %v3822, %v3778
        %v3830 = vsel %vm1939, %v3823, %v3780
        %v3831 = vsel %vm1939, %v3824, %v3782
        %v3832 = vsel %vm1947, %v3825, %v3798
        %v3833 = vsel %vm1947, %v3826, %v3800
        %v3834 = vsel %vm1947, %v3827, %v3802
        %v3835 = vsel %vm1947, %v3828, %v3804
        %v3836 = vsel %vm1947, %v3829, %v3806
        %v3837 = vsel %vm1947, %v3830, %v3808
        %v3838 = vsel %vm1947, %v3831, %v3810
        %v3839 = vpack.c.bf16 %v3833, %v3832
        %v3840 = vpack.c.bf16 %v3835, %v3834
        %v3841 = vpack.c.bf16 %v3837, %v3836
        %v3842 = vpack.c.bf16 %v3838, %v3838
        %v3843 = vlaneseq
        %v3844 = vshrl.u32 %v3843, 7
        %v3845 = vsub.s32 0, %v3844
        %v3846 = vrot.slane %v2519, %v3845
        %v3851 = vunpack.c.l.b16 %v2514
        %v3852 = vunpack.c.l.b16 %v2515
        %v3853 = vunpack.c.l.b16 %v2516
        %v3854 = vunpack.c.l.b16 %v2517
        %v3855 = vpack.c.b16 %v3852, %v3851
        %v3856 = vpack.c.b16 %v3854, %v3853
        %v3860 = vsel %vm664, %v3839, 0
        %v3863 = vsel %vm664, %v3840, 0
        %v3866 = vsel %vm664, %v3841, 0
        %v3869 = vsel %vm664, %v3842, 0
        %3871 = vmatprep.subr.bf16.mxu0 0
        %3872 = vmatpush1.bf16.msra.mxu0 0
        %3873 = vmatprep.subr.bf16.mxu0 0
        %3874 = vmatpush1.bf16.msra.mxu0 0
        %3875 = vmatprep.subr.bf16.mxu0 0
        %3876 = vmatpush1.bf16.msra.mxu0 0
        %3877 = vmatprep.subr.bf16.mxu0 0
        %3878 = vmatpush1.bf16.msra.mxu0 0
        %3879 = vmatprep.subr.bf16.mxu0 0
        %3880 = vmatpush1.bf16.msra.mxu0 0
        %3881 = vmatprep.subr.bf16.mxu0 0
        %3882 = vmatpush1.bf16.msra.mxu0 0
        %3883 = vmatprep.subr.bf16.mxu0 0
        %3884 = vmatpush1.bf16.msra.mxu0 %v3856
        %3885 = vmatprep.subr.bf16.mxu0 0
        %3886 = vmatpush1.bf16.msra.mxu0 %v3855
        %3887 = vmatprep.subr.bf16.mxu0 0
        %3888 = vmatpush2.bf16.msra.mxu0 0
        %3889 = vmatprep.subr.bf16.mxu0 0
        %3890 = vmatpush2.bf16.msra.mxu0 0
        %3891 = vmatprep.subr.bf16.mxu0 0
        %3892 = vmatpush2.bf16.msra.mxu0 0
        %3893 = vmatprep.subr.bf16.mxu0 0
        %3894 = vmatpush2.bf16.msra.mxu0 0
        %3895 = vmatprep.subr.bf16.mxu0 0
        %3896 = vmatpush2.bf16.msra.mxu0 0
        %3897 = vmatprep.subr.bf16.mxu0 0
        %3898 = vmatpush2.bf16.msra.mxu0 0
        %3899 = vmatprep.subr.bf16.mxu0 0
        %3900 = vmatpush2.bf16.msra.mxu0 0
        %3901 = vmatprep.subr.bf16.mxu0 0
        %3902 = vmatpush2.bf16.msra.mxu0 0
        %3903 = vmatprep.mubr.bf16.mxu0 0
        %3904 = vmatmul.mubr.bf16.gmra.mxu0 %v3860
        %v3905 = vpop.f32.mrf.mxu0
        %v3906 = vadd.f32 %v3846, %v3905
        %v3907 = vpop.f32.mrf.mxu0
        %v3908 = vpop.f32.mrf.mxu0
        %v3909 = vadd.f32 %v3846, %v3908
        %v3910 = vpop.f32.mrf.mxu0
        %3911 = vmatprep.mubr.bf16.mxu0 0
        %3912 = vmatmul.mubr.bf16.gmra.mxu0 %v3863
        %v3913 = vpop.f32.mrf.mxu0
        %v3914 = vadd.f32 %v3846, %v3913
        %v3915 = vpop.f32.mrf.mxu0
        %v3916 = vpop.f32.mrf.mxu0
        %v3917 = vadd.f32 %v3846, %v3916
        %v3918 = vpop.f32.mrf.mxu0
        %3919 = vmatprep.mubr.bf16.mxu0 0
        %3920 = vmatmul.mubr.bf16.gmra.mxu0 %v3866
        %v3921 = vpop.f32.mrf.mxu0
        %v3922 = vadd.f32 %v3846, %v3921
        %v3923 = vpop.f32.mrf.mxu0
        %v3924 = vpop.f32.mrf.mxu0
        %v3925 = vadd.f32 %v3846, %v3924
        %v3926 = vpop.f32.mrf.mxu0
        %3927 = vmatprep.mubr.bf16.mxu0 0
        %3928 = vmatmul.mubr.bf16.gmra.mxu0 %v3869
        %v3929 = vpop.f32.mrf.mxu0
        %v3930 = vadd.f32 %v3846, %v3929
        %v3931 = vpop.f32.mrf.mxu0
        %v3932 = vpop.f32.mrf.mxu0
        %v3933 = vpop.f32.mrf.mxu0
        %3934 = vdwg.mxu0
        %v3935 = vadd.f32 %v2499, %v3906
        %v3936 = vadd.f32 %v2500, %v3909
        %v3937 = vadd.f32 %v2501, %v3914
        %v3938 = vadd.f32 %v2502, %v3917
        %v3939 = vadd.f32 %v2503, %v3922
        %v3940 = vadd.f32 %v2504, %v3925
        %v3941 = vadd.f32 %v2505, %v3930
        %v3942 = vsel %vm664, %v3935, 0.0
        %3943 = vadd.xlane.f32.xlu0 %v3942
        %v3944 = vpop.xlane.xlu0 %3943
        %v3945 = vsel %vm664, %v3936, 0.0
        %3946 = vadd.xlane.f32.xlu0 %v3945
        %v3947 = vpop.xlane.xlu0 %3946
        %v3948 = vsel %vm664, %v3937, 0.0
        %3949 = vadd.xlane.f32.xlu0 %v3948
        %v3950 = vpop.xlane.xlu0 %3949
        %v3951 = vsel %vm664, %v3938, 0.0
        %3952 = vadd.xlane.f32.xlu0 %v3951
        %v3953 = vpop.xlane.xlu0 %3952
        %v3954 = vsel %vm664, %v3939, 0.0
        %3955 = vadd.xlane.f32.xlu0 %v3954
        %v3956 = vpop.xlane.xlu0 %3955
        %v3957 = vsel %vm664, %v3940, 0.0
        %3958 = vadd.xlane.f32.xlu0 %v3957
        %v3959 = vpop.xlane.xlu0 %3958
        %v3960 = vsel %vm664, %v3941, 0.0
        %3961 = vadd.xlane.f32.xlu0 %v3960
        %v3962 = vpop.xlane.xlu0 %3961
        %v3963 = vmul.f32 %v3944, %v2079
        %v3964 = vmul.f32 %v3947, %v2079
        %v3965 = vmul.f32 %v3950, %v2079
        %v3966 = vmul.f32 %v3953, %v2079
        %v3967 = vmul.f32 %v3956, %v2079
        %v3968 = vmul.f32 %v3959, %v2079
        %v3969 = vmul.f32 %v3962, %v2079
        %v3970 = vsub.f32 %v3935, %v3963
        %v3971 = vsub.f32 %v3936, %v3964
        %v3972 = vsub.f32 %v3937, %v3965
        %v3973 = vsub.f32 %v3938, %v3966
        %v3974 = vsub.f32 %v3939, %v3967
        %v3975 = vsub.f32 %v3940, %v3968
        %v3976 = vsub.f32 %v3941, %v3969
        %v3977 = vmul.f32 %v3970, %v3970
        %v3978 = vmul.f32 %v3971, %v3971
        %v3979 = vmul.f32 %v3972, %v3972
        %v3980 = vmul.f32 %v3973, %v3973
        %v3981 = vmul.f32 %v3974, %v3974
        %v3982 = vmul.f32 %v3975, %v3975
        %v3983 = vmul.f32 %v3976, %v3976
        %v3984 = vsel %vm664, %v3977, 0.0
        %3985 = vadd.xlane.f32.xlu0 %v3984
        %v3986 = vpop.xlane.xlu0 %3985
        %v3987 = vsel %vm664, %v3978, 0.0
        %3988 = vadd.xlane.f32.xlu0 %v3987
        %v3989 = vpop.xlane.xlu0 %3988
        %v3990 = vsel %vm664, %v3979, 0.0
        %3991 = vadd.xlane.f32.xlu0 %v3990
        %v3992 = vpop.xlane.xlu0 %3991
        %v3993 = vsel %vm664, %v3980, 0.0
        %3994 = vadd.xlane.f32.xlu0 %v3993
        %v3995 = vpop.xlane.xlu0 %3994
        %v3996 = vsel %vm664, %v3981, 0.0
        %3997 = vadd.xlane.f32.xlu0 %v3996
        %v3998 = vpop.xlane.xlu0 %3997
        %v3999 = vsel %vm664, %v3982, 0.0
        %4000 = vadd.xlane.f32.xlu0 %v3999
        %v4001 = vpop.xlane.xlu0 %4000
        %v4002 = vsel %vm664, %v3983, 0.0
        %4003 = vadd.xlane.f32.xlu0 %v4002
        %v4004 = vpop.xlane.xlu0 %4003
        %v4005 = vmul.f32 %v3986, %v2079
        %v4006 = vmul.f32 %v3989, %v2079
        %v4007 = vmul.f32 %v3992, %v2079
        %v4008 = vmul.f32 %v3995, %v2079
        %v4009 = vmul.f32 %v3998, %v2079
        %v4010 = vmul.f32 %v4001, %v2079
        %v4011 = vmul.f32 %v4004, %v2079
        %v4012 = vadd.f32 %v4005, 1e-05
        %v4013 = vadd.f32 %v4006, 1e-05
        %v4014 = vadd.f32 %v4007, 1e-05
        %v4015 = vadd.f32 %v4008, 1e-05
        %v4016 = vadd.f32 %v4009, 1e-05
        %v4017 = vadd.f32 %v4010, 1e-05
        %v4018 = vadd.f32 %v4011, 1e-05
        %v4019 = vrsqrt.pop %v4012
        %v4020 = vrsqrt.pop %v4013
        %v4021 = vrsqrt.pop %v4014
        %v4022 = vrsqrt.pop %v4015
        %v4023 = vrsqrt.pop %v4016
        %v4024 = vrsqrt.pop %v4017
        %v4025 = vrsqrt.pop %v4018
        %v4026 = vmul.f32 %v3970, %v4019
        %v4027 = vmul.f32 %v3971, %v4020
        %v4028 = vmul.f32 %v3972, %v4021
        %v4029 = vmul.f32 %v3973, %v4022
        %v4030 = vmul.f32 %v3974, %v4023
        %v4031 = vmul.f32 %v3975, %v4024
        %v4032 = vmul.f32 %v3976, %v4025
        %v4033 = vlaneseq
        %v4034 = vshrl.u32 %v4033, 7
        %v4035 = vsub.s32 1, %v4034
        %v4036 = vrot.slane %v2519, %v4035
        %v4037 = vmul.f32 %v4026, %v4036
        %v4038 = vmul.f32 %v4027, %v4036
        %v4039 = vmul.f32 %v4028, %v4036
        %v4040 = vmul.f32 %v4029, %v4036
        %v4041 = vmul.f32 %v4030, %v4036
        %v4042 = vmul.f32 %v4031, %v4036
        %v4043 = vmul.f32 %v4032, %v4036
        %v4044 = vlaneseq
        %v4045 = vshrl.u32 %v4044, 7
        %v4046 = vsub.s32 2, %v4045
        %v4047 = vrot.slane %v2519, %v4046
        %v4048 = vadd.f32 %v4037, %v4047
        %v4049 = vadd.f32 %v4038, %v4047
        %v4050 = vadd.f32 %v4039, %v4047
        %v4051 = vadd.f32 %v4040, %v4047
        %v4052 = vadd.f32 %v4041, %v4047
        %v4053 = vadd.f32 %v4042, %v4047
        %v4054 = vadd.f32 %v4043, %v4047
        %v4055 = vpack.c.bf16 %v4049, %v4048
        %v4056 = vpack.c.bf16 %v4051, %v4050
        %v4057 = vpack.c.bf16 %v4053, %v4052
        %v4058 = vpack.c.bf16 %v4054, %v4054
        %v4060 = vlaneseq
        %v4061 = vshrl.u32 %v4060, 7
        %v4062 = vsub.s32 0, %v4061
        %v4063 = vrot.slane %v2526, %v4062
        %v4069 = vunpack.c.l.b16 %v2521
        %v4070 = vunpack.c.l.b16 %v2522
        %v4071 = vunpack.c.l.b16 %v2523
        %v4072 = vunpack.c.l.b16 %v2524
        %v4073 = vpack.c.b16 %v4070, %v4069
        %v4074 = vpack.c.b16 %v4072, %v4071
        %v4078 = vsel %vm664, %v4055, 0
        %v4081 = vsel %vm664, %v4056, 0
        %v4084 = vsel %vm664, %v4057, 0
        %v4087 = vsel %vm664, %v4058, 0
        %4089 = vmatprep.subr.bf16.mxu0 0
        %4090 = vmatpush1.bf16.msra.mxu0 0
        %4091 = vmatprep.subr.bf16.mxu0 0
        %4092 = vmatpush1.bf16.msra.mxu0 0
        %4093 = vmatprep.subr.bf16.mxu0 0
        %4094 = vmatpush1.bf16.msra.mxu0 0
        %4095 = vmatprep.subr.bf16.mxu0 0
        %4096 = vmatpush1.bf16.msra.mxu0 0
        %4097 = vmatprep.subr.bf16.mxu0 0
        %4098 = vmatpush1.bf16.msra.mxu0 0
        %4099 = vmatprep.subr.bf16.mxu0 0
        %4100 = vmatpush1.bf16.msra.mxu0 0
        %4101 = vmatprep.subr.bf16.mxu0 0
        %4102 = vmatpush1.bf16.msra.mxu0 %v4074
        %4103 = vmatprep.subr.bf16.mxu0 0
        %4104 = vmatpush1.bf16.msra.mxu0 %v4073
        %4105 = vmatprep.subr.bf16.mxu0 0
        %4106 = vmatpush2.bf16.msra.mxu0 0
        %4107 = vmatprep.subr.bf16.mxu0 0
        %4108 = vmatpush2.bf16.msra.mxu0 0
        %4109 = vmatprep.subr.bf16.mxu0 0
        %4110 = vmatpush2.bf16.msra.mxu0 0
        %4111 = vmatprep.subr.bf16.mxu0 0
        %4112 = vmatpush2.bf16.msra.mxu0 0
        %4113 = vmatprep.subr.bf16.mxu0 0
        %4114 = vmatpush2.bf16.msra.mxu0 0
        %4115 = vmatprep.subr.bf16.mxu0 0
        %4116 = vmatpush2.bf16.msra.mxu0 0
        %4117 = vmatprep.subr.bf16.mxu0 0
        %4118 = vmatpush2.bf16.msra.mxu0 0
        %4119 = vmatprep.subr.bf16.mxu0 0
        %4120 = vmatpush2.bf16.msra.mxu0 0
        %4121 = vmatprep.mubr.bf16.mxu0 0
        %4122 = vmatmul.mubr.bf16.gmra.mxu0 %v4078
        %v4123 = vpop.f32.mrf.mxu0
        %v4124 = vadd.f32 %v4063, %v4123
        %v4125 = vpop.f32.mrf.mxu0
        %v4126 = vpop.f32.mrf.mxu0
        %v4127 = vadd.f32 %v4063, %v4126
        %v4128 = vpop.f32.mrf.mxu0
        %4129 = vmatprep.mubr.bf16.mxu0 0
        %4130 = vmatmul.mubr.bf16.gmra.mxu0 %v4081
        %v4131 = vpop.f32.mrf.mxu0
        %v4132 = vadd.f32 %v4063, %v4131
        %v4133 = vpop.f32.mrf.mxu0
        %v4134 = vpop.f32.mrf.mxu0
        %v4135 = vadd.f32 %v4063, %v4134
        %v4136 = vpop.f32.mrf.mxu0
        %4137 = vmatprep.mubr.bf16.mxu0 0
        %4138 = vmatmul.mubr.bf16.gmra.mxu0 %v4084
        %v4139 = vpop.f32.mrf.mxu0
        %v4140 = vadd.f32 %v4063, %v4139
        %v4141 = vpop.f32.mrf.mxu0
        %v4142 = vpop.f32.mrf.mxu0
        %v4143 = vadd.f32 %v4063, %v4142
        %v4144 = vpop.f32.mrf.mxu0
        %4145 = vmatprep.mubr.bf16.mxu0 0
        %4146 = vmatmul.mubr.bf16.gmra.mxu0 %v4087
        %v4147 = vpop.f32.mrf.mxu0
        %v4148 = vadd.f32 %v4063, %v4147
        %v4149 = vpop.f32.mrf.mxu0
        %v4150 = vpop.f32.mrf.mxu0
        %v4151 = vpop.f32.mrf.mxu0
        %4152 = vdwg.mxu0
        %v4153 = vmax.f32 %v4124, 0.0
        %v4154 = vmax.f32 %v4127, 0.0
        %v4155 = vmax.f32 %v4132, 0.0
        %v4156 = vmax.f32 %v4135, 0.0
        %v4157 = vmax.f32 %v4140, 0.0
        %v4158 = vmax.f32 %v4143, 0.0
        %v4159 = vmax.f32 %v4148, 0.0
        %v4160 = vpack.c.bf16 %v4154, %v4153
        %v4161 = vpack.c.bf16 %v4156, %v4155
        %v4162 = vpack.c.bf16 %v4158, %v4157
        %v4163 = vpack.c.bf16 %v4159, %v4159
        %v4164 = vlaneseq
        %v4165 = vshrl.u32 %v4164, 7
        %v4166 = vsub.s32 3, %v4165
        %v4167 = vrot.slane %v2519, %v4166
        %v4176 = vunpack.c.l.b16 %v2528
        %v4177 = vunpack.c.l.b16 %v2529
        %v4178 = vunpack.c.l.b16 %v2530
        %v4179 = vunpack.c.l.b16 %v2531
        %v4180 = vunpack.c.l.b16 %v2532
        %v4181 = vunpack.c.l.b16 %v2533
        %v4182 = vunpack.c.l.b16 %v2534
        %v4183 = vunpack.c.l.b16 %v2535
        %v4184 = vpack.c.b16 %v4177, %v4176
        %v4185 = vpack.c.b16 %v4179, %v4178
        %v4186 = vpack.c.b16 %v4181, %v4180
        %v4187 = vpack.c.b16 %v4183, %v4182
        %v4193 = vsel %vm2309, %v4160, 0
        %v4196 = vsel %vm2309, %v4161, 0
        %v4199 = vsel %vm2309, %v4162, 0
        %v4202 = vsel %vm2309, %v4163, 0
        %4204 = vmatprep.subr.bf16.mxu0 0
        %4205 = vmatpush1.bf16.msra.mxu0 0
        %4206 = vmatprep.subr.bf16.mxu0 0
        %4207 = vmatpush1.bf16.msra.mxu0 0
        %4208 = vmatprep.subr.bf16.mxu0 0
        %4209 = vmatpush1.bf16.msra.mxu0 0
        %4210 = vmatprep.subr.bf16.mxu0 0
        %4211 = vmatpush1.bf16.msra.mxu0 0
        %4212 = vmatprep.subr.bf16.mxu0 0
        %4213 = vmatpush1.bf16.msra.mxu0 %v4187
        %4214 = vmatprep.subr.bf16.mxu0 0
        %4215 = vmatpush1.bf16.msra.mxu0 %v4186
        %4216 = vmatprep.subr.bf16.mxu0 0
        %4217 = vmatpush1.bf16.msra.mxu0 %v4185
        %4218 = vmatprep.subr.bf16.mxu0 0
        %4219 = vmatpush1.bf16.msra.mxu0 %v4184
        %4220 = vmatprep.subr.bf16.mxu0 0
        %4221 = vmatpush2.bf16.msra.mxu0 0
        %4222 = vmatprep.subr.bf16.mxu0 0
        %4223 = vmatpush2.bf16.msra.mxu0 0
        %4224 = vmatprep.subr.bf16.mxu0 0
        %4225 = vmatpush2.bf16.msra.mxu0 0
        %4226 = vmatprep.subr.bf16.mxu0 0
        %4227 = vmatpush2.bf16.msra.mxu0 0
        %4228 = vmatprep.subr.bf16.mxu0 0
        %4229 = vmatpush2.bf16.msra.mxu0 0
        %4230 = vmatprep.subr.bf16.mxu0 0
        %4231 = vmatpush2.bf16.msra.mxu0 0
        %4232 = vmatprep.subr.bf16.mxu0 0
        %4233 = vmatpush2.bf16.msra.mxu0 0
        %4234 = vmatprep.subr.bf16.mxu0 0
        %4235 = vmatpush2.bf16.msra.mxu0 0
        %4236 = vmatprep.mubr.bf16.mxu0 0
        %4237 = vmatmul.mubr.bf16.gmra.mxu0 %v4193
        %v4238 = vpop.f32.mrf.mxu0
        %v4239 = vadd.f32 %v4167, %v4238
        %v4240 = vpop.f32.mrf.mxu0
        %v4241 = vpop.f32.mrf.mxu0
        %v4242 = vadd.f32 %v4167, %v4241
        %v4243 = vpop.f32.mrf.mxu0
        %4244 = vmatprep.mubr.bf16.mxu0 0
        %4245 = vmatmul.mubr.bf16.gmra.mxu0 %v4196
        %v4246 = vpop.f32.mrf.mxu0
        %v4247 = vadd.f32 %v4167, %v4246
        %v4248 = vpop.f32.mrf.mxu0
        %v4249 = vpop.f32.mrf.mxu0
        %v4250 = vadd.f32 %v4167, %v4249
        %v4251 = vpop.f32.mrf.mxu0
        %4252 = vmatprep.mubr.bf16.mxu0 0
        %4253 = vmatmul.mubr.bf16.gmra.mxu0 %v4199
        %v4254 = vpop.f32.mrf.mxu0
        %v4255 = vadd.f32 %v4167, %v4254
        %v4256 = vpop.f32.mrf.mxu0
        %v4257 = vpop.f32.mrf.mxu0
        %v4258 = vadd.f32 %v4167, %v4257
        %v4259 = vpop.f32.mrf.mxu0
        %4260 = vmatprep.mubr.bf16.mxu0 0
        %4261 = vmatmul.mubr.bf16.gmra.mxu0 %v4202
        %v4262 = vpop.f32.mrf.mxu0
        %v4263 = vadd.f32 %v4167, %v4262
        %v4264 = vpop.f32.mrf.mxu0
        %v4265 = vpop.f32.mrf.mxu0
        %v4266 = vpop.f32.mrf.mxu0
        %4267 = vdwg.mxu0
        %v4268 = vadd.f32 %v4048, %v4239
        %v4269 = vadd.f32 %v4049, %v4242
        %v4270 = vadd.f32 %v4050, %v4247
        %v4271 = vadd.f32 %v4051, %v4250
        %v4272 = vadd.f32 %v4052, %v4255
        %v4273 = vadd.f32 %v4053, %v4258
        %v4274 = vadd.f32 %v4054, %v4263
        %v4275 = vsel %vm664, %v4268, 0.0
        %4276 = vadd.xlane.f32.xlu0 %v4275
        %v4277 = vpop.xlane.xlu0 %4276
        %v4278 = vsel %vm664, %v4269, 0.0
        %4279 = vadd.xlane.f32.xlu0 %v4278
        %v4280 = vpop.xlane.xlu0 %4279
        %v4281 = vsel %vm664, %v4270, 0.0
        %4282 = vadd.xlane.f32.xlu0 %v4281
        %v4283 = vpop.xlane.xlu0 %4282
        %v4284 = vsel %vm664, %v4271, 0.0
        %4285 = vadd.xlane.f32.xlu0 %v4284
        %v4286 = vpop.xlane.xlu0 %4285
        %v4287 = vsel %vm664, %v4272, 0.0
        %4288 = vadd.xlane.f32.xlu0 %v4287
        %v4289 = vpop.xlane.xlu0 %4288
        %v4290 = vsel %vm664, %v4273, 0.0
        %4291 = vadd.xlane.f32.xlu0 %v4290
        %v4292 = vpop.xlane.xlu0 %4291
        %v4293 = vsel %vm664, %v4274, 0.0
        %4294 = vadd.xlane.f32.xlu0 %v4293
        %v4295 = vpop.xlane.xlu0 %4294
        %v4296 = vmul.f32 %v4277, %v2079
        %v4297 = vmul.f32 %v4280, %v2079
        %v4298 = vmul.f32 %v4283, %v2079
        %v4299 = vmul.f32 %v4286, %v2079
        %v4300 = vmul.f32 %v4289, %v2079
        %v4301 = vmul.f32 %v4292, %v2079
        %v4302 = vmul.f32 %v4295, %v2079
        %v4303 = vsub.f32 %v4268, %v4296
        %v4304 = vsub.f32 %v4269, %v4297
        %v4305 = vsub.f32 %v4270, %v4298
        %v4306 = vsub.f32 %v4271, %v4299
        %v4307 = vsub.f32 %v4272, %v4300
        %v4308 = vsub.f32 %v4273, %v4301
        %v4309 = vsub.f32 %v4274, %v4302
        %v4310 = vmul.f32 %v4303, %v4303
        %v4311 = vmul.f32 %v4304, %v4304
        %v4312 = vmul.f32 %v4305, %v4305
        %v4313 = vmul.f32 %v4306, %v4306
        %v4314 = vmul.f32 %v4307, %v4307
        %v4315 = vmul.f32 %v4308, %v4308
        %v4316 = vmul.f32 %v4309, %v4309
        %v4317 = vsel %vm664, %v4310, 0.0
        %4318 = vadd.xlane.f32.xlu0 %v4317
        %v4319 = vpop.xlane.xlu0 %4318
        %v4320 = vsel %vm664, %v4311, 0.0
        %4321 = vadd.xlane.f32.xlu0 %v4320
        %v4322 = vpop.xlane.xlu0 %4321
        %v4323 = vsel %vm664, %v4312, 0.0
        %4324 = vadd.xlane.f32.xlu0 %v4323
        %v4325 = vpop.xlane.xlu0 %4324
        %v4326 = vsel %vm664, %v4313, 0.0
        %4327 = vadd.xlane.f32.xlu0 %v4326
        %v4328 = vpop.xlane.xlu0 %4327
        %v4329 = vsel %vm664, %v4314, 0.0
        %4330 = vadd.xlane.f32.xlu0 %v4329
        %v4331 = vpop.xlane.xlu0 %4330
        %v4332 = vsel %vm664, %v4315, 0.0
        %4333 = vadd.xlane.f32.xlu0 %v4332
        %v4334 = vpop.xlane.xlu0 %4333
        %v4335 = vsel %vm664, %v4316, 0.0
        %4336 = vadd.xlane.f32.xlu0 %v4335
        %v4337 = vpop.xlane.xlu0 %4336
        %v4338 = vmul.f32 %v4319, %v2079
        %v4339 = vmul.f32 %v4322, %v2079
        %v4340 = vmul.f32 %v4325, %v2079
        %v4341 = vmul.f32 %v4328, %v2079
        %v4342 = vmul.f32 %v4331, %v2079
        %v4343 = vmul.f32 %v4334, %v2079
        %v4344 = vmul.f32 %v4337, %v2079
        %v4345 = vadd.f32 %v4338, 1e-05
        %v4346 = vadd.f32 %v4339, 1e-05
        %v4347 = vadd.f32 %v4340, 1e-05
        %v4348 = vadd.f32 %v4341, 1e-05
        %v4349 = vadd.f32 %v4342, 1e-05
        %v4350 = vadd.f32 %v4343, 1e-05
        %v4351 = vadd.f32 %v4344, 1e-05
        %v4352 = vrsqrt.pop %v4345
        %v4353 = vrsqrt.pop %v4346
        %v4354 = vrsqrt.pop %v4347
        %v4355 = vrsqrt.pop %v4348
        %v4356 = vrsqrt.pop %v4349
        %v4357 = vrsqrt.pop %v4350
        %v4358 = vrsqrt.pop %v4351
        %v4359 = vmul.f32 %v4303, %v4352
        %v4360 = vmul.f32 %v4304, %v4353
        %v4361 = vmul.f32 %v4305, %v4354
        %v4362 = vmul.f32 %v4306, %v4355
        %v4363 = vmul.f32 %v4307, %v4356
        %v4364 = vmul.f32 %v4308, %v4357
        %v4365 = vmul.f32 %v4309, %v4358
        %v4366 = vlaneseq
        %v4367 = vshrl.u32 %v4366, 7
        %v4368 = vsub.s32 4, %v4367
        %v4369 = vrot.slane %v2519, %v4368
        %v4370 = vmul.f32 %v4359, %v4369
        %v4371 = vmul.f32 %v4360, %v4369
        %v4372 = vmul.f32 %v4361, %v4369
        %v4373 = vmul.f32 %v4362, %v4369
        %v4374 = vmul.f32 %v4363, %v4369
        %v4375 = vmul.f32 %v4364, %v4369
        %v4376 = vmul.f32 %v4365, %v4369
        %v4377 = vlaneseq
        %v4378 = vshrl.u32 %v4377, 7
        %v4379 = vsub.s32 5, %v4378
        %v4380 = vrot.slane %v2519, %v4379
        %v4381 = vadd.f32 %v4370, %v4380
        %v4382 = vadd.f32 %v4371, %v4380
        %v4383 = vadd.f32 %v4372, %v4380
        %v4384 = vadd.f32 %v4373, %v4380
        %v4385 = vadd.f32 %v4374, %v4380
        %v4386 = vadd.f32 %v4375, %v4380
        %v4387 = vadd.f32 %v4376, %v4380
        %v4388 = vld [vmem:[%s495] sm:$0x1f]
        %v4390 = vsel %vm851, %v4388, 0
        %4392 = vmatprep.subr.mxu0 0.0
        %4393 = vmatpush1.msra.mxu0 0.0
        %4394 = vmatprep.subr.mxu0 0.0
        %4395 = vmatpush1.msra.mxu0 0.0
        %4396 = vmatprep.subr.mxu0 0.0
        %4397 = vmatpush1.msra.mxu0 0.0
        %4398 = vmatprep.subr.mxu0 0.0
        %4399 = vmatpush1.msra.mxu0 0.0
        %4400 = vmatprep.subr.mxu0 0.0
        %4401 = vmatpush1.msra.mxu0 0.0
        %4402 = vmatprep.subr.mxu0 0.0
        %4403 = vmatpush1.msra.mxu0 0.0
        %4404 = vmatprep.subr.mxu0 0.0
        %4405 = vmatpush1.msra.mxu0 0.0
        %4406 = vmatprep.subr.mxu0 0.0
        %4407 = vmatpush1.msra.mxu0 0.0
        %4408 = vmatprep.subr.mxu0 0.0
        %4409 = vmatpush1.msra.mxu0 0.0
        %4410 = vmatprep.subr.mxu0 0.0
        %4411 = vmatpush1.msra.mxu0 %v4387
        %4412 = vmatprep.subr.mxu0 0.0
        %4413 = vmatpush1.msra.mxu0 %v4386
        %4414 = vmatprep.subr.mxu0 0.0
        %4415 = vmatpush1.msra.mxu0 %v4385
        %4416 = vmatprep.subr.mxu0 0.0
        %4417 = vmatpush1.msra.mxu0 %v4384
        %4418 = vmatprep.subr.mxu0 0.0
        %4419 = vmatpush1.msra.mxu0 %v4383
        %4420 = vmatprep.subr.mxu0 0.0
        %4421 = vmatpush1.msra.mxu0 %v4382
        %4422 = vmatprep.subr.mxu0 0.0
        %4423 = vmatpush1.msra.mxu0 %v4381
        %4424 = vmatprep.subr.mxu0 0.0
        %4425 = vmatpush2.msra.mxu0 0.0
        %4426 = vmatprep.subr.mxu0 0.0
        %4427 = vmatpush2.msra.mxu0 0.0
        %4428 = vmatprep.subr.mxu0 0.0
        %4429 = vmatpush2.msra.mxu0 0.0
        %4430 = vmatprep.subr.mxu0 0.0
        %4431 = vmatpush2.msra.mxu0 0.0
        %4432 = vmatprep.subr.mxu0 0.0
        %4433 = vmatpush2.msra.mxu0 0.0
        %4434 = vmatprep.subr.mxu0 0.0
        %4435 = vmatpush2.msra.mxu0 0.0
        %4436 = vmatprep.subr.mxu0 0.0
        %4437 = vmatpush2.msra.mxu0 0.0
        %4438 = vmatprep.subr.mxu0 0.0
        %4439 = vmatpush2.msra.mxu0 0.0
        %4440 = vmatprep.subr.mxu0 0.0
        %4441 = vmatpush2.msra.mxu0 0.0
        %4442 = vmatprep.subr.mxu0 0.0
        %4443 = vmatpush2.msra.mxu0 0.0
        %4444 = vmatprep.subr.mxu0 0.0
        %4445 = vmatpush2.msra.mxu0 0.0
        %4446 = vmatprep.subr.mxu0 0.0
        %4447 = vmatpush2.msra.mxu0 0.0
        %4448 = vmatprep.subr.mxu0 0.0
        %4449 = vmatpush2.msra.mxu0 0.0
        %4450 = vmatprep.subr.mxu0 0.0
        %4451 = vmatpush2.msra.mxu0 0.0
        %4452 = vmatprep.subr.mxu0 0.0
        %4453 = vmatpush2.msra.mxu0 0.0
        %4454 = vmatprep.subr.mxu0 0.0
        %4455 = vmatpush2.msra.mxu0 0.0
        %4456 = vmatprep.mubr.f32.mxu0 0.0
        %4457 = vmatmul.mubr.f32.gmra.mxu0 %v4390
        %v4458 = vpop.f32.mrf.mxu0
        %v4459 = vadd.f32 0.0, %v4458
        %v4460 = vpop.f32.mrf.mxu0
        %4461 = vdwg.mxu0
        %v4463 = vunpack.c.l.s4 1983009808
        %v4464 = vunpack.c.0.s8 %v4463
        %v4465 = vlaneseq
        %v4466 = vshrl.u32 %v4465, 7
        %v4467 = vsub.s32 %v4464, %v4466
        %v4468 = vrot.slane %v4459, %v4467
        %v4469 = vcombine.high %v4468, 0.0
        %v4471 = vunpack.c.l.s4 1934713408
        %v4472 = vunpack.c.0.s8 %v4471
        %v4473 = vlaneseq
        %v4474 = vshrl.u32 %v4473, 7
        %v4475 = vsub.s32 %v4472, %v4474
        %v4476 = vrot.slane %v4468, %v4475
        %v4478 = vunpack.c.l.s4 1934713408
        %v4479 = vunpack.c.0.s8 %v4478
        %v4480 = vlaneseq
        %v4481 = vshrl.u32 %v4480, 7
        %v4482 = vsub.s32 %v4479, %v4481
        %v4483 = vrot.slane %v4469, %v4482
        %v4484 = vcombine.high %v4476, 0.0
        %v4485 = vcombine.high %v4483, 0.0
        %v4486 = vcombine.high %v4459, 0.0
        %4488 = vrot.lane.b32.xlu0 %v4484, 32
        %v4489 = vpop.permute.xlu0 %4488
        %4492 = vrot.lane.b32.xlu0 %v4483, 64
        %v4493 = vpop.permute.xlu0 %4492
        %4496 = vrot.lane.b32.xlu0 %v4485, 96
        %v4497 = vpop.permute.xlu0 %4496
        %v4499 = vsel %vm664, %v4476, %v4489
        %v4500 = vsel %vm2309, %v4499, %v4493
        %vm4501 = vcmask 785408
        %v4502 = vsel %vm4501, %v4500, %v4497
        %v4503 = vld [vmem:[%s12] sm:$0xff]
        %v4504 = vld [vmem:[%s12 + $0x8] sm:$0xff]
        %v4505 = vld [vmem:[%s12 + $0x10] sm:$0xff]
        %v4506 = vld [vmem:[%s12 + $0x18] sm:$0xff]
        %v4507 = vld [vmem:[%s12 + $0x20] sm:$0xff]
        %v4508 = vld [vmem:[%s12 + $0x28] sm:$0xff]
        %v4509 = vld [vmem:[%s12 + $0x30] sm:$0xff]
        %v4510 = vld [vmem:[%s12 + $0x38] sm:$0xff]
        %v4511 = vld [vmem:[%s12 + $0x40] sm:$0xff]
        %v4512 = vld [vmem:[%s12 + $0x48] sm:$0xff]
        %v4513 = vld [vmem:[%s12 + $0x50] sm:$0xff]
        %v4514 = vld [vmem:[%s12 + $0x58] sm:$0xff]
        %v4515 = vld [vmem:[%s12 + $0x60] sm:$0xff]
        %v4516 = vld [vmem:[%s12 + $0x68] sm:$0xff]
        %v4517 = vld [vmem:[%s12 + $0x70] sm:$0xff]
        %v4518 = vld [vmem:[%s12 + $0x78] sm:$0xff]
        %v4519 = vld [vmem:[%s12 + $0x80] sm:$0xff]
        %v4520 = vld [vmem:[%s12 + $0x88] sm:$0xff]
        %v4521 = vld [vmem:[%s12 + $0x90] sm:$0xff]
        %v4522 = vld [vmem:[%s12 + $0x98] sm:$0xff]
        %v4523 = vld [vmem:[%s13] sm:$0x1]
        %v4525 = vsel %vm664, %v4486, 0
        %4527 = vmatprep.subr.mxu0 0.0
        %4528 = vmatpush1.msra.mxu0 %v4518
        %4529 = vmatprep.subr.mxu0 0.0
        %4530 = vmatpush1.msra.mxu0 %v4517
        %4531 = vmatprep.subr.mxu0 0.0
        %4532 = vmatpush1.msra.mxu0 %v4516
        %4533 = vmatprep.subr.mxu0 0.0
        %4534 = vmatpush1.msra.mxu0 %v4515
        %4535 = vmatprep.subr.mxu0 0.0
        %4536 = vmatpush1.msra.mxu0 %v4514
        %4537 = vmatprep.subr.mxu0 0.0
        %4538 = vmatpush1.msra.mxu0 %v4513
        %4539 = vmatprep.subr.mxu0 0.0
        %4540 = vmatpush1.msra.mxu0 %v4512
        %4541 = vmatprep.subr.mxu0 0.0
        %4542 = vmatpush1.msra.mxu0 %v4511
        %4543 = vmatprep.subr.mxu0 0.0
        %4544 = vmatpush1.msra.mxu0 %v4510
        %4545 = vmatprep.subr.mxu0 0.0
        %4546 = vmatpush1.msra.mxu0 %v4509
        %4547 = vmatprep.subr.mxu0 0.0
        %4548 = vmatpush1.msra.mxu0 %v4508
        %4549 = vmatprep.subr.mxu0 0.0
        %4550 = vmatpush1.msra.mxu0 %v4507
        %4551 = vmatprep.subr.mxu0 0.0
        %4552 = vmatpush1.msra.mxu0 %v4506
        %4553 = vmatprep.subr.mxu0 0.0
        %4554 = vmatpush1.msra.mxu0 %v4505
        %4555 = vmatprep.subr.mxu0 0.0
        %4556 = vmatpush1.msra.mxu0 %v4504
        %4557 = vmatprep.subr.mxu0 0.0
        %4558 = vmatpush1.msra.mxu0 %v4503
        %4559 = vmatprep.subr.mxu0 0.0
        %4560 = vmatpush2.msra.mxu0 0.0
        %4561 = vmatprep.subr.mxu0 0.0
        %4562 = vmatpush2.msra.mxu0 0.0
        %4563 = vmatprep.subr.mxu0 0.0
        %4564 = vmatpush2.msra.mxu0 0.0
        %4565 = vmatprep.subr.mxu0 0.0
        %4566 = vmatpush2.msra.mxu0 0.0
        %4567 = vmatprep.subr.mxu0 0.0
        %4568 = vmatpush2.msra.mxu0 0.0
        %4569 = vmatprep.subr.mxu0 0.0
        %4570 = vmatpush2.msra.mxu0 0.0
        %4571 = vmatprep.subr.mxu0 0.0
        %4572 = vmatpush2.msra.mxu0 0.0
        %4573 = vmatprep.subr.mxu0 0.0
        %4574 = vmatpush2.msra.mxu0 0.0
        %4575 = vmatprep.subr.mxu0 0.0
        %4576 = vmatpush2.msra.mxu0 0.0
        %4577 = vmatprep.subr.mxu0 0.0
        %4578 = vmatpush2.msra.mxu0 0.0
        %4579 = vmatprep.subr.mxu0 0.0
        %4580 = vmatpush2.msra.mxu0 0.0
        %4581 = vmatprep.subr.mxu0 0.0
        %4582 = vmatpush2.msra.mxu0 0.0
        %4583 = vmatprep.subr.mxu0 0.0
        %4584 = vmatpush2.msra.mxu0 %v4522
        %4585 = vmatprep.subr.mxu0 0.0
        %4586 = vmatpush2.msra.mxu0 %v4521
        %4587 = vmatprep.subr.mxu0 0.0
        %4588 = vmatpush2.msra.mxu0 %v4520
        %4589 = vmatprep.subr.mxu0 0.0
        %4590 = vmatpush2.msra.mxu0 %v4519
        %4591 = vmatprep.mubr.f32.mxu0 %v4525
        %4592 = vmatmul.mubr.f32.gmra.mxu0 %v4502
        %v4593 = vpop.f32.mrf.mxu0
        %v4594 = vadd.f32 %v4523, %v4593
        %v4595 = vpop.f32.mrf.mxu0
        %4596 = vdwg.mxu0
        %vm4597 = vcmask 253952
        %4598 = vst.msk [vmem:[%s483] sm:$0x1] %vm4597, %v4594
        %s4599 = sand.u32 %s345, 1
        %s4600 = scalar_lea.sflag [#allocation3], %s4599
        %s4601 = sand.u32 %s345, 1
        %s4602 = scalar_lea.vmem [#allocation2], %s4601
        // Predicated region
        $region77: #{tpu_custom_call.1} parent=75 // pred_check
          %p4603 = pneg %p355
        $region78: #{tpu_custom_call.1} parent=75 // pred_check_branch
          %4605 = sbr.rel (%p4603) target = $region80
        $region79: #{tpu_custom_call.1} parent=75 // pred_region
          %s4607 = ssub.s32 16, 16
          %4608 = vsyncadd %s4600, %s4607
          %s4609 = smul.addr %s28, 16
          %s4610 = scalar_lea.hbm %s14, %s4609
          %s4612 = sshll.u32 %s4602, 4
          %s4613 = int_to_ptr.vmem [resolvable:$true] %s4612
          %4615 = dma.vmem_to_hbm [thread:$0]  %s4613, 16, %s4610, %s4600
        $region80: #{tpu_custom_call.1} parent=75 // pred_fallthru
          _
      $region76: #{tpu_custom_call.1} parent=5 // pred_fallthru
        _
      %p4616 = scmp.le.s32.totalorder 2, %s23
      // Predicated region
      $region81: #{tpu_custom_call.1} parent=5 // pred_check
        %p4617 = pneg %p4616
      $region82: #{tpu_custom_call.1} parent=5 // pred_check_branch
        %4619 = sbr.rel (%p4617) target = $region84
      $region83: #{tpu_custom_call.1} parent=5 // pred_region
        %s4620 = ssub.s32 %s23, 2
        // Predicated region
        $region85: #{tpu_custom_call.1} parent=83 // pred_check
          %p4621 = pneg %p361
        $region86: #{tpu_custom_call.1} parent=83 // pred_check_branch
          %4623 = sbr.rel (%p4621) target = $region88
        $region87: #{tpu_custom_call.1} parent=83 // pred_region
          %s4624 = sand.u32 %s346, 1
          %s4625 = scalar_lea.sflag [#allocation3], %s4624
          %s4626 = sand.u32 %s346, 1
          %s4627 = scalar_lea.vmem [#allocation2], %s4626
          %4628 = dma.done %s4625, 16
        $region88: #{tpu_custom_call.1} parent=83 // pred_fallthru
          _
      $region84: #{tpu_custom_call.1} parent=5 // pred_fallthru
        _
    $region6: #{tpu_custom_call.1} parent=1 // loop_footer
      %s27 = sadd.s32 1, %s23
    $region7: #{tpu_custom_call.1} parent=1 // loop_footer_branch
      %22 = sbr.rel target = $region3
    $region8: #{tpu_custom_call.1} parent=1 // loop_exit
      _
    %4629 = vsyncpa [#allocation3], 1
    %s4630 = scalar_lea.sflag [#allocation3], 1
    %4631 = vsyncpa %s4630, 1

</llo_original>
